<compile_context>
chip_gen: v5e
topology: v5e:2x2
jax: 0.10.0
libtpu: 0.0.40
codegen_flags: <defaults>
</compile_context>

<pallas_src>
import functools

import jax
import jax.numpy as jnp
from jax.experimental import pallas as pl
from jax.experimental.pallas import tpu as pltpu


# Rows of the packed per-layer (16, E) f32 "vec" array (fewer tiny DMAs).
(_V_CA_BQ, _V_SA_BO, _V_CA_BO, _V_B2,
 _V_LN1W, _V_LN1B, _V_LN2W, _V_LN2B, _V_LN3W, _V_LN3B) = range(10)
_VEC_ROWS = 16            # padded to a multiple of 8 sublanes


# ----------------------------------------------------------------------------
# Small helpers
# ----------------------------------------------------------------------------
def _vmem_capacity_bytes():
  """Per-core VMEM capacity; conservative (v7x-sized) fallback on failure."""
  try:
    return max(int(pltpu.get_tpu_info().vmem_capacity_bytes), 48 << 20)
  except Exception:
    return 64 << 20


def _pick_tile(n, cap, align=1):
  """Largest divisor of n that is <= cap, preferring align-aligned tiles."""
  cap = max(1, min(n, cap))
  if align > 1 and n % align == 0:
    t = (cap // align) * align
    while t >= align:
      if n % t == 0:
        return t
      t -= align
  t = cap
  while n % t:
    t -= 1
  return t


def _choose_batch_per_block(batch, seq):
  """Pick batch elements per row block: fill the MXU M dim (>=128 rows) while
  keeping >=2 row blocks for the megacore-parallel axis when batch allows."""
  limit = batch if batch == 1 else max(1, batch // 2)
  best = 1
  for d in range(1, limit + 1):
    if batch % d:
      continue
    rows = d * seq
    if rows % 8 and rows != batch * seq:
      continue
    if rows > 512 and best * seq >= 8:
      break
    best = d
    if rows >= 128:
      break
  return best


# ----------------------------------------------------------------------------
# Fused decoder-stack kernel
# ----------------------------------------------------------------------------
def _fused_decoder_layers_kernel(
    x0_ref,                                  # (R, E)      f32  rows of this row block
    sa_wqkv_ref,                             # (1, E, 3E)  bf16 (Wq pre-scaled)
    sa_bqkv_ref,                             # (1, 1, 3E)  f32  (bq pre-scaled)
    sa_wo_ref,                               # (1, E, E)   bf16
    ca_wq_ref,                               # (1, E, E)   bf16 (pre-scaled)
    ca_wkv_ref,                              # (1, E, 2E)  bf16
    ca_bkv_ref,                              # (1, 1, 2E)  f32
    ca_wo_ref,                               # (1, E, E)   bf16
    w1_ref,                                  # (1, E, F)   bf16
    b1_ref,                                  # (1, 1, F)   f32
    w2_ref,                                  # (1, F, E)   bf16
    vec_ref,                                 # (1, 16, E)  f32  packed small vectors
    out_ref,                                 # (R, E)      f32  resident residual stream
    *, num_heads, head_dim, seq, batch_per_block):
  """All decoder layers for one block of batch elements.

  grid = (row_blocks, num_layers).  The layer axis is sequential
  ("arbitrary"); the output block's index_map ignores it, so the block stays
  resident in VMEM across all layers of this row block and *is* the residual
  stream (no extra scratch, no duplicate store).  Per-layer weights are
  streamed / double-buffered by the layer-indexed BlockSpecs.
  """
  layer = pl.program_id(1)
  H, hd, S, bpb = num_heads, head_dim, seq, batch_per_block
  R = bpb * S
  E = H * hd

  @pl.when(layer == 0)
  def _init():
    out_ref[...] = x0_ref[...]

  vec = vec_ref[0]                           # (16, E) f32

  def row(i):                                # (1, E) packed vector row
    return vec[i:i + 1, :]

  def layer_norm(v, wi, bi):                 # PyTorch LayerNorm, eps = 1e-5
    mu = jnp.mean(v, axis=-1, keepdims=True)
    c = v - mu
    var = jnp.mean(c * c, axis=-1, keepdims=True)
    return c * jax.lax.rsqrt(var + 1e-5) * row(wi) + row(bi)

  def split_heads(t2d):                      # (R, E) f32 -> (bpb*H, S, hd) bf16
    tb = t2d.astype(jnp.bfloat16)
    parts = []
    for b in range(bpb):
      blk = tb[b * S:(b + 1) * S, :]         # static sublane slice
      for h in range(H):
        parts.append(blk[:, h * hd:(h + 1) * hd])   # static lane slice
    return jnp.stack(parts, axis=0)

  def merge_heads(o):                        # (bpb*H, S, hd) f32 -> (R, E) f32
    out_rows = []
    for b in range(bpb):
      out_rows.append(jnp.concatenate([o[b * H + h] for h in range(H)], axis=-1))
    return out_rows[0] if bpb == 1 else jnp.concatenate(out_rows, axis=0)

  def attention(q, k, v, wo, bo):            # q pre-scaled by 1/sqrt(hd)
    qh, kh, vh = split_heads(q), split_heads(k), split_heads(v)
    s = jnp.einsum("bqd,bkd->bqk", qh, kh,
                   preferred_element_type=jnp.float32)      # (bpb*H, S, S)
    m = jnp.max(s, axis=-1, keepdims=True)
    # TODO(synk): cast (s - m) to bf16 before exp on v6e/v7x (bf16 EUP) and for
    # long S tile the KV axis with an online-softmax accumulator (flash-style).
    p = jnp.exp(s - m)                                       # f32 (v5e-safe)
    denom = jnp.sum(p, axis=-1, keepdims=True)
    o = jnp.einsum("bqk,bkd->bqd", p.astype(jnp.bfloat16), vh,
                   preferred_element_type=jnp.float32)       # (bpb*H, S, hd)
    # Deferred softmax normalization on the small (S, hd) output.
    o = o * pl.reciprocal(denom, approx=False)
    ctx = merge_heads(o)                                     # concat heads (R, E)
    return jnp.dot(ctx.astype(jnp.bfloat16), wo,
                   preferred_element_type=jnp.float32) + bo  # (R, E)@(E, E)

  x_in = out_ref[...]                        # layer input == cross-attn memory
  x_in_b = x_in.astype(jnp.bfloat16)         # single hoisted cast, reused below

  # --- Self-attention: one fused (R, E) @ (E, 3E) QKV matmul ---------------
  qkv = jnp.dot(x_in_b, sa_wqkv_ref[0],
                preferred_element_type=jnp.float32) + sa_bqkv_ref[0]
  x = layer_norm(
      x_in + attention(qkv[:, :E], qkv[:, E:2 * E], qkv[:, 2 * E:],
                       sa_wo_ref[0], row(_V_SA_BO)),
      _V_LN1W, _V_LN1B)

  # --- Cross-attention: query from x, key/value from the layer input ------
  x_b = x.astype(jnp.bfloat16)
  q2 = jnp.dot(x_b, ca_wq_ref[0],
               preferred_element_type=jnp.float32) + row(_V_CA_BQ)
  kv = jnp.dot(x_in_b, ca_wkv_ref[0],
               preferred_element_type=jnp.float32) + ca_bkv_ref[0]
  x = layer_norm(
      x + attention(q2, kv[:, :E], kv[:, E:], ca_wo_ref[0], row(_V_CA_BO)),
      _V_LN2W, _V_LN2B)

  # --- Feed-forward (relu) -------------------------------------------------
  x_b = x.astype(jnp.bfloat16)
  hid = jnp.maximum(
      jnp.dot(x_b, w1_ref[0], preferred_element_type=jnp.float32) + b1_ref[0],
      0.0)
  ff = jnp.dot(hid.astype(jnp.bfloat16), w2_ref[0],
               preferred_element_type=jnp.float32) + row(_V_B2)
  x = layer_norm(x + ff, _V_LN3W, _V_LN3B)

  out_ref[...] = x                           # residual carry for the next layer


def fused_decoder_layers(x0, pk, *, num_heads, batch, seq, batch_per_block=None):
  """x0: (B*S, E) f32 batch-major rows -> (B*S, E) f32 after all layers."""
  N, E = x0.shape
  L, _, F = pk["w1"].shape
  H = num_heads
  hd = E // H
  assert E % H == 0 and N == batch * seq
  # TODO(synk): pad E to a multiple of 128 (with LN masking) for lane-dense
  # activation blocks at real model sizes.

  bpb = batch_per_block if batch_per_block else _choose_batch_per_block(batch, seq)
  if batch % bpb or ((bpb * seq) % 8 and bpb * seq != N):
    bpb = batch                  # single full-array row block is always legal
  rows = bpb * seq
  n_rb = batch // bpb

  weights = (pk["sa_wqkv"], pk["sa_bqkv"], pk["sa_wo"],
             pk["ca_wq"], pk["ca_wkv"], pk["ca_bkv"], pk["ca_wo"],
             pk["w1"], pk["b1"], pk["w2"], pk["vec"])

  def layer_spec(arr):           # one layer's slice, streamed per grid step
    tail = arr.shape[1:]
    return pl.BlockSpec((1,) + tail, lambda rb, l: (l,) + (0,) * len(tail))
    # TODO(synk): on v7x, split the per-layer stream into attention / FFN
    # phases (or stream w1/w2 in F-chunks via pltpu.emit_pipeline) so the
    # double-buffered weight working set fits 64 MiB at E>=1024, F>=2048.

  in_specs = ([pl.BlockSpec((rows, E), lambda rb, l: (rb, 0))]
              + [layer_spec(w) for w in weights])
  out_specs = pl.BlockSpec((rows, E), lambda rb, l: (rb, 0))

  # Advisory cost estimate for the XLA scheduler.
  attn_proj_flops = 2 * rows * E * (3 * E + E + 2 * E + 2 * E)
  attn_core_flops = 8 * bpb * H * seq * seq * hd
  ffn_flops = 4 * rows * E * F
  flops = n_rb * L * (attn_proj_flops + attn_core_flops + ffn_flops)
  trans = n_rb * L * 2 * bpb * H * seq * seq
  layer_bytes = sum(int(w.size) * w.dtype.itemsize for w in weights) // L
  bytes_accessed = n_rb * L * layer_bytes + 2 * N * E * 4

  # Generation-aware scoped-VMEM budget (double-buffered layer weights +
  # resident residual block + intermediates), with >=16 MiB headroom.
  cap = _vmem_capacity_bytes()
  act_bytes = rows * (4 * E + 2 * F) * 4 + 3 * bpb * H * seq * seq * 4
  need = 2 * layer_bytes + 4 * rows * E * 4 + act_bytes + (8 << 20)
  vmem_limit = int(max(16 << 20, min(cap - (16 << 20), need)))

  kernel = functools.partial(
      _fused_decoder_layers_kernel,
      num_heads=H, head_dim=hd, seq=seq, batch_per_block=bpb)
  return pl.pallas_call(
      kernel,
      out_shape=jax.ShapeDtypeStruct((N, E), jnp.float32),
      grid=(n_rb, L),
      in_specs=in_specs,
      out_specs=out_specs,
      compiler_params=pltpu.CompilerParams(
          dimension_semantics=("parallel", "arbitrary"),
          vmem_limit_bytes=vmem_limit),
      cost_estimate=pl.CostEstimate(flops=int(flops),
                                    transcendentals=int(trans),
                                    bytes_accessed=int(bytes_accessed)),
  )(x0, *weights)


# ----------------------------------------------------------------------------
# Tiled, weight-stationary output projection (fc_out)
# ----------------------------------------------------------------------------
def _fc_out_kernel(x_ref, w_ref, b_ref, o_ref):
  o_ref[...] = (jnp.dot(x_ref[...].astype(jnp.bfloat16), w_ref[...],
                        preferred_element_type=jnp.float32) + b_ref[...])


def fc_out(x, w, b, *, batch, seq):
  """x: (B*S, E) f32 batch-major rows; w: (E, V) bf16; b: (1, V) f32.

  Weight-stationary tiling: the vocab axis is the outermost grid axis, so the
  (E, tn) weight tile is DMA'd once and re-used for every row tile (x, which
  is much smaller, is the operand that gets re-read).  Returns an (S, B*V)
  f32 slab whose .reshape(S, B, V) is free (no logits transpose); output
  tiles are lane-dense (>=128-wide when V allows).
  """
  N, E = x.shape
  V = w.shape[1]
  assert N == batch * seq
  cap = _vmem_capacity_bytes()
  tm = _pick_tile(seq, 512, align=8)
  tn = _pick_tile(V, 512 if cap <= (64 << 20) else 1024, align=128)
  s_blocks, v_blocks = seq // tm, V // tn
  grid = (v_blocks, batch, s_blocks)         # vocab outermost -> w stationary
  # TODO(synk): feed x as bf16 (and add a K-axis over E with an f32
  # accumulator) for very large E to further cut HBM traffic.

  flops = 2 * N * E * V
  bytes_accessed = v_blocks * N * E * 4 + E * V * 2 + V * 4 + N * V * 4
  vmem_need = 2 * (tm * E * 4 + E * tn * 2 + tn * 4 + tm * tn * 4) + (4 << 20)
  vmem_limit = int(max(16 << 20, min(cap - (16 << 20), vmem_need)))

  return pl.pallas_call(
      _fc_out_kernel,
      out_shape=jax.ShapeDtypeStruct((seq, batch * V), jnp.float32),
      grid=grid,
      in_specs=[
          pl.BlockSpec((tm, E), lambda j, bi, i: (bi * s_blocks + i, 0)),
          pl.BlockSpec((E, tn), lambda j, bi, i: (0, j)),
          pl.BlockSpec((1, tn), lambda j, bi, i: (0, j)),
      ],
      out_specs=pl.BlockSpec((tm, tn), lambda j, bi, i: (i, bi * v_blocks + j)),
      compiler_params=pltpu.CompilerParams(
          dimension_semantics=("parallel", "parallel", "parallel"),
          vmem_limit_bytes=vmem_limit),
      cost_estimate=pl.CostEstimate(flops=int(flops), transcendentals=0,
                                    bytes_accessed=int(bytes_accessed)),
  )(x, w, b)


# ----------------------------------------------------------------------------
# Forward pass
# ----------------------------------------------------------------------------
def forward(packed, input_ids, target_ids, *, num_heads):
  """input_ids, target_ids: (S, B) int32.  Returns logits (S, B, vocab)."""
  del target_ids  # unused, exactly like the PyTorch forward
  S, B = input_ids.shape
  V = packed["fc_w"].shape[1]
  # Embedding gather, already batch-major (rows ordered b*S + s); transposing
  # the tiny int32 id matrix avoids any full-activation transpose later.
  # TODO(synk): the gather could move in-kernel via scalar-prefetch +
  # pl.Element row gather; kept in XLA here.
  x0 = jnp.take(packed["embedding"], input_ids.T.reshape(-1), axis=0)   # (B*S, E)
  x = fused_decoder_layers(x0, packed, num_heads=num_heads, batch=B, seq=S)
  logits = fc_out(x, packed["fc_w"], packed["fc_b"], batch=B, seq=S)    # (S, B*V)
  return logits.reshape(S, B, V)


# ----------------------------------------------------------------------------
# Parameters: natural (PyTorch-like) init + kernel-layout packing
# ----------------------------------------------------------------------------
def init_params(key, vocab_size, embedding_dim, num_layers, num_heads,
                dim_feedforward=2048):
  """Natural-form float32 parameters (weights stored for `x @ W` use)."""
  del num_heads
  E, F = embedding_dim, dim_feedforward

  def normal(k, shape, scale=0.02):
    return (scale * jax.random.normal(k, shape)).astype(jnp.float32)

  keys = jax.random.split(key, 2 + num_layers)
  params = {
      "embedding": normal(keys[0], (vocab_size, E)),
      "fc_w": normal(keys[1], (E, vocab_size)),
      "fc_b": jnp.zeros((vocab_size,), jnp.float32),
      "layers": [],
  }
  for i in range(num_layers):
    lk = jax.random.split(keys[2 + i], 10)
    zE = jnp.zeros((E,), jnp.float32)
    params["layers"].append({
        "sa_wq": normal(lk[0], (E, E)), "sa_wk": normal(lk[1], (E, E)),
        "sa_wv": normal(lk[2], (E, E)), "sa_wo": normal(lk[3], (E, E)),
        "sa_bq": zE, "sa_bk": zE, "sa_bv": zE, "sa_bo": zE,
        "ca_wq": normal(lk[4], (E, E)), "ca_wk": normal(lk[5], (E, E)),
        "ca_wv": normal(lk[6], (E, E)), "ca_wo": normal(lk[7], (E, E)),
        "ca_bq": zE, "ca_bk": zE, "ca_bv": zE, "ca_bo": zE,
        "w1": normal(lk[8], (E, F)), "b1": jnp.zeros((F,), jnp.float32),
        "w2": normal(lk[9], (F, E)), "b2": zE,
        "ln1w": jnp.ones((E,), jnp.float32), "ln1b": zE,
        "ln2w": jnp.ones((E,), jnp.float32), "ln2b": zE,
        "ln3w": jnp.ones((E,), jnp.float32), "ln3b": zE,
    })
  return params


def pack_params(params, num_heads):
  """Repack into the TPU-kernel layout:
     * fused (E, 3E) self-attn QKV and (E, 2E) cross-attn KV weights (bf16),
       with 1/sqrt(head_dim) folded into Wq / bq,
     * all per-layer arrays stacked on a leading layer axis (grid-indexed),
     * small per-layer (E,) vectors packed into one (16, E) f32 array."""
  E = params["embedding"].shape[1]
  hd = E // num_heads
  scale = 1.0 / (hd ** 0.5)
  layers = params["layers"]

  def stack(fn):
    return jnp.stack([fn(lp) for lp in layers], axis=0)

  def pack_vec(lp):
    rows = jnp.stack([lp["ca_bq"] * scale, lp["sa_bo"], lp["ca_bo"], lp["b2"],
                      lp["ln1w"], lp["ln1b"], lp["ln2w"], lp["ln2b"],
                      lp["ln3w"], lp["ln3b"]], axis=0).astype(jnp.float32)
    pad = jnp.zeros((_VEC_ROWS - rows.shape[0], E), jnp.float32)
    return jnp.concatenate([rows, pad], axis=0)

  packed = {
      "sa_wqkv": stack(lambda lp: jnp.concatenate(
          [lp["sa_wq"] * scale, lp["sa_wk"], lp["sa_wv"]],
          axis=1).astype(jnp.bfloat16)),
      "sa_bqkv": stack(lambda lp: jnp.concatenate(
          [lp["sa_bq"] * scale, lp["sa_bk"], lp["sa_bv"]]
          ).reshape(1, -1).astype(jnp.float32)),
      "sa_wo": stack(lambda lp: lp["sa_wo"].astype(jnp.bfloat16)),
      "ca_wq": stack(lambda lp: (lp["ca_wq"] * scale).astype(jnp.bfloat16)),
      "ca_wkv": stack(lambda lp: jnp.concatenate(
          [lp["ca_wk"], lp["ca_wv"]], axis=1).astype(jnp.bfloat16)),
      "ca_bkv": stack(lambda lp: jnp.concatenate(
          [lp["ca_bk"], lp["ca_bv"]]).reshape(1, -1).astype(jnp.float32)),
      "ca_wo": stack(lambda lp: lp["ca_wo"].astype(jnp.bfloat16)),
      "w1": stack(lambda lp: lp["w1"].astype(jnp.bfloat16)),
      "b1": stack(lambda lp: lp["b1"].reshape(1, -1).astype(jnp.float32)),
      "w2": stack(lambda lp: lp["w2"].astype(jnp.bfloat16)),
      "vec": stack(pack_vec),
      "embedding": params["embedding"],
      "fc_w": params["fc_w"].astype(jnp.bfloat16),
      "fc_b": params["fc_b"].reshape(1, -1).astype(jnp.float32),
  }
  return packed


# ----------------------------------------------------------------------------
if __name__ == "__main__":
  vocab_size, embedding_dim, num_layers, num_heads = 128, 32, 2, 4
  S, B = 8, 2   # (seq, batch) -- batch_first=False convention

  key = jax.random.PRNGKey(0)
  pkey, ik, tk = jax.random.split(key, 3)
  params = init_params(pkey, vocab_size, embedding_dim, num_layers, num_heads)
  packed = pack_params(params, num_heads)

  input_ids = jax.random.randint(ik, (S, B), 0, vocab_size, dtype=jnp.int32)
  target_ids = jax.random.randint(tk, (S, B), 0, vocab_size, dtype=jnp.int32)

  logits = forward(packed, input_ids, target_ids, num_heads=num_heads)
  logits = jax.block_until_ready(logits)

  assert logits.shape == (S, B, vocab_size), logits.shape
  assert bool(jnp.all(jnp.isfinite(logits)))
  print("KERNEL_OK")
</pallas_src>

<mosaic_0001>
module attributes {stable_mosaic.version = 11 : i64} {
  func.func @_fused_decoder_layers_kernel(%arg0: i32, %arg1: i32, %arg2: memref<8x32xf32, #tpu.memory_space<vmem>>, %arg3: memref<1x32x96xbf16, #tpu.memory_space<vmem>>, %arg4: memref<1x1x96xf32, #tpu.memory_space<vmem>>, %arg5: memref<1x32x32xbf16, #tpu.memory_space<vmem>>, %arg6: memref<1x32x32xbf16, #tpu.memory_space<vmem>>, %arg7: memref<1x32x64xbf16, #tpu.memory_space<vmem>>, %arg8: memref<1x1x64xf32, #tpu.memory_space<vmem>>, %arg9: memref<1x32x32xbf16, #tpu.memory_space<vmem>>, %arg10: memref<1x32x2048xbf16, #tpu.memory_space<vmem>>, %arg11: memref<1x1x2048xf32, #tpu.memory_space<vmem>>, %arg12: memref<1x2048x32xbf16, #tpu.memory_space<vmem>>, %arg13: memref<1x16x32xf32, #tpu.memory_space<vmem>>, %arg14: memref<8x32xf32, #tpu.memory_space<vmem>>) attributes {dimension_semantics = [#tpu.dimension_semantics<parallel>, #tpu.dimension_semantics<arbitrary>], iteration_bounds = array<i64: 2, 2>, scalar_prefetch = 0 : i64, scratch_operands = 0 : i64, tpu.core_type = #tpu.core_type<tc>, window_params = [{transform_indices = @transform_0, window_bounds = array<i64: 8, 32>}, {transform_indices = @transform_1, window_bounds = array<i64: 1, 32, 96>}, {transform_indices = @transform_2, window_bounds = array<i64: 1, 1, 96>}, {transform_indices = @transform_3, window_bounds = array<i64: 1, 32, 32>}, {transform_indices = @transform_4, window_bounds = array<i64: 1, 32, 32>}, {transform_indices = @transform_5, window_bounds = array<i64: 1, 32, 64>}, {transform_indices = @transform_6, window_bounds = array<i64: 1, 1, 64>}, {transform_indices = @transform_7, window_bounds = array<i64: 1, 32, 32>}, {transform_indices = @transform_8, window_bounds = array<i64: 1, 32, 2048>}, {transform_indices = @transform_9, window_bounds = array<i64: 1, 1, 2048>}, {transform_indices = @transform_10, window_bounds = array<i64: 1, 2048, 32>}, {transform_indices = @transform_11, window_bounds = array<i64: 1, 16, 32>}, {transform_indices = @transform_12, window_bounds = array<i64: 8, 32>}]} {
    %c0_i32 = arith.constant 0 : i32
    %0 = arith.cmpi eq, %arg1, %c0_i32 : i32
    %1 = arith.extui %0 : i1 to i32
    %c0_i32_0 = arith.constant 0 : i32
    %2 = arith.cmpi ne, %1, %c0_i32_0 : i32
    scf.if %2 {
      %c0_67 = arith.constant 0 : index
      %c0_68 = arith.constant 0 : index
      %238 = vector.load %arg2[%c0_67, %c0_68] : memref<8x32xf32, #tpu.memory_space<vmem>>, vector<8x32xf32>
      %c0_69 = arith.constant 0 : index
      %c0_70 = arith.constant 0 : index
      %239 = vector.load %arg14[%c0_69, %c0_70] : memref<8x32xf32, #tpu.memory_space<vmem>>, vector<8x32xf32>
      tpu.vector_store %arg14[%c0_69, %c0_70], %238 {strides = array<i32>} : memref<8x32xf32, #tpu.memory_space<vmem>>, vector<8x32xf32>,
    } else {
    }
    %c0 = arith.constant 0 : index
    %c0_1 = arith.constant 0 : index
    %c0_2 = arith.constant 0 : index
    %3 = vector.load %arg13[%c0, %c0_1, %c0_2] : memref<1x16x32xf32, #tpu.memory_space<vmem>>, vector<1x16x32xf32>
    %4 = vector.shape_cast %3 : vector<1x16x32xf32> to vector<16x32xf32>
    %c0_3 = arith.constant 0 : index
    %c0_4 = arith.constant 0 : index
    %5 = vector.load %arg14[%c0_3, %c0_4] : memref<8x32xf32, #tpu.memory_space<vmem>>, vector<8x32xf32>
    %6 = arith.truncf %5 : vector<8x32xf32> to vector<8x32xbf16>
    %c0_5 = arith.constant 0 : index
    %c0_6 = arith.constant 0 : index
    %c0_7 = arith.constant 0 : index
    %7 = vector.load %arg3[%c0_5, %c0_6, %c0_7] : memref<1x32x96xbf16, #tpu.memory_space<vmem>>, vector<1x32x96xbf16>
    %8 = vector.shape_cast %7 : vector<1x32x96xbf16> to vector<32x96xbf16>
    %cst = arith.constant dense<0.000000e+00> : vector<8x96xf32>
    %9 = tpu.matmul %6, %8, %cst {dimension_numbers = #tpu.dot_dimension_numbers<[1], [0], [0], [1], [0, 0, 1, 1], [], []>} : vector<8x32xbf16>, vector<32x96xbf16>, vector<8x96xf32> -> vector<8x96xf32>
    %c0_8 = arith.constant 0 : index
    %c0_9 = arith.constant 0 : index
    %c0_10 = arith.constant 0 : index
    %10 = vector.load %arg4[%c0_8, %c0_9, %c0_10] : memref<1x1x96xf32, #tpu.memory_space<vmem>>, vector<1x1x96xf32>
    %11 = vector.shape_cast %10 : vector<1x1x96xf32> to vector<1x96xf32>
    %12 = vector.broadcast %11 : vector<1x96xf32> to vector<8x96xf32>
    %13 = arith.addf %9, %12 : vector<8x96xf32>
    %14 = vector.extract_strided_slice %13 {offsets = [0, 0], sizes = [8, 32], strides = [1, 1]} : vector<8x96xf32> to vector<8x32xf32>
    %15 = vector.extract_strided_slice %13 {offsets = [0, 32], sizes = [8, 32], strides = [1, 1]} : vector<8x96xf32> to vector<8x32xf32>
    %16 = vector.extract_strided_slice %13 {offsets = [0, 64], sizes = [8, 32], strides = [1, 1]} : vector<8x96xf32> to vector<8x32xf32>
    %c0_11 = arith.constant 0 : index
    %c0_12 = arith.constant 0 : index
    %c0_13 = arith.constant 0 : index
    %17 = vector.load %arg5[%c0_11, %c0_12, %c0_13] : memref<1x32x32xbf16, #tpu.memory_space<vmem>>, vector<1x32x32xbf16>
    %18 = vector.shape_cast %17 : vector<1x32x32xbf16> to vector<32x32xbf16>
    %19 = vector.extract_strided_slice %4 {offsets = [1, 0], sizes = [1, 32], strides = [1, 1]} : vector<16x32xf32> to vector<1x32xf32>
    %20 = arith.truncf %14 : vector<8x32xf32> to vector<8x32xbf16>
    %21 = vector.extract_strided_slice %20 {offsets = [0, 0], sizes = [8, 8], strides = [1, 1]} : vector<8x32xbf16> to vector<8x8xbf16>
    %22 = vector.extract_strided_slice %20 {offsets = [0, 8], sizes = [8, 8], strides = [1, 1]} : vector<8x32xbf16> to vector<8x8xbf16>
    %23 = vector.extract_strided_slice %20 {offsets = [0, 16], sizes = [8, 8], strides = [1, 1]} : vector<8x32xbf16> to vector<8x8xbf16>
    %24 = vector.extract_strided_slice %20 {offsets = [0, 24], sizes = [8, 8], strides = [1, 1]} : vector<8x32xbf16> to vector<8x8xbf16>
    %25 = vector.shape_cast %21 : vector<8x8xbf16> to vector<1x8x8xbf16>
    %26 = vector.shape_cast %22 : vector<8x8xbf16> to vector<1x8x8xbf16>
    %27 = vector.shape_cast %23 : vector<8x8xbf16> to vector<1x8x8xbf16>
    %28 = vector.shape_cast %24 : vector<8x8xbf16> to vector<1x8x8xbf16>
    %29 = tpu.concatenate %25, %26, %27, %28 in 0 : vector<1x8x8xbf16>, vector<1x8x8xbf16>, vector<1x8x8xbf16>, vector<1x8x8xbf16> -> vector<4x8x8xbf16>
    %30 = arith.truncf %15 : vector<8x32xf32> to vector<8x32xbf16>
    %31 = vector.extract_strided_slice %30 {offsets = [0, 0], sizes = [8, 8], strides = [1, 1]} : vector<8x32xbf16> to vector<8x8xbf16>
    %32 = vector.extract_strided_slice %30 {offsets = [0, 8], sizes = [8, 8], strides = [1, 1]} : vector<8x32xbf16> to vector<8x8xbf16>
    %33 = vector.extract_strided_slice %30 {offsets = [0, 16], sizes = [8, 8], strides = [1, 1]} : vector<8x32xbf16> to vector<8x8xbf16>
    %34 = vector.extract_strided_slice %30 {offsets = [0, 24], sizes = [8, 8], strides = [1, 1]} : vector<8x32xbf16> to vector<8x8xbf16>
    %35 = vector.shape_cast %31 : vector<8x8xbf16> to vector<1x8x8xbf16>
    %36 = vector.shape_cast %32 : vector<8x8xbf16> to vector<1x8x8xbf16>
    %37 = vector.shape_cast %33 : vector<8x8xbf16> to vector<1x8x8xbf16>
    %38 = vector.shape_cast %34 : vector<8x8xbf16> to vector<1x8x8xbf16>
    %39 = tpu.concatenate %35, %36, %37, %38 in 0 : vector<1x8x8xbf16>, vector<1x8x8xbf16>, vector<1x8x8xbf16>, vector<1x8x8xbf16> -> vector<4x8x8xbf16>
    %40 = arith.truncf %16 : vector<8x32xf32> to vector<8x32xbf16>
    %41 = vector.extract_strided_slice %40 {offsets = [0, 0], sizes = [8, 8], strides = [1, 1]} : vector<8x32xbf16> to vector<8x8xbf16>
    %42 = vector.extract_strided_slice %40 {offsets = [0, 8], sizes = [8, 8], strides = [1, 1]} : vector<8x32xbf16> to vector<8x8xbf16>
    %43 = vector.extract_strided_slice %40 {offsets = [0, 16], sizes = [8, 8], strides = [1, 1]} : vector<8x32xbf16> to vector<8x8xbf16>
    %44 = vector.extract_strided_slice %40 {offsets = [0, 24], sizes = [8, 8], strides = [1, 1]} : vector<8x32xbf16> to vector<8x8xbf16>
    %45 = vector.shape_cast %41 : vector<8x8xbf16> to vector<1x8x8xbf16>
    %46 = vector.shape_cast %42 : vector<8x8xbf16> to vector<1x8x8xbf16>
    %47 = vector.shape_cast %43 : vector<8x8xbf16> to vector<1x8x8xbf16>
    %48 = vector.shape_cast %44 : vector<8x8xbf16> to vector<1x8x8xbf16>
    %49 = tpu.concatenate %45, %46, %47, %48 in 0 : vector<1x8x8xbf16>, vector<1x8x8xbf16>, vector<1x8x8xbf16>, vector<1x8x8xbf16> -> vector<4x8x8xbf16>
    "tpu.trace_start"() <{level = 10 : i32, message = "bqd,bkd->bqk"}> : () -> ()
    %cst_14 = arith.constant dense<0.000000e+00> : vector<4x8x8xf32>
    %50 = tpu.matmul %29, %39, %cst_14 {dimension_numbers = #tpu.dot_dimension_numbers<[2], [2], [1], [1], [0, 0, 0, 1, 1, 1], [0], [0]>} : vector<4x8x8xbf16>, vector<4x8x8xbf16>, vector<4x8x8xf32> -> vector<4x8x8xf32>
    "tpu.trace_stop"() : () -> ()
    %cst_15 = arith.constant dense<0xFF800000> : vector<4x8xf32>
    %51 = vector.multi_reduction <maximumf>, %50, %cst_15 [2] : vector<4x8x8xf32> to vector<4x8xf32>
    %52 = vector.shape_cast %51 : vector<4x8xf32> to vector<4x8x1xf32>
    %53 = vector.broadcast %52 : vector<4x8x1xf32> to vector<4x8x8xf32>
    %54 = arith.subf %50, %53 : vector<4x8x8xf32>
    %55 = math.exp %54 : vector<4x8x8xf32>
    %cst_16 = arith.constant dense<0.000000e+00> : vector<4x8xf32>
    %56 = vector.multi_reduction <add>, %55, %cst_16 [2] : vector<4x8x8xf32> to vector<4x8xf32>
    %57 = vector.shape_cast %56 : vector<4x8xf32> to vector<4x8x1xf32>
    %58 = arith.truncf %55 : vector<4x8x8xf32> to vector<4x8x8xbf16>
    "tpu.trace_start"() <{level = 10 : i32, message = "bqk,bkd->bqd"}> : () -> ()
    %cst_17 = arith.constant dense<0.000000e+00> : vector<4x8x8xf32>
    %59 = tpu.matmul %58, %49, %cst_17 {dimension_numbers = #tpu.dot_dimension_numbers<[2], [1], [1], [2], [0, 0, 0, 1, 1, 2], [0], [0]>} : vector<4x8x8xbf16>, vector<4x8x8xbf16>, vector<4x8x8xf32> -> vector<4x8x8xf32>
    "tpu.trace_stop"() : () -> ()
    %60 = tpu.reciprocal %57 : vector<4x8x1xf32> -> vector<4x8x1xf32>
    %61 = vector.broadcast %60 : vector<4x8x1xf32> to vector<4x8x8xf32>
    %62 = arith.mulf %59, %61 : vector<4x8x8xf32>
    %63 = vector.extract_strided_slice %62 {offsets = [0, 0, 0], sizes = [1, 8, 8], strides = [1, 1, 1]} : vector<4x8x8xf32> to vector<1x8x8xf32>
    %64 = vector.shape_cast %63 : vector<1x8x8xf32> to vector<8x8xf32>
    %65 = vector.extract_strided_slice %62 {offsets = [1, 0, 0], sizes = [1, 8, 8], strides = [1, 1, 1]} : vector<4x8x8xf32> to vector<1x8x8xf32>
    %66 = vector.shape_cast %65 : vector<1x8x8xf32> to vector<8x8xf32>
    %67 = vector.extract_strided_slice %62 {offsets = [2, 0, 0], sizes = [1, 8, 8], strides = [1, 1, 1]} : vector<4x8x8xf32> to vector<1x8x8xf32>
    %68 = vector.shape_cast %67 : vector<1x8x8xf32> to vector<8x8xf32>
    %69 = vector.extract_strided_slice %62 {offsets = [3, 0, 0], sizes = [1, 8, 8], strides = [1, 1, 1]} : vector<4x8x8xf32> to vector<1x8x8xf32>
    %70 = vector.shape_cast %69 : vector<1x8x8xf32> to vector<8x8xf32>
    %71 = tpu.concatenate %64, %66, %68, %70 in 1 : vector<8x8xf32>, vector<8x8xf32>, vector<8x8xf32>, vector<8x8xf32> -> vector<8x32xf32>
    %72 = arith.truncf %71 : vector<8x32xf32> to vector<8x32xbf16>
    %cst_18 = arith.constant dense<0.000000e+00> : vector<8x32xf32>
    %73 = tpu.matmul %72, %18, %cst_18 {dimension_numbers = #tpu.dot_dimension_numbers<[1], [0], [0], [1], [0, 0, 1, 1], [], []>} : vector<8x32xbf16>, vector<32x32xbf16>, vector<8x32xf32> -> vector<8x32xf32>
    %74 = vector.broadcast %19 : vector<1x32xf32> to vector<8x32xf32>
    %75 = arith.addf %73, %74 : vector<8x32xf32>
    %76 = arith.addf %5, %75 : vector<8x32xf32>
    %cst_19 = arith.constant dense<0.000000e+00> : vector<8xf32>
    %77 = vector.multi_reduction <add>, %76, %cst_19 [1] : vector<8x32xf32> to vector<8xf32>
    %78 = vector.shape_cast %77 : vector<8xf32> to vector<8x1xf32>
    %cst_20 = arith.constant 3.200000e+01 : f32
    %79 = vector.broadcast %cst_20 : f32 to vector<8x1xf32>
    %80 = arith.divf %78, %79 : vector<8x1xf32>
    %81 = vector.broadcast %80 : vector<8x1xf32> to vector<8x32xf32>
    %82 = arith.subf %76, %81 : vector<8x32xf32>
    %83 = arith.mulf %82, %82 : vector<8x32xf32>
    %cst_21 = arith.constant dense<0.000000e+00> : vector<8xf32>
    %84 = vector.multi_reduction <add>, %83, %cst_21 [1] : vector<8x32xf32> to vector<8xf32>
    %85 = vector.shape_cast %84 : vector<8xf32> to vector<8x1xf32>
    %cst_22 = arith.constant 3.200000e+01 : f32
    %86 = vector.broadcast %cst_22 : f32 to vector<8x1xf32>
    %87 = arith.divf %85, %86 : vector<8x1xf32>
    %cst_23 = arith.constant 9.99999974E-6 : f32
    %88 = vector.broadcast %cst_23 : f32 to vector<8x1xf32>
    %89 = arith.addf %87, %88 : vector<8x1xf32>
    %90 = math.rsqrt %89 : vector<8x1xf32>
    %91 = vector.broadcast %90 : vector<8x1xf32> to vector<8x32xf32>
    %92 = arith.mulf %82, %91 : vector<8x32xf32>
    %93 = vector.extract_strided_slice %4 {offsets = [4, 0], sizes = [1, 32], strides = [1, 1]} : vector<16x32xf32> to vector<1x32xf32>
    %94 = vector.broadcast %93 : vector<1x32xf32> to vector<8x32xf32>
    %95 = arith.mulf %92, %94 : vector<8x32xf32>
    %96 = vector.extract_strided_slice %4 {offsets = [5, 0], sizes = [1, 32], strides = [1, 1]} : vector<16x32xf32> to vector<1x32xf32>
    %97 = vector.broadcast %96 : vector<1x32xf32> to vector<8x32xf32>
    %98 = arith.addf %95, %97 : vector<8x32xf32>
    %99 = arith.truncf %98 : vector<8x32xf32> to vector<8x32xbf16>
    %c0_24 = arith.constant 0 : index
    %c0_25 = arith.constant 0 : index
    %c0_26 = arith.constant 0 : index
    %100 = vector.load %arg6[%c0_24, %c0_25, %c0_26] : memref<1x32x32xbf16, #tpu.memory_space<vmem>>, vector<1x32x32xbf16>
    %101 = vector.shape_cast %100 : vector<1x32x32xbf16> to vector<32x32xbf16>
    %cst_27 = arith.constant dense<0.000000e+00> : vector<8x32xf32>
    %102 = tpu.matmul %99, %101, %cst_27 {dimension_numbers = #tpu.dot_dimension_numbers<[1], [0], [0], [1], [0, 0, 1, 1], [], []>} : vector<8x32xbf16>, vector<32x32xbf16>, vector<8x32xf32> -> vector<8x32xf32>
    %103 = vector.extract_strided_slice %4 {offsets = [0, 0], sizes = [1, 32], strides = [1, 1]} : vector<16x32xf32> to vector<1x32xf32>
    %104 = vector.broadcast %103 : vector<1x32xf32> to vector<8x32xf32>
    %105 = arith.addf %102, %104 : vector<8x32xf32>
    %c0_28 = arith.constant 0 : index
    %c0_29 = arith.constant 0 : index
    %c0_30 = arith.constant 0 : index
    %106 = vector.load %arg7[%c0_28, %c0_29, %c0_30] : memref<1x32x64xbf16, #tpu.memory_space<vmem>>, vector<1x32x64xbf16>
    %107 = vector.shape_cast %106 : vector<1x32x64xbf16> to vector<32x64xbf16>
    %cst_31 = arith.constant dense<0.000000e+00> : vector<8x64xf32>
    %108 = tpu.matmul %6, %107, %cst_31 {dimension_numbers = #tpu.dot_dimension_numbers<[1], [0], [0], [1], [0, 0, 1, 1], [], []>} : vector<8x32xbf16>, vector<32x64xbf16>, vector<8x64xf32> -> vector<8x64xf32>
    %c0_32 = arith.constant 0 : index
    %c0_33 = arith.constant 0 : index
    %c0_34 = arith.constant 0 : index
    %109 = vector.load %arg8[%c0_32, %c0_33, %c0_34] : memref<1x1x64xf32, #tpu.memory_space<vmem>>, vector<1x1x64xf32>
    %110 = vector.shape_cast %109 : vector<1x1x64xf32> to vector<1x64xf32>
    %111 = vector.broadcast %110 : vector<1x64xf32> to vector<8x64xf32>
    %112 = arith.addf %108, %111 : vector<8x64xf32>
    %113 = vector.extract_strided_slice %112 {offsets = [0, 0], sizes = [8, 32], strides = [1, 1]} : vector<8x64xf32> to vector<8x32xf32>
    %114 = vector.extract_strided_slice %112 {offsets = [0, 32], sizes = [8, 32], strides = [1, 1]} : vector<8x64xf32> to vector<8x32xf32>
    %c0_35 = arith.constant 0 : index
    %c0_36 = arith.constant 0 : index
    %c0_37 = arith.constant 0 : index
    %115 = vector.load %arg9[%c0_35, %c0_36, %c0_37] : memref<1x32x32xbf16, #tpu.memory_space<vmem>>, vector<1x32x32xbf16>
    %116 = vector.shape_cast %115 : vector<1x32x32xbf16> to vector<32x32xbf16>
    %117 = vector.extract_strided_slice %4 {offsets = [2, 0], sizes = [1, 32], strides = [1, 1]} : vector<16x32xf32> to vector<1x32xf32>
    %118 = arith.truncf %105 : vector<8x32xf32> to vector<8x32xbf16>
    %119 = vector.extract_strided_slice %118 {offsets = [0, 0], sizes = [8, 8], strides = [1, 1]} : vector<8x32xbf16> to vector<8x8xbf16>
    %120 = vector.extract_strided_slice %118 {offsets = [0, 8], sizes = [8, 8], strides = [1, 1]} : vector<8x32xbf16> to vector<8x8xbf16>
    %121 = vector.extract_strided_slice %118 {offsets = [0, 16], sizes = [8, 8], strides = [1, 1]} : vector<8x32xbf16> to vector<8x8xbf16>
    %122 = vector.extract_strided_slice %118 {offsets = [0, 24], sizes = [8, 8], strides = [1, 1]} : vector<8x32xbf16> to vector<8x8xbf16>
    %123 = vector.shape_cast %119 : vector<8x8xbf16> to vector<1x8x8xbf16>
    %124 = vector.shape_cast %120 : vector<8x8xbf16> to vector<1x8x8xbf16>
    %125 = vector.shape_cast %121 : vector<8x8xbf16> to vector<1x8x8xbf16>
    %126 = vector.shape_cast %122 : vector<8x8xbf16> to vector<1x8x8xbf16>
    %127 = tpu.concatenate %123, %124, %125, %126 in 0 : vector<1x8x8xbf16>, vector<1x8x8xbf16>, vector<1x8x8xbf16>, vector<1x8x8xbf16> -> vector<4x8x8xbf16>
    %128 = arith.truncf %113 : vector<8x32xf32> to vector<8x32xbf16>
    %129 = vector.extract_strided_slice %128 {offsets = [0, 0], sizes = [8, 8], strides = [1, 1]} : vector<8x32xbf16> to vector<8x8xbf16>
    %130 = vector.extract_strided_slice %128 {offsets = [0, 8], sizes = [8, 8], strides = [1, 1]} : vector<8x32xbf16> to vector<8x8xbf16>
    %131 = vector.extract_strided_slice %128 {offsets = [0, 16], sizes = [8, 8], strides = [1, 1]} : vector<8x32xbf16> to vector<8x8xbf16>
    %132 = vector.extract_strided_slice %128 {offsets = [0, 24], sizes = [8, 8], strides = [1, 1]} : vector<8x32xbf16> to vector<8x8xbf16>
    %133 = vector.shape_cast %129 : vector<8x8xbf16> to vector<1x8x8xbf16>
    %134 = vector.shape_cast %130 : vector<8x8xbf16> to vector<1x8x8xbf16>
    %135 = vector.shape_cast %131 : vector<8x8xbf16> to vector<1x8x8xbf16>
    %136 = vector.shape_cast %132 : vector<8x8xbf16> to vector<1x8x8xbf16>
    %137 = tpu.concatenate %133, %134, %135, %136 in 0 : vector<1x8x8xbf16>, vector<1x8x8xbf16>, vector<1x8x8xbf16>, vector<1x8x8xbf16> -> vector<4x8x8xbf16>
    %138 = arith.truncf %114 : vector<8x32xf32> to vector<8x32xbf16>
    %139 = vector.extract_strided_slice %138 {offsets = [0, 0], sizes = [8, 8], strides = [1, 1]} : vector<8x32xbf16> to vector<8x8xbf16>
    %140 = vector.extract_strided_slice %138 {offsets = [0, 8], sizes = [8, 8], strides = [1, 1]} : vector<8x32xbf16> to vector<8x8xbf16>
    %141 = vector.extract_strided_slice %138 {offsets = [0, 16], sizes = [8, 8], strides = [1, 1]} : vector<8x32xbf16> to vector<8x8xbf16>
    %142 = vector.extract_strided_slice %138 {offsets = [0, 24], sizes = [8, 8], strides = [1, 1]} : vector<8x32xbf16> to vector<8x8xbf16>
    %143 = vector.shape_cast %139 : vector<8x8xbf16> to vector<1x8x8xbf16>
    %144 = vector.shape_cast %140 : vector<8x8xbf16> to vector<1x8x8xbf16>
    %145 = vector.shape_cast %141 : vector<8x8xbf16> to vector<1x8x8xbf16>
    %146 = vector.shape_cast %142 : vector<8x8xbf16> to vector<1x8x8xbf16>
    %147 = tpu.concatenate %143, %144, %145, %146 in 0 : vector<1x8x8xbf16>, vector<1x8x8xbf16>, vector<1x8x8xbf16>, vector<1x8x8xbf16> -> vector<4x8x8xbf16>
    "tpu.trace_start"() <{level = 10 : i32, message = "bqd,bkd->bqk"}> : () -> ()
    %cst_38 = arith.constant dense<0.000000e+00> : vector<4x8x8xf32>
    %148 = tpu.matmul %127, %137, %cst_38 {dimension_numbers = #tpu.dot_dimension_numbers<[2], [2], [1], [1], [0, 0, 0, 1, 1, 1], [0], [0]>} : vector<4x8x8xbf16>, vector<4x8x8xbf16>, vector<4x8x8xf32> -> vector<4x8x8xf32>
    "tpu.trace_stop"() : () -> ()
    %cst_39 = arith.constant dense<0xFF800000> : vector<4x8xf32>
    %149 = vector.multi_reduction <maximumf>, %148, %cst_39 [2] : vector<4x8x8xf32> to vector<4x8xf32>
    %150 = vector.shape_cast %149 : vector<4x8xf32> to vector<4x8x1xf32>
    %151 = vector.broadcast %150 : vector<4x8x1xf32> to vector<4x8x8xf32>
    %152 = arith.subf %148, %151 : vector<4x8x8xf32>
    %153 = math.exp %152 : vector<4x8x8xf32>
    %cst_40 = arith.constant dense<0.000000e+00> : vector<4x8xf32>
    %154 = vector.multi_reduction <add>, %153, %cst_40 [2] : vector<4x8x8xf32> to vector<4x8xf32>
    %155 = vector.shape_cast %154 : vector<4x8xf32> to vector<4x8x1xf32>
    %156 = arith.truncf %153 : vector<4x8x8xf32> to vector<4x8x8xbf16>
    "tpu.trace_start"() <{level = 10 : i32, message = "bqk,bkd->bqd"}> : () -> ()
    %cst_41 = arith.constant dense<0.000000e+00> : vector<4x8x8xf32>
    %157 = tpu.matmul %156, %147, %cst_41 {dimension_numbers = #tpu.dot_dimension_numbers<[2], [1], [1], [2], [0, 0, 0, 1, 1, 2], [0], [0]>} : vector<4x8x8xbf16>, vector<4x8x8xbf16>, vector<4x8x8xf32> -> vector<4x8x8xf32>
    "tpu.trace_stop"() : () -> ()
    %158 = tpu.reciprocal %155 : vector<4x8x1xf32> -> vector<4x8x1xf32>
    %159 = vector.broadcast %158 : vector<4x8x1xf32> to vector<4x8x8xf32>
    %160 = arith.mulf %157, %159 : vector<4x8x8xf32>
    %161 = vector.extract_strided_slice %160 {offsets = [0, 0, 0], sizes = [1, 8, 8], strides = [1, 1, 1]} : vector<4x8x8xf32> to vector<1x8x8xf32>
    %162 = vector.shape_cast %161 : vector<1x8x8xf32> to vector<8x8xf32>
    %163 = vector.extract_strided_slice %160 {offsets = [1, 0, 0], sizes = [1, 8, 8], strides = [1, 1, 1]} : vector<4x8x8xf32> to vector<1x8x8xf32>
    %164 = vector.shape_cast %163 : vector<1x8x8xf32> to vector<8x8xf32>
    %165 = vector.extract_strided_slice %160 {offsets = [2, 0, 0], sizes = [1, 8, 8], strides = [1, 1, 1]} : vector<4x8x8xf32> to vector<1x8x8xf32>
    %166 = vector.shape_cast %165 : vector<1x8x8xf32> to vector<8x8xf32>
    %167 = vector.extract_strided_slice %160 {offsets = [3, 0, 0], sizes = [1, 8, 8], strides = [1, 1, 1]} : vector<4x8x8xf32> to vector<1x8x8xf32>
    %168 = vector.shape_cast %167 : vector<1x8x8xf32> to vector<8x8xf32>
    %169 = tpu.concatenate %162, %164, %166, %168 in 1 : vector<8x8xf32>, vector<8x8xf32>, vector<8x8xf32>, vector<8x8xf32> -> vector<8x32xf32>
    %170 = arith.truncf %169 : vector<8x32xf32> to vector<8x32xbf16>
    %cst_42 = arith.constant dense<0.000000e+00> : vector<8x32xf32>
    %171 = tpu.matmul %170, %116, %cst_42 {dimension_numbers = #tpu.dot_dimension_numbers<[1], [0], [0], [1], [0, 0, 1, 1], [], []>} : vector<8x32xbf16>, vector<32x32xbf16>, vector<8x32xf32> -> vector<8x32xf32>
    %172 = vector.broadcast %117 : vector<1x32xf32> to vector<8x32xf32>
    %173 = arith.addf %171, %172 : vector<8x32xf32>
    %174 = arith.addf %98, %173 : vector<8x32xf32>
    %cst_43 = arith.constant dense<0.000000e+00> : vector<8xf32>
    %175 = vector.multi_reduction <add>, %174, %cst_43 [1] : vector<8x32xf32> to vector<8xf32>
    %176 = vector.shape_cast %175 : vector<8xf32> to vector<8x1xf32>
    %cst_44 = arith.constant 3.200000e+01 : f32
    %177 = vector.broadcast %cst_44 : f32 to vector<8x1xf32>
    %178 = arith.divf %176, %177 : vector<8x1xf32>
    %179 = vector.broadcast %178 : vector<8x1xf32> to vector<8x32xf32>
    %180 = arith.subf %174, %179 : vector<8x32xf32>
    %181 = arith.mulf %180, %180 : vector<8x32xf32>
    %cst_45 = arith.constant dense<0.000000e+00> : vector<8xf32>
    %182 = vector.multi_reduction <add>, %181, %cst_45 [1] : vector<8x32xf32> to vector<8xf32>
    %183 = vector.shape_cast %182 : vector<8xf32> to vector<8x1xf32>
    %cst_46 = arith.constant 3.200000e+01 : f32
    %184 = vector.broadcast %cst_46 : f32 to vector<8x1xf32>
    %185 = arith.divf %183, %184 : vector<8x1xf32>
    %cst_47 = arith.constant 9.99999974E-6 : f32
    %186 = vector.broadcast %cst_47 : f32 to vector<8x1xf32>
    %187 = arith.addf %185, %186 : vector<8x1xf32>
    %188 = math.rsqrt %187 : vector<8x1xf32>
    %189 = vector.broadcast %188 : vector<8x1xf32> to vector<8x32xf32>
    %190 = arith.mulf %180, %189 : vector<8x32xf32>
    %191 = vector.extract_strided_slice %4 {offsets = [6, 0], sizes = [1, 32], strides = [1, 1]} : vector<16x32xf32> to vector<1x32xf32>
    %192 = vector.broadcast %191 : vector<1x32xf32> to vector<8x32xf32>
    %193 = arith.mulf %190, %192 : vector<8x32xf32>
    %194 = vector.extract_strided_slice %4 {offsets = [7, 0], sizes = [1, 32], strides = [1, 1]} : vector<16x32xf32> to vector<1x32xf32>
    %195 = vector.broadcast %194 : vector<1x32xf32> to vector<8x32xf32>
    %196 = arith.addf %193, %195 : vector<8x32xf32>
    %197 = arith.truncf %196 : vector<8x32xf32> to vector<8x32xbf16>
    %c0_48 = arith.constant 0 : index
    %c0_49 = arith.constant 0 : index
    %c0_50 = arith.constant 0 : index
    %198 = vector.load %arg10[%c0_48, %c0_49, %c0_50] : memref<1x32x2048xbf16, #tpu.memory_space<vmem>>, vector<1x32x2048xbf16>
    %199 = vector.shape_cast %198 : vector<1x32x2048xbf16> to vector<32x2048xbf16>
    %cst_51 = arith.constant dense<0.000000e+00> : vector<8x2048xf32>
    %200 = tpu.matmul %197, %199, %cst_51 {dimension_numbers = #tpu.dot_dimension_numbers<[1], [0], [0], [1], [0, 0, 1, 1], [], []>} : vector<8x32xbf16>, vector<32x2048xbf16>, vector<8x2048xf32> -> vector<8x2048xf32>
    %c0_52 = arith.constant 0 : index
    %c0_53 = arith.constant 0 : index
    %c0_54 = arith.constant 0 : index
    %201 = vector.load %arg11[%c0_52, %c0_53, %c0_54] : memref<1x1x2048xf32, #tpu.memory_space<vmem>>, vector<1x1x2048xf32>
    %202 = vector.shape_cast %201 : vector<1x1x2048xf32> to vector<1x2048xf32>
    %203 = vector.broadcast %202 : vector<1x2048xf32> to vector<8x2048xf32>
    %204 = arith.addf %200, %203 : vector<8x2048xf32>
    %cst_55 = arith.constant 0.000000e+00 : f32
    %205 = vector.broadcast %cst_55 : f32 to vector<8x2048xf32>
    %206 = arith.maximumf %204, %205 : vector<8x2048xf32>
    %207 = arith.truncf %206 : vector<8x2048xf32> to vector<8x2048xbf16>
    %c0_56 = arith.constant 0 : index
    %c0_57 = arith.constant 0 : index
    %c0_58 = arith.constant 0 : index
    %208 = vector.load %arg12[%c0_56, %c0_57, %c0_58] : memref<1x2048x32xbf16, #tpu.memory_space<vmem>>, vector<1x2048x32xbf16>
    %209 = vector.shape_cast %208 : vector<1x2048x32xbf16> to vector<2048x32xbf16>
    %cst_59 = arith.constant dense<0.000000e+00> : vector<8x32xf32>
    %210 = tpu.matmul %207, %209, %cst_59 {dimension_numbers = #tpu.dot_dimension_numbers<[1], [0], [0], [1], [0, 0, 1, 1], [], []>} : vector<8x2048xbf16>, vector<2048x32xbf16>, vector<8x32xf32> -> vector<8x32xf32>
    %211 = vector.extract_strided_slice %4 {offsets = [3, 0], sizes = [1, 32], strides = [1, 1]} : vector<16x32xf32> to vector<1x32xf32>
    %212 = vector.broadcast %211 : vector<1x32xf32> to vector<8x32xf32>
    %213 = arith.addf %210, %212 : vector<8x32xf32>
    %214 = arith.addf %196, %213 : vector<8x32xf32>
    %cst_60 = arith.constant dense<0.000000e+00> : vector<8xf32>
    %215 = vector.multi_reduction <add>, %214, %cst_60 [1] : vector<8x32xf32> to vector<8xf32>
    %216 = vector.shape_cast %215 : vector<8xf32> to vector<8x1xf32>
    %cst_61 = arith.constant 3.200000e+01 : f32
    %217 = vector.broadcast %cst_61 : f32 to vector<8x1xf32>
    %218 = arith.divf %216, %217 : vector<8x1xf32>
    %219 = vector.broadcast %218 : vector<8x1xf32> to vector<8x32xf32>
    %220 = arith.subf %214, %219 : vector<8x32xf32>
    %221 = arith.mulf %220, %220 : vector<8x32xf32>
    %cst_62 = arith.constant dense<0.000000e+00> : vector<8xf32>
    %222 = vector.multi_reduction <add>, %221, %cst_62 [1] : vector<8x32xf32> to vector<8xf32>
    %223 = vector.shape_cast %222 : vector<8xf32> to vector<8x1xf32>
    %cst_63 = arith.constant 3.200000e+01 : f32
    %224 = vector.broadcast %cst_63 : f32 to vector<8x1xf32>
    %225 = arith.divf %223, %224 : vector<8x1xf32>
    %cst_64 = arith.constant 9.99999974E-6 : f32
    %226 = vector.broadcast %cst_64 : f32 to vector<8x1xf32>
    %227 = arith.addf %225, %226 : vector<8x1xf32>
    %228 = math.rsqrt %227 : vector<8x1xf32>
    %229 = vector.broadcast %228 : vector<8x1xf32> to vector<8x32xf32>
    %230 = arith.mulf %220, %229 : vector<8x32xf32>
    %231 = vector.extract_strided_slice %4 {offsets = [8, 0], sizes = [1, 32], strides = [1, 1]} : vector<16x32xf32> to vector<1x32xf32>
    %232 = vector.broadcast %231 : vector<1x32xf32> to vector<8x32xf32>
    %233 = arith.mulf %230, %232 : vector<8x32xf32>
    %234 = vector.extract_strided_slice %4 {offsets = [9, 0], sizes = [1, 32], strides = [1, 1]} : vector<16x32xf32> to vector<1x32xf32>
    %235 = vector.broadcast %234 : vector<1x32xf32> to vector<8x32xf32>
    %236 = arith.addf %233, %235 : vector<8x32xf32>
    %c0_65 = arith.constant 0 : index
    %c0_66 = arith.constant 0 : index
    %237 = vector.load %arg14[%c0_65, %c0_66] : memref<8x32xf32, #tpu.memory_space<vmem>>, vector<8x32xf32>
    tpu.vector_store %arg14[%c0_65, %c0_66], %236 {strides = array<i32>} : memref<8x32xf32, #tpu.memory_space<vmem>>, vector<8x32xf32>,
    return
  }
  func.func @transform_0(%arg0: i32, %arg1: i32) -> (i32, i32) {
    %c0_i32 = arith.constant 0 : i32
    %c0_i32_0 = arith.constant 0 : i32
    return %arg0, %c0_i32 : i32, i32
  }
  func.func @transform_1(%arg0: i32, %arg1: i32) -> (i32, i32, i32) {
    %c0_i32 = arith.constant 0 : i32
    %c0_i32_0 = arith.constant 0 : i32
    %c0_i32_1 = arith.constant 0 : i32
    return %arg1, %c0_i32, %c0_i32_0 : i32, i32, i32
  }
  func.func @transform_2(%arg0: i32, %arg1: i32) -> (i32, i32, i32) {
    %c0_i32 = arith.constant 0 : i32
    %c0_i32_0 = arith.constant 0 : i32
    %c0_i32_1 = arith.constant 0 : i32
    return %arg1, %c0_i32, %c0_i32_0 : i32, i32, i32
  }
  func.func @transform_3(%arg0: i32, %arg1: i32) -> (i32, i32, i32) {
    %c0_i32 = arith.constant 0 : i32
    %c0_i32_0 = arith.constant 0 : i32
    %c0_i32_1 = arith.constant 0 : i32
    return %arg1, %c0_i32, %c0_i32_0 : i32, i32, i32
  }
  func.func @transform_4(%arg0: i32, %arg1: i32) -> (i32, i32, i32) {
    %c0_i32 = arith.constant 0 : i32
    %c0_i32_0 = arith.constant 0 : i32
    %c0_i32_1 = arith.constant 0 : i32
    return %arg1, %c0_i32, %c0_i32_0 : i32, i32, i32
  }
  func.func @transform_5(%arg0: i32, %arg1: i32) -> (i32, i32, i32) {
    %c0_i32 = arith.constant 0 : i32
    %c0_i32_0 = arith.constant 0 : i32
    %c0_i32_1 = arith.constant 0 : i32
    return %arg1, %c0_i32, %c0_i32_0 : i32, i32, i32
  }
  func.func @transform_6(%arg0: i32, %arg1: i32) -> (i32, i32, i32) {
    %c0_i32 = arith.constant 0 : i32
    %c0_i32_0 = arith.constant 0 : i32
    %c0_i32_1 = arith.constant 0 : i32
    return %arg1, %c0_i32, %c0_i32_0 : i32, i32, i32
  }
  func.func @transform_7(%arg0: i32, %arg1: i32) -> (i32, i32, i32) {
    %c0_i32 = arith.constant 0 : i32
    %c0_i32_0 = arith.constant 0 : i32
    %c0_i32_1 = arith.constant 0 : i32
    return %arg1, %c0_i32, %c0_i32_0 : i32, i32, i32
  }
  func.func @transform_8(%arg0: i32, %arg1: i32) -> (i32, i32, i32) {
    %c0_i32 = arith.constant 0 : i32
    %c0_i32_0 = arith.constant 0 : i32
    %c0_i32_1 = arith.constant 0 : i32
    return %arg1, %c0_i32, %c0_i32_0 : i32, i32, i32
  }
  func.func @transform_9(%arg0: i32, %arg1: i32) -> (i32, i32, i32) {
    %c0_i32 = arith.constant 0 : i32
    %c0_i32_0 = arith.constant 0 : i32
    %c0_i32_1 = arith.constant 0 : i32
    return %arg1, %c0_i32, %c0_i32_0 : i32, i32, i32
  }
  func.func @transform_10(%arg0: i32, %arg1: i32) -> (i32, i32, i32) {
    %c0_i32 = arith.constant 0 : i32
    %c0_i32_0 = arith.constant 0 : i32
    %c0_i32_1 = arith.constant 0 : i32
    return %arg1, %c0_i32, %c0_i32_0 : i32, i32, i32
  }
  func.func @transform_11(%arg0: i32, %arg1: i32) -> (i32, i32, i32) {
    %c0_i32 = arith.constant 0 : i32
    %c0_i32_0 = arith.constant 0 : i32
    %c0_i32_1 = arith.constant 0 : i32
    return %arg1, %c0_i32, %c0_i32_0 : i32, i32, i32
  }
  func.func @transform_12(%arg0: i32, %arg1: i32) -> (i32, i32) {
    %c0_i32 = arith.constant 0 : i32
    %c0_i32_0 = arith.constant 0 : i32
    return %arg0, %c0_i32 : i32, i32
  }
}

</mosaic_0001>

<llo_original>
// kernel: tpu_custom_call.1
$region0: #{tpu_custom_call.1}
  #allocation0 [shape = 'u32[]', space=smem, size = 0x4, offset = 0x4, fixed_abs, tag = 'smem constant byte address 0x4 - core index']
  #allocation1 [shape = 'u32[72,128]{1,0:T(1,128)}', space=vmem, size = 0x9000, scoped, tag = 'internal scratch']
  %s0 = inlined_call_operand.vmem [shape: f32[16,32], index: 0, kind: input, shape index: {}]
  %s1 = inlined_call_operand.vmem [shape: bf16[2,32,96], index: 1, kind: input, shape index: {}]
  %s2 = inlined_call_operand.vmem [shape: f32[2,1,96], index: 2, kind: input, shape index: {}]
  %s3 = inlined_call_operand.vmem [shape: bf16[2,32,32], index: 3, kind: input, shape index: {}]
  %s4 = inlined_call_operand.vmem [shape: bf16[2,32,32], index: 4, kind: input, shape index: {}]
  %s5 = inlined_call_operand.vmem [shape: bf16[2,32,64], index: 5, kind: input, shape index: {}]
  %s6 = inlined_call_operand.vmem [shape: f32[2,1,64], index: 6, kind: input, shape index: {}]
  %s7 = inlined_call_operand.vmem [shape: bf16[2,32,32], index: 7, kind: input, shape index: {}]
  %s8 = inlined_call_operand.vmem [shape: bf16[2,32,2048], index: 8, kind: input, shape index: {}]
  %s9 = inlined_call_operand.vmem [shape: f32[2,1,2048], index: 9, kind: input, shape index: {}]
  %s10 = inlined_call_operand.vmem [shape: bf16[2,2048,32], index: 10, kind: input, shape index: {}]
  %s11 = inlined_call_operand.vmem [shape: f32[2,16,32], index: 11, kind: input, shape index: {}]
  %s12 = inlined_call_operand.hbm [shape: f32[16,32], index: 12, kind: output, shape index: {}]
  %s13 = sld [smem:[#allocation0]]
  $region85: #{tpu_custom_call.1} parent=0
    _
  %s15 = ssub.s32 1, %s13
  %s16 = scalar_select 0, %s15, %s13
  $region1: #{tpu_custom_call.1} parent=0
    #allocation2 [shape = 'u8[8192]{0}', space=vmem, size = 0x2000, scoped, tag = 'output window, operand 0']
    #allocation3 [shape = 's32[2]{0}', space=sflag, size = 0x8, scoped, tag = 'scoped memory for tpu_custom_call.1']
    %17 = vsyncpa [#allocation3], 0
    %s18 = scalar_lea.sflag [#allocation3], 1
    %19 = vsyncpa %s18, 0
    loop: start=0, step=1, limit=6
    $region2: #{tpu_custom_call.1} parent=1 // loop_pre_header
      _
    $region3: #{tpu_custom_call.1} parent=1 // loop_header
      %s21 = sphi 0, %s25
      %p22 = scmp.ge.s32.totalorder %s21, 6
      %s28 = sphi 0, %s40
      %s29 = sphi 0, %s36
      %s30 = sphi 0, %s28
      %s31 = sphi 0, %s29
      %s32 = sphi 0, %s30
      %s33 = sphi 0, %s31
      %s43 = sphi 0, %s45
      %s46 = sphi 0, %s43
      %s47 = sphi 0, %s46
      %s63 = sphi 0, %s47
      %s69 = sphi 0, %s71
      %s72 = sphi 0, %s69
      %s73 = sphi 0, %s72
      %s89 = sphi 0, %s73
      %s95 = sphi 0, %s97
      %s98 = sphi 0, %s95
      %s99 = sphi 0, %s98
      %s115 = sphi 0, %s99
      %s121 = sphi 0, %s123
      %s124 = sphi 0, %s121
      %s125 = sphi 0, %s124
      %s141 = sphi 0, %s125
      %s147 = sphi 0, %s149
      %s150 = sphi 0, %s147
      %s151 = sphi 0, %s150
      %s167 = sphi 0, %s151
      %s173 = sphi 0, %s175
      %s176 = sphi 0, %s173
      %s177 = sphi 0, %s176
      %s193 = sphi 0, %s177
      %s199 = sphi 0, %s201
      %s202 = sphi 0, %s199
      %s203 = sphi 0, %s202
      %s219 = sphi 0, %s203
      %s225 = sphi 0, %s227
      %s228 = sphi 0, %s225
      %s229 = sphi 0, %s228
      %s245 = sphi 0, %s229
      %s251 = sphi 0, %s253
      %s254 = sphi 0, %s251
      %s255 = sphi 0, %s254
      %s271 = sphi 0, %s255
      %s277 = sphi 0, %s279
      %s280 = sphi 0, %s277
      %s281 = sphi 0, %s280
      %s297 = sphi 0, %s281
      %s303 = sphi 0, %s305
      %s306 = sphi 0, %s303
      %s307 = sphi 0, %s306
      %s323 = sphi 0, %s307
      %s329 = sphi 0, %s331
      %s332 = sphi 0, %s329
      %s333 = sphi 0, %s332
      %s349 = sphi 0, %s333
      %s355 = sphi 0, %s357
      %s358 = sphi 0, %s355
      %s359 = sphi 0, %s358
      %s375 = sphi 0, %s359
    $region4: #{tpu_custom_call.1} parent=1 // loop_header_branch
      %24 = sbr.rel (%p22) target = $region8
    $region5: #{tpu_custom_call.1} parent=1 // loop_body
      %s26 = ssub.s32 %s21, 1
      %s27 = ssub.s32 %s21, 2
      %s34 = sadd.s32 1, %s29
      %p35 = scmp.ge.s32.totalorder %s34, 2
      %s36 = scalar_select %p35, 0, %s34
      %s37 = sadd.s32 1, %s28
      %s38 = scalar_select %p35, %s37, %s28
      %p39 = scmp.ge.s32.totalorder %s38, 2
      %s40 = scalar_select %p39, 0, %s38
      %s41 = ssub.s32 %s28, %s40
      %p42 = scmp.eq.s32.totalorder %s41, 0
      %s44 = sadd.s32 %s43, 1
      %s45 = scalar_select %p42, %s43, %s44
      %p48 = pneg %p42
      %p49 = scmp.eq.s32.totalorder %s21, 3
      %p50 = por %p48, %p49
      %p51 = scmp.ne.s32.totalorder %s43, %s46
      %p52 = scmp.eq.s32.totalorder %s21, 0
      %p53 = por %p51, %p52
      %p54 = scmp.ne.s32.totalorder %s43, %s46
      %p55 = scmp.eq.s32.totalorder %s26, 3
      %p56 = por %p54, %p55
      %p57 = scmp.ne.s32.totalorder %s46, %s47
      %p58 = scmp.eq.s32.totalorder %s26, 0
      %p59 = por %p57, %p58
      %p60 = scmp.ne.s32.totalorder %s46, %s47
      %p61 = scmp.eq.s32.totalorder %s27, 3
      %p62 = por %p60, %p61
      %p64 = scmp.ne.s32.totalorder %s47, %s63
      %p65 = scmp.eq.s32.totalorder %s27, 0
      %p66 = por %p64, %p65
      %s67 = ssub.s32 %s29, %s36
      %p68 = scmp.eq.s32.totalorder %s67, 0
      %s70 = sadd.s32 %s69, 1
      %s71 = scalar_select %p68, %s69, %s70
      %p74 = pneg %p68
      %p75 = scmp.eq.s32.totalorder %s21, 3
      %p76 = por %p74, %p75
      %p77 = scmp.ne.s32.totalorder %s69, %s72
      %p78 = scmp.eq.s32.totalorder %s21, 0
      %p79 = por %p77, %p78
      %p80 = scmp.ne.s32.totalorder %s69, %s72
      %p81 = scmp.eq.s32.totalorder %s26, 3
      %p82 = por %p80, %p81
      %p83 = scmp.ne.s32.totalorder %s72, %s73
      %p84 = scmp.eq.s32.totalorder %s26, 0
      %p85 = por %p83, %p84
      %p86 = scmp.ne.s32.totalorder %s72, %s73
      %p87 = scmp.eq.s32.totalorder %s27, 3
      %p88 = por %p86, %p87
      %p90 = scmp.ne.s32.totalorder %s73, %s89
      %p91 = scmp.eq.s32.totalorder %s27, 0
      %p92 = por %p90, %p91
      %s93 = ssub.s32 %s29, %s36
      %p94 = scmp.eq.s32.totalorder %s93, 0
      %s96 = sadd.s32 %s95, 1
      %s97 = scalar_select %p94, %s95, %s96
      %p100 = pneg %p94
      %p101 = scmp.eq.s32.totalorder %s21, 3
      %p102 = por %p100, %p101
      %p103 = scmp.ne.s32.totalorder %s95, %s98
      %p104 = scmp.eq.s32.totalorder %s21, 0
      %p105 = por %p103, %p104
      %p106 = scmp.ne.s32.totalorder %s95, %s98
      %p107 = scmp.eq.s32.totalorder %s26, 3
      %p108 = por %p106, %p107
      %p109 = scmp.ne.s32.totalorder %s98, %s99
      %p110 = scmp.eq.s32.totalorder %s26, 0
      %p111 = por %p109, %p110
      %p112 = scmp.ne.s32.totalorder %s98, %s99
      %p113 = scmp.eq.s32.totalorder %s27, 3
      %p114 = por %p112, %p113
      %p116 = scmp.ne.s32.totalorder %s99, %s115
      %p117 = scmp.eq.s32.totalorder %s27, 0
      %p118 = por %p116, %p117
      %s119 = ssub.s32 %s29, %s36
      %p120 = scmp.eq.s32.totalorder %s119, 0
      %s122 = sadd.s32 %s121, 1
      %s123 = scalar_select %p120, %s121, %s122
      %p126 = pneg %p120
      %p127 = scmp.eq.s32.totalorder %s21, 3
      %p128 = por %p126, %p127
      %p129 = scmp.ne.s32.totalorder %s121, %s124
      %p130 = scmp.eq.s32.totalorder %s21, 0
      %p131 = por %p129, %p130
      %p132 = scmp.ne.s32.totalorder %s121, %s124
      %p133 = scmp.eq.s32.totalorder %s26, 3
      %p134 = por %p132, %p133
      %p135 = scmp.ne.s32.totalorder %s124, %s125
      %p136 = scmp.eq.s32.totalorder %s26, 0
      %p137 = por %p135, %p136
      %p138 = scmp.ne.s32.totalorder %s124, %s125
      %p139 = scmp.eq.s32.totalorder %s27, 3
      %p140 = por %p138, %p139
      %p142 = scmp.ne.s32.totalorder %s125, %s141
      %p143 = scmp.eq.s32.totalorder %s27, 0
      %p144 = por %p142, %p143
      %s145 = ssub.s32 %s29, %s36
      %p146 = scmp.eq.s32.totalorder %s145, 0
      %s148 = sadd.s32 %s147, 1
      %s149 = scalar_select %p146, %s147, %s148
      %p152 = pneg %p146
      %p153 = scmp.eq.s32.totalorder %s21, 3
      %p154 = por %p152, %p153
      %p155 = scmp.ne.s32.totalorder %s147, %s150
      %p156 = scmp.eq.s32.totalorder %s21, 0
      %p157 = por %p155, %p156
      %p158 = scmp.ne.s32.totalorder %s147, %s150
      %p159 = scmp.eq.s32.totalorder %s26, 3
      %p160 = por %p158, %p159
      %p161 = scmp.ne.s32.totalorder %s150, %s151
      %p162 = scmp.eq.s32.totalorder %s26, 0
      %p163 = por %p161, %p162
      %p164 = scmp.ne.s32.totalorder %s150, %s151
      %p165 = scmp.eq.s32.totalorder %s27, 3
      %p166 = por %p164, %p165
      %p168 = scmp.ne.s32.totalorder %s151, %s167
      %p169 = scmp.eq.s32.totalorder %s27, 0
      %p170 = por %p168, %p169
      %s171 = ssub.s32 %s29, %s36
      %p172 = scmp.eq.s32.totalorder %s171, 0
      %s174 = sadd.s32 %s173, 1
      %s175 = scalar_select %p172, %s173, %s174
      %p178 = pneg %p172
      %p179 = scmp.eq.s32.totalorder %s21, 3
      %p180 = por %p178, %p179
      %p181 = scmp.ne.s32.totalorder %s173, %s176
      %p182 = scmp.eq.s32.totalorder %s21, 0
      %p183 = por %p181, %p182
      %p184 = scmp.ne.s32.totalorder %s173, %s176
      %p185 = scmp.eq.s32.totalorder %s26, 3
      %p186 = por %p184, %p185
      %p187 = scmp.ne.s32.totalorder %s176, %s177
      %p188 = scmp.eq.s32.totalorder %s26, 0
      %p189 = por %p187, %p188
      %p190 = scmp.ne.s32.totalorder %s176, %s177
      %p191 = scmp.eq.s32.totalorder %s27, 3
      %p192 = por %p190, %p191
      %p194 = scmp.ne.s32.totalorder %s177, %s193
      %p195 = scmp.eq.s32.totalorder %s27, 0
      %p196 = por %p194, %p195
      %s197 = ssub.s32 %s29, %s36
      %p198 = scmp.eq.s32.totalorder %s197, 0
      %s200 = sadd.s32 %s199, 1
      %s201 = scalar_select %p198, %s199, %s200
      %p204 = pneg %p198
      %p205 = scmp.eq.s32.totalorder %s21, 3
      %p206 = por %p204, %p205
      %p207 = scmp.ne.s32.totalorder %s199, %s202
      %p208 = scmp.eq.s32.totalorder %s21, 0
      %p209 = por %p207, %p208
      %p210 = scmp.ne.s32.totalorder %s199, %s202
      %p211 = scmp.eq.s32.totalorder %s26, 3
      %p212 = por %p210, %p211
      %p213 = scmp.ne.s32.totalorder %s202, %s203
      %p214 = scmp.eq.s32.totalorder %s26, 0
      %p215 = por %p213, %p214
      %p216 = scmp.ne.s32.totalorder %s202, %s203
      %p217 = scmp.eq.s32.totalorder %s27, 3
      %p218 = por %p216, %p217
      %p220 = scmp.ne.s32.totalorder %s203, %s219
      %p221 = scmp.eq.s32.totalorder %s27, 0
      %p222 = por %p220, %p221
      %s223 = ssub.s32 %s29, %s36
      %p224 = scmp.eq.s32.totalorder %s223, 0
      %s226 = sadd.s32 %s225, 1
      %s227 = scalar_select %p224, %s225, %s226
      %p230 = pneg %p224
      %p231 = scmp.eq.s32.totalorder %s21, 3
      %p232 = por %p230, %p231
      %p233 = scmp.ne.s32.totalorder %s225, %s228
      %p234 = scmp.eq.s32.totalorder %s21, 0
      %p235 = por %p233, %p234
      %p236 = scmp.ne.s32.totalorder %s225, %s228
      %p237 = scmp.eq.s32.totalorder %s26, 3
      %p238 = por %p236, %p237
      %p239 = scmp.ne.s32.totalorder %s228, %s229
      %p240 = scmp.eq.s32.totalorder %s26, 0
      %p241 = por %p239, %p240
      %p242 = scmp.ne.s32.totalorder %s228, %s229
      %p243 = scmp.eq.s32.totalorder %s27, 3
      %p244 = por %p242, %p243
      %p246 = scmp.ne.s32.totalorder %s229, %s245
      %p247 = scmp.eq.s32.totalorder %s27, 0
      %p248 = por %p246, %p247
      %s249 = ssub.s32 %s29, %s36
      %p250 = scmp.eq.s32.totalorder %s249, 0
      %s252 = sadd.s32 %s251, 1
      %s253 = scalar_select %p250, %s251, %s252
      %p256 = pneg %p250
      %p257 = scmp.eq.s32.totalorder %s21, 3
      %p258 = por %p256, %p257
      %p259 = scmp.ne.s32.totalorder %s251, %s254
      %p260 = scmp.eq.s32.totalorder %s21, 0
      %p261 = por %p259, %p260
      %p262 = scmp.ne.s32.totalorder %s251, %s254
      %p263 = scmp.eq.s32.totalorder %s26, 3
      %p264 = por %p262, %p263
      %p265 = scmp.ne.s32.totalorder %s254, %s255
      %p266 = scmp.eq.s32.totalorder %s26, 0
      %p267 = por %p265, %p266
      %p268 = scmp.ne.s32.totalorder %s254, %s255
      %p269 = scmp.eq.s32.totalorder %s27, 3
      %p270 = por %p268, %p269
      %p272 = scmp.ne.s32.totalorder %s255, %s271
      %p273 = scmp.eq.s32.totalorder %s27, 0
      %p274 = por %p272, %p273
      %s275 = ssub.s32 %s29, %s36
      %p276 = scmp.eq.s32.totalorder %s275, 0
      %s278 = sadd.s32 %s277, 1
      %s279 = scalar_select %p276, %s277, %s278
      %p282 = pneg %p276
      %p283 = scmp.eq.s32.totalorder %s21, 3
      %p284 = por %p282, %p283
      %p285 = scmp.ne.s32.totalorder %s277, %s280
      %p286 = scmp.eq.s32.totalorder %s21, 0
      %p287 = por %p285, %p286
      %p288 = scmp.ne.s32.totalorder %s277, %s280
      %p289 = scmp.eq.s32.totalorder %s26, 3
      %p290 = por %p288, %p289
      %p291 = scmp.ne.s32.totalorder %s280, %s281
      %p292 = scmp.eq.s32.totalorder %s26, 0
      %p293 = por %p291, %p292
      %p294 = scmp.ne.s32.totalorder %s280, %s281
      %p295 = scmp.eq.s32.totalorder %s27, 3
      %p296 = por %p294, %p295
      %p298 = scmp.ne.s32.totalorder %s281, %s297
      %p299 = scmp.eq.s32.totalorder %s27, 0
      %p300 = por %p298, %p299
      %s301 = ssub.s32 %s29, %s36
      %p302 = scmp.eq.s32.totalorder %s301, 0
      %s304 = sadd.s32 %s303, 1
      %s305 = scalar_select %p302, %s303, %s304
      %p308 = pneg %p302
      %p309 = scmp.eq.s32.totalorder %s21, 3
      %p310 = por %p308, %p309
      %p311 = scmp.ne.s32.totalorder %s303, %s306
      %p312 = scmp.eq.s32.totalorder %s21, 0
      %p313 = por %p311, %p312
      %p314 = scmp.ne.s32.totalorder %s303, %s306
      %p315 = scmp.eq.s32.totalorder %s26, 3
      %p316 = por %p314, %p315
      %p317 = scmp.ne.s32.totalorder %s306, %s307
      %p318 = scmp.eq.s32.totalorder %s26, 0
      %p319 = por %p317, %p318
      %p320 = scmp.ne.s32.totalorder %s306, %s307
      %p321 = scmp.eq.s32.totalorder %s27, 3
      %p322 = por %p320, %p321
      %p324 = scmp.ne.s32.totalorder %s307, %s323
      %p325 = scmp.eq.s32.totalorder %s27, 0
      %p326 = por %p324, %p325
      %s327 = ssub.s32 %s29, %s36
      %p328 = scmp.eq.s32.totalorder %s327, 0
      %s330 = sadd.s32 %s329, 1
      %s331 = scalar_select %p328, %s329, %s330
      %p334 = pneg %p328
      %p335 = scmp.eq.s32.totalorder %s21, 3
      %p336 = por %p334, %p335
      %p337 = scmp.ne.s32.totalorder %s329, %s332
      %p338 = scmp.eq.s32.totalorder %s21, 0
      %p339 = por %p337, %p338
      %p340 = scmp.ne.s32.totalorder %s329, %s332
      %p341 = scmp.eq.s32.totalorder %s26, 3
      %p342 = por %p340, %p341
      %p343 = scmp.ne.s32.totalorder %s332, %s333
      %p344 = scmp.eq.s32.totalorder %s26, 0
      %p345 = por %p343, %p344
      %p346 = scmp.ne.s32.totalorder %s332, %s333
      %p347 = scmp.eq.s32.totalorder %s27, 3
      %p348 = por %p346, %p347
      %p350 = scmp.ne.s32.totalorder %s333, %s349
      %p351 = scmp.eq.s32.totalorder %s27, 0
      %p352 = por %p350, %p351
      %s353 = ssub.s32 %s28, %s40
      %p354 = scmp.eq.s32.totalorder %s353, 0
      %s356 = sadd.s32 %s355, 1
      %s357 = scalar_select %p354, %s355, %s356
      %p360 = pneg %p354
      %p361 = scmp.eq.s32.totalorder %s21, 3
      %p362 = por %p360, %p361
      %p363 = scmp.ne.s32.totalorder %s355, %s358
      %p364 = scmp.eq.s32.totalorder %s21, 0
      %p365 = por %p363, %p364
      %p366 = scmp.ne.s32.totalorder %s355, %s358
      %p367 = scmp.eq.s32.totalorder %s26, 3
      %p368 = por %p366, %p367
      %p369 = scmp.ne.s32.totalorder %s358, %s359
      %p370 = scmp.eq.s32.totalorder %s26, 0
      %p371 = por %p369, %p370
      %p372 = scmp.ne.s32.totalorder %s358, %s359
      %p373 = scmp.eq.s32.totalorder %s27, 3
      %p374 = por %p372, %p373
      %p376 = scmp.ne.s32.totalorder %s359, %s375
      %p377 = scmp.eq.s32.totalorder %s27, 0
      %p378 = por %p376, %p377
      %p379 = scmp.le.s32.totalorder 1, %s21
      %p380 = scmp.lt.s32.totalorder %s21, 5
      %p381 = pnand %p379, %p380
      %p382 = pneg %p381
      // Predicated region
      $region9: #{tpu_custom_call.1} parent=5 // pred_check
        _
      $region10: #{tpu_custom_call.1} parent=5 // pred_check_branch
        %384 = sbr.rel (%p381) target = $region12
      $region11: #{tpu_custom_call.1} parent=5 // pred_region
        %s385 = ssub.s32 %s21, 1
      $region12: #{tpu_custom_call.1} parent=5 // pred_fallthru
        _
      %p386 = scmp.lt.s32.totalorder %s21, 4
      // Predicated region
      $region13: #{tpu_custom_call.1} parent=5 // pred_check
        %p387 = pneg %p386
      $region14: #{tpu_custom_call.1} parent=5 // pred_check_branch
        %389 = sbr.rel (%p387) target = $region16
      $region15: #{tpu_custom_call.1} parent=5 // pred_region
        // Predicated region
        $region17: #{tpu_custom_call.1} parent=15 // pred_check
          %p390 = pneg %p53
        $region18: #{tpu_custom_call.1} parent=15 // pred_check_branch
          %392 = sbr.rel (%p390) target = $region20
        $region19: #{tpu_custom_call.1} parent=15 // pred_region
          %p393 = scmp.lt.s32.totalorder %s28, 1
          %s394 = scalar_select %p393, %s28, 1
          %s395 = smul.addr %s394, 8
          %s396 = scalar_lea.vmem %s0, %s395
        $region20: #{tpu_custom_call.1} parent=15 // pred_fallthru
          _
        // Predicated region
        $region21: #{tpu_custom_call.1} parent=15 // pred_check
          %p397 = pneg %p79
        $region22: #{tpu_custom_call.1} parent=15 // pred_check_branch
          %399 = sbr.rel (%p397) target = $region24
        $region23: #{tpu_custom_call.1} parent=15 // pred_region
          %p400 = scmp.lt.s32.totalorder %s29, 1
          %s401 = scalar_select %p400, %s29, 1
          %s402 = smul.addr %s401, 4
          %s403 = smul.addr %s402, 4
          %s404 = scalar_lea.vmem %s1, %s403
        $region24: #{tpu_custom_call.1} parent=15 // pred_fallthru
          _
        // Predicated region
        $region25: #{tpu_custom_call.1} parent=15 // pred_check
          %p405 = pneg %p105
        $region26: #{tpu_custom_call.1} parent=15 // pred_check_branch
          %407 = sbr.rel (%p405) target = $region28
        $region27: #{tpu_custom_call.1} parent=15 // pred_region
          %p408 = scmp.lt.s32.totalorder %s29, 1
          %s409 = scalar_select %p408, %s29, 1
          %s410 = scalar_lea.vmem %s2, %s409
        $region28: #{tpu_custom_call.1} parent=15 // pred_fallthru
          _
        // Predicated region
        $region29: #{tpu_custom_call.1} parent=15 // pred_check
          %p411 = pneg %p131
        $region30: #{tpu_custom_call.1} parent=15 // pred_check_branch
          %413 = sbr.rel (%p411) target = $region32
        $region31: #{tpu_custom_call.1} parent=15 // pred_region
          %p414 = scmp.lt.s32.totalorder %s29, 1
          %s415 = scalar_select %p414, %s29, 1
          %s416 = smul.addr %s415, 4
          %s417 = smul.addr %s416, 4
          %s418 = scalar_lea.vmem %s3, %s417
        $region32: #{tpu_custom_call.1} parent=15 // pred_fallthru
          _
        // Predicated region
        $region33: #{tpu_custom_call.1} parent=15 // pred_check
          %p419 = pneg %p157
        $region34: #{tpu_custom_call.1} parent=15 // pred_check_branch
          %421 = sbr.rel (%p419) target = $region36
        $region35: #{tpu_custom_call.1} parent=15 // pred_region
          %p422 = scmp.lt.s32.totalorder %s29, 1
          %s423 = scalar_select %p422, %s29, 1
          %s424 = smul.addr %s423, 4
          %s425 = smul.addr %s424, 4
          %s426 = scalar_lea.vmem %s4, %s425
        $region36: #{tpu_custom_call.1} parent=15 // pred_fallthru
          _
        // Predicated region
        $region37: #{tpu_custom_call.1} parent=15 // pred_check
          %p427 = pneg %p183
        $region38: #{tpu_custom_call.1} parent=15 // pred_check_branch
          %429 = sbr.rel (%p427) target = $region40
        $region39: #{tpu_custom_call.1} parent=15 // pred_region
          %p430 = scmp.lt.s32.totalorder %s29, 1
          %s431 = scalar_select %p430, %s29, 1
          %s432 = smul.addr %s431, 4
          %s433 = smul.addr %s432, 4
          %s434 = scalar_lea.vmem %s5, %s433
        $region40: #{tpu_custom_call.1} parent=15 // pred_fallthru
          _
        // Predicated region
        $region41: #{tpu_custom_call.1} parent=15 // pred_check
          %p435 = pneg %p209
        $region42: #{tpu_custom_call.1} parent=15 // pred_check_branch
          %437 = sbr.rel (%p435) target = $region44
        $region43: #{tpu_custom_call.1} parent=15 // pred_region
          %p438 = scmp.lt.s32.totalorder %s29, 1
          %s439 = scalar_select %p438, %s29, 1
          %s440 = scalar_lea.vmem %s6, %s439
        $region44: #{tpu_custom_call.1} parent=15 // pred_fallthru
          _
        // Predicated region
        $region45: #{tpu_custom_call.1} parent=15 // pred_check
          %p441 = pneg %p235
        $region46: #{tpu_custom_call.1} parent=15 // pred_check_branch
          %443 = sbr.rel (%p441) target = $region48
        $region47: #{tpu_custom_call.1} parent=15 // pred_region
          %p444 = scmp.lt.s32.totalorder %s29, 1
          %s445 = scalar_select %p444, %s29, 1
          %s446 = smul.addr %s445, 4
          %s447 = smul.addr %s446, 4
          %s448 = scalar_lea.vmem %s7, %s447
        $region48: #{tpu_custom_call.1} parent=15 // pred_fallthru
          _
        // Predicated region
        $region49: #{tpu_custom_call.1} parent=15 // pred_check
          %p449 = pneg %p261
        $region50: #{tpu_custom_call.1} parent=15 // pred_check_branch
          %451 = sbr.rel (%p449) target = $region52
        $region51: #{tpu_custom_call.1} parent=15 // pred_region
          %p452 = scmp.lt.s32.totalorder %s29, 1
          %s453 = scalar_select %p452, %s29, 1
          %s454 = smul.addr %s453, 64
          %s455 = smul.addr %s454, 4
          %s456 = scalar_lea.vmem %s8, %s455
        $region52: #{tpu_custom_call.1} parent=15 // pred_fallthru
          _
        // Predicated region
        $region53: #{tpu_custom_call.1} parent=15 // pred_check
          %p457 = pneg %p287
        $region54: #{tpu_custom_call.1} parent=15 // pred_check_branch
          %459 = sbr.rel (%p457) target = $region56
        $region55: #{tpu_custom_call.1} parent=15 // pred_region
          %p460 = scmp.lt.s32.totalorder %s29, 1
          %s461 = scalar_select %p460, %s29, 1
          %s462 = smul.addr %s461, 16
          %s463 = scalar_lea.vmem %s9, %s462
        $region56: #{tpu_custom_call.1} parent=15 // pred_fallthru
          _
        // Predicated region
        $region57: #{tpu_custom_call.1} parent=15 // pred_check
          %p464 = pneg %p313
        $region58: #{tpu_custom_call.1} parent=15 // pred_check_branch
          %466 = sbr.rel (%p464) target = $region60
        $region59: #{tpu_custom_call.1} parent=15 // pred_region
          %p467 = scmp.lt.s32.totalorder %s29, 1
          %s468 = scalar_select %p467, %s29, 1
          %s469 = smul.addr %s468, 256
          %s470 = smul.addr %s469, 4
          %s471 = scalar_lea.vmem %s10, %s470
        $region60: #{tpu_custom_call.1} parent=15 // pred_fallthru
          _
        // Predicated region
        $region61: #{tpu_custom_call.1} parent=15 // pred_check
          %p472 = pneg %p339
        $region62: #{tpu_custom_call.1} parent=15 // pred_check_branch
          %474 = sbr.rel (%p472) target = $region64
        $region63: #{tpu_custom_call.1} parent=15 // pred_region
          %p475 = scmp.lt.s32.totalorder %s29, 1
          %s476 = scalar_select %p475, %s29, 1
          %s477 = smul.addr %s476, 2
          %s478 = smul.addr %s477, 8
          %s479 = scalar_lea.vmem %s11, %s478
        $region64: #{tpu_custom_call.1} parent=15 // pred_fallthru
          _
      $region16: #{tpu_custom_call.1} parent=5 // pred_fallthru
        _
      %p480 = scmp.le.s32.totalorder 1, %s21
      %p481 = scmp.lt.s32.totalorder %s21, 5
      %p482 = pnand %p480, %p481
      %p483 = pneg %p482
      // Predicated region
      $region65: #{tpu_custom_call.1} parent=5 // pred_check
        _
      $region66: #{tpu_custom_call.1} parent=5 // pred_check_branch
        %485 = sbr.rel (%p482) target = $region68
      $region67: #{tpu_custom_call.1} parent=5 // pred_region
        %s486 = ssub.s32 %s21, 1
        %p487 = scmp.lt.s32.totalorder %s30, 1
        %s488 = scalar_select %p487, %s30, 1
        %s489 = smul.addr %s488, 8
        %s490 = scalar_lea.vmem %s0, %s489
        %p491 = pneg %p59
        %p492 = pneg %p56
        %p493 = scmp.lt.s32.totalorder %s31, 1
        %s494 = scalar_select %p493, %s31, 1
        %s495 = smul.addr %s494, 4
        %s496 = smul.addr %s495, 4
        %s497 = scalar_lea.vmem %s1, %s496
        %p498 = pneg %p85
        %p499 = pneg %p82
        %p500 = scmp.lt.s32.totalorder %s31, 1
        %s501 = scalar_select %p500, %s31, 1
        %s502 = scalar_lea.vmem %s2, %s501
        %p503 = pneg %p111
        %p504 = pneg %p108
        %p505 = scmp.lt.s32.totalorder %s31, 1
        %s506 = scalar_select %p505, %s31, 1
        %s507 = smul.addr %s506, 4
        %s508 = smul.addr %s507, 4
        %s509 = scalar_lea.vmem %s3, %s508
        %p510 = pneg %p137
        %p511 = pneg %p134
        %p512 = scmp.lt.s32.totalorder %s31, 1
        %s513 = scalar_select %p512, %s31, 1
        %s514 = smul.addr %s513, 4
        %s515 = smul.addr %s514, 4
        %s516 = scalar_lea.vmem %s4, %s515
        %p517 = pneg %p163
        %p518 = pneg %p160
        %p519 = scmp.lt.s32.totalorder %s31, 1
        %s520 = scalar_select %p519, %s31, 1
        %s521 = smul.addr %s520, 4
        %s522 = smul.addr %s521, 4
        %s523 = scalar_lea.vmem %s5, %s522
        %p524 = pneg %p189
        %p525 = pneg %p186
        %p526 = scmp.lt.s32.totalorder %s31, 1
        %s527 = scalar_select %p526, %s31, 1
        %s528 = scalar_lea.vmem %s6, %s527
        %p529 = pneg %p215
        %p530 = pneg %p212
        %p531 = scmp.lt.s32.totalorder %s31, 1
        %s532 = scalar_select %p531, %s31, 1
        %s533 = smul.addr %s532, 4
        %s534 = smul.addr %s533, 4
        %s535 = scalar_lea.vmem %s7, %s534
        %p536 = pneg %p241
        %p537 = pneg %p238
        %p538 = scmp.lt.s32.totalorder %s31, 1
        %s539 = scalar_select %p538, %s31, 1
        %s540 = smul.addr %s539, 64
        %s541 = smul.addr %s540, 4
        %s542 = scalar_lea.vmem %s8, %s541
        %p543 = pneg %p267
        %p544 = pneg %p264
        %p545 = scmp.lt.s32.totalorder %s31, 1
        %s546 = scalar_select %p545, %s31, 1
        %s547 = smul.addr %s546, 16
        %s548 = scalar_lea.vmem %s9, %s547
        %p549 = pneg %p293
        %p550 = pneg %p290
        %p551 = scmp.lt.s32.totalorder %s31, 1
        %s552 = scalar_select %p551, %s31, 1
        %s553 = smul.addr %s552, 256
        %s554 = smul.addr %s553, 4
        %s555 = scalar_lea.vmem %s10, %s554
        %p556 = pneg %p319
        %p557 = pneg %p316
        %p558 = scmp.lt.s32.totalorder %s31, 1
        %s559 = scalar_select %p558, %s31, 1
        %s560 = smul.addr %s559, 2
        %s561 = smul.addr %s560, 8
        %s562 = scalar_lea.vmem %s11, %s561
        %p563 = pneg %p345
        %p564 = pneg %p342
        %p565 = pneg %p371
        %p566 = pneg %p368
        %s567 = sand.u32 %s358, 1
        %s568 = scalar_lea.sflag [#allocation3], %s567
        %s569 = sand.u32 %s358, 1
        %s570 = smul.addr %s569, 8
        %s571 = scalar_lea.vmem [#allocation2], %s570
        %p572 = scmp.lt.s32.totalorder %s30, 1
        %s573 = scalar_select %p572, %s30, 1
        %s574 = smul.addr %s573, 8
        %s575 = scalar_lea.vmem %s0, %s574
        %p576 = scmp.lt.s32.totalorder %s31, 1
        %s577 = scalar_select %p576, %s31, 1
        %s578 = smul.addr %s577, 4
        %s579 = smul.addr %s578, 4
        %s580 = scalar_lea.vmem %s1, %s579
        %p581 = scmp.lt.s32.totalorder %s31, 1
        %s582 = scalar_select %p581, %s31, 1
        %s583 = scalar_lea.vmem %s2, %s582
        %p584 = scmp.lt.s32.totalorder %s31, 1
        %s585 = scalar_select %p584, %s31, 1
        %s586 = smul.addr %s585, 4
        %s587 = smul.addr %s586, 4
        %s588 = scalar_lea.vmem %s3, %s587
        %p589 = scmp.lt.s32.totalorder %s31, 1
        %s590 = scalar_select %p589, %s31, 1
        %s591 = smul.addr %s590, 4
        %s592 = smul.addr %s591, 4
        %s593 = scalar_lea.vmem %s4, %s592
        %p594 = scmp.lt.s32.totalorder %s31, 1
        %s595 = scalar_select %p594, %s31, 1
        %s596 = smul.addr %s595, 4
        %s597 = smul.addr %s596, 4
        %s598 = scalar_lea.vmem %s5, %s597
        %p599 = scmp.lt.s32.totalorder %s31, 1
        %s600 = scalar_select %p599, %s31, 1
        %s601 = scalar_lea.vmem %s6, %s600
        %p602 = scmp.lt.s32.totalorder %s31, 1
        %s603 = scalar_select %p602, %s31, 1
        %s604 = smul.addr %s603, 4
        %s605 = smul.addr %s604, 4
        %s606 = scalar_lea.vmem %s7, %s605
        %p607 = scmp.lt.s32.totalorder %s31, 1
        %s608 = scalar_select %p607, %s31, 1
        %s609 = smul.addr %s608, 64
        %s610 = smul.addr %s609, 4
        %s611 = scalar_lea.vmem %s8, %s610
        %p612 = scmp.lt.s32.totalorder %s31, 1
        %s613 = scalar_select %p612, %s31, 1
        %s614 = smul.addr %s613, 16
        %s615 = scalar_lea.vmem %s9, %s614
        %p616 = scmp.lt.s32.totalorder %s31, 1
        %s617 = scalar_select %p616, %s31, 1
        %s618 = smul.addr %s617, 256
        %s619 = smul.addr %s618, 4
        %s620 = scalar_lea.vmem %s10, %s619
        %p621 = scmp.lt.s32.totalorder %s31, 1
        %s622 = scalar_select %p621, %s31, 1
        %s623 = smul.addr %s622, 2
        %s624 = smul.addr %s623, 8
        %s625 = scalar_lea.vmem %s11, %s624
        %p627 = scmp.eq.s32.totalorder %s31, 0
        // Predicated region
        $region69: #{tpu_custom_call.1} parent=67 // pred_check
          %p628 = pneg %p627
        $region70: #{tpu_custom_call.1} parent=67 // pred_check_branch
          %630 = sbr.rel (%p628) target = $region72
        $region71: #{tpu_custom_call.1} parent=67 // pred_region
          %v631 = vld [vmem:[%s575] sm:$0xff]
          %vm632 = vcmask 261120
          %633 = vst.msk [vmem:[%s571] sm:$0xff] %vm632, %v631
        $region72: #{tpu_custom_call.1} parent=67 // pred_fallthru
          _
        %v634 = vld [vmem:[%s625] sm:$0xff]
        %v635 = vld [vmem:[%s625 + $0x8] sm:$0xff]
        %v636 = vld [vmem:[%s571] sm:$0xff]
        %v637 = vpack.c.bf16 %v636, %v636
        %v638 = vld [vmem:[%s580] sm:$0xf]
        %v639 = vld [vmem:[%s580 + $0x4] sm:$0xf]
        %v640 = vld [vmem:[%s580 + $0x8] sm:$0xf]
        %v641 = vld [vmem:[%s580 + $0xc] sm:$0xf]
        %v642 = vld [vmem:[%s583] sm:$0x1]
        %v644 = vperm.slane %v642, 0
        %v650 = vunpack.c.l.b16 %v638
        %v651 = vunpack.c.l.b16 %v639
        %v652 = vunpack.c.l.b16 %v640
        %v653 = vunpack.c.l.b16 %v641
        %v654 = vpack.c.b16 %v651, %v650
        %v655 = vpack.c.b16 %v653, %v652
        %vm658 = vcmask 261120
        %v660 = vsel %vm658, %v637, 0
        %662 = vmatpush.bf16.msra.mxu0 0
        %663 = vmatpush.bf16.msra.mxu0 0
        %664 = vmatpush.bf16.msra.mxu0 0
        %665 = vmatpush.bf16.msra.mxu0 0
        %666 = vmatpush.bf16.msra.mxu0 0
        %667 = vmatpush.bf16.msra.mxu0 0
        %668 = vmatpush.bf16.msra.mxu0 %v655
        %669 = vmatpush.bf16.msra.mxu0 %v654
        %670 = vmatmul.bf16.gmra.mxu0 %v660
        %v671 = vpop.f32.mrf.mxu0
        %v672 = vadd.f32 %v644, %v671
        %v673 = vpop.f32.mrf.mxu0
        %674 = vdwg.mxu0
        %v675 = vld [vmem:[%s588] sm:$0xf]
        %v676 = vld [vmem:[%s588 + $0x4] sm:$0xf]
        %v677 = vld [vmem:[%s588 + $0x8] sm:$0xf]
        %v678 = vld [vmem:[%s588 + $0xc] sm:$0xf]
        %v679 = vpack.c.bf16 %v672, %v672
        %681 = vrot.lane.b32.xlu0 %v679, 120
        %v682 = vpop.permute.xlu0 %681
        %683 = vrot.lane.b32.xlu0 %v679, 112
        %v684 = vpop.permute.xlu0 %683
        %685 = vrot.lane.b32.xlu0 %v679, 104
        %v686 = vpop.permute.xlu0 %685
        %v687 = vunpack.c.l.b16 %v679
        %v688 = vpack.c.b16 %v687, %v687
        %689 = vrot.lane.b32.xlu0 %v688, 96
        %v690 = vpop.permute.xlu0 %689
        %vm691 = vcmask 64512
        %v693 = vsel %vm691, %v679, 0
        %v696 = vsel %vm691, %v690, 0
        %698 = vmatpush.bf16.xpose.msra.mxu0 0
        %699 = vmatpush.bf16.xpose.msra.mxu0 0
        %700 = vmatpush.bf16.xpose.msra.mxu0 0
        %701 = vmatpush.bf16.xpose.msra.mxu0 0
        %702 = vmatpush.bf16.xpose.msra.mxu0 0
        %703 = vmatpush.bf16.xpose.msra.mxu0 0
        %704 = vmatpush.bf16.xpose.msra.mxu0 0
        %705 = vmatpush.bf16.xpose.msra.mxu0 %v696
        %706 = vmatmul.bf16.gmra.mxu0 %v693
        %v707 = vpop.f32.mrf.mxu0
        %v708 = vadd.f32 0.0, %v707
        %v709 = vpop.f32.mrf.mxu0
        %710 = vdwg.mxu0
        %v711 = vunpack.c.l.b16 %v682
        %v712 = vpack.c.b16 %v711, %v711
        %713 = vrot.lane.b32.xlu0 %v712, 96
        %v714 = vpop.permute.xlu0 %713
        %v716 = vsel %vm691, %v682, 0
        %v719 = vsel %vm691, %v714, 0
        %721 = vmatpush.bf16.xpose.msra.mxu0 0
        %722 = vmatpush.bf16.xpose.msra.mxu0 0
        %723 = vmatpush.bf16.xpose.msra.mxu0 0
        %724 = vmatpush.bf16.xpose.msra.mxu0 0
        %725 = vmatpush.bf16.xpose.msra.mxu0 0
        %726 = vmatpush.bf16.xpose.msra.mxu0 0
        %727 = vmatpush.bf16.xpose.msra.mxu0 0
        %728 = vmatpush.bf16.xpose.msra.mxu0 %v719
        %729 = vmatmul.bf16.gmra.mxu0 %v716
        %v730 = vpop.f32.mrf.mxu0
        %v731 = vadd.f32 0.0, %v730
        %v732 = vpop.f32.mrf.mxu0
        %733 = vdwg.mxu0
        %v734 = vunpack.c.l.b16 %v684
        %v735 = vpack.c.b16 %v734, %v734
        %736 = vrot.lane.b32.xlu0 %v735, 96
        %v737 = vpop.permute.xlu0 %736
        %v739 = vsel %vm691, %v684, 0
        %v742 = vsel %vm691, %v737, 0
        %744 = vmatpush.bf16.xpose.msra.mxu0 0
        %745 = vmatpush.bf16.xpose.msra.mxu0 0
        %746 = vmatpush.bf16.xpose.msra.mxu0 0
        %747 = vmatpush.bf16.xpose.msra.mxu0 0
        %748 = vmatpush.bf16.xpose.msra.mxu0 0
        %749 = vmatpush.bf16.xpose.msra.mxu0 0
        %750 = vmatpush.bf16.xpose.msra.mxu0 0
        %751 = vmatpush.bf16.xpose.msra.mxu0 %v742
        %752 = vmatmul.bf16.gmra.mxu0 %v739
        %v753 = vpop.f32.mrf.mxu0
        %v754 = vadd.f32 0.0, %v753
        %v755 = vpop.f32.mrf.mxu0
        %756 = vdwg.mxu0
        %v757 = vunpack.c.l.b16 %v686
        %v758 = vpack.c.b16 %v757, %v757
        %759 = vrot.lane.b32.xlu0 %v758, 96
        %v760 = vpop.permute.xlu0 %759
        %v762 = vsel %vm691, %v686, 0
        %v765 = vsel %vm691, %v760, 0
        %767 = vmatpush.bf16.xpose.msra.mxu0 0
        %768 = vmatpush.bf16.xpose.msra.mxu0 0
        %769 = vmatpush.bf16.xpose.msra.mxu0 0
        %770 = vmatpush.bf16.xpose.msra.mxu0 0
        %771 = vmatpush.bf16.xpose.msra.mxu0 0
        %772 = vmatpush.bf16.xpose.msra.mxu0 0
        %773 = vmatpush.bf16.xpose.msra.mxu0 0
        %774 = vmatpush.bf16.xpose.msra.mxu0 %v765
        %775 = vmatmul.bf16.gmra.mxu0 %v762
        %v776 = vpop.f32.mrf.mxu0
        %v777 = vadd.f32 0.0, %v776
        %v778 = vpop.f32.mrf.mxu0
        %779 = vdwg.mxu0
        %v780 = vsel %vm691, %v708, -inf
        %781 = vmax.xlane.f32.xlu0 %v780
        %v782 = vpop.xlane.xlu0 %781
        %v783 = vsel %vm691, %v731, -inf
        %784 = vmax.xlane.f32.xlu0 %v783
        %v785 = vpop.xlane.xlu0 %784
        %v786 = vsel %vm691, %v754, -inf
        %787 = vmax.xlane.f32.xlu0 %v786
        %v788 = vpop.xlane.xlu0 %787
        %v789 = vsel %vm691, %v777, -inf
        %790 = vmax.xlane.f32.xlu0 %v789
        %v791 = vpop.xlane.xlu0 %790
        %v792 = vsub.f32 %v708, %v782
        %v793 = vsub.f32 %v731, %v785
        %v794 = vsub.f32 %v754, %v788
        %v795 = vsub.f32 %v777, %v791
        %v796 = vmul.f32 %v792, 1.442695
        %v797 = vpow.pop %v796
        %v798 = vmul.f32 %v793, 1.442695
        %v799 = vpow.pop %v798
        %v800 = vmul.f32 %v794, 1.442695
        %v801 = vpow.pop %v800
        %v802 = vmul.f32 %v795, 1.442695
        %v803 = vpow.pop %v802
        %v804 = vsel %vm691, %v797, 0.0
        %805 = vadd.xlane.f32.xlu0 %v804
        %v806 = vpop.xlane.xlu0 %805
        %v807 = vsel %vm691, %v799, 0.0
        %808 = vadd.xlane.f32.xlu0 %v807
        %v809 = vpop.xlane.xlu0 %808
        %v810 = vsel %vm691, %v801, 0.0
        %811 = vadd.xlane.f32.xlu0 %v810
        %v812 = vpop.xlane.xlu0 %811
        %v813 = vsel %vm691, %v803, 0.0
        %814 = vadd.xlane.f32.xlu0 %v813
        %v815 = vpop.xlane.xlu0 %814
        %v816 = vpack.c.bf16 %v797, %v797
        %v817 = vpack.c.bf16 %v799, %v799
        %v818 = vpack.c.bf16 %v801, %v801
        %v819 = vpack.c.bf16 %v803, %v803
        %820 = vrot.lane.b32.xlu0 %v688, 64
        %v821 = vpop.permute.xlu0 %820
        %v823 = vsel %vm691, %v816, 0
        %vm825 = vcmask 1043456
        %v827 = vsel %vm825, %v821, 0
        %829 = vmatpush.bf16.msra.mxu0 0
        %830 = vmatpush.bf16.msra.mxu0 0
        %831 = vmatpush.bf16.msra.mxu0 0
        %832 = vmatpush.bf16.msra.mxu0 0
        %833 = vmatpush.bf16.msra.mxu0 0
        %834 = vmatpush.bf16.msra.mxu0 0
        %835 = vmatpush.bf16.msra.mxu0 0
        %836 = vmatpush.bf16.msra.mxu0 %v827
        %837 = vmatmul.bf16.gmra.mxu0 %v823
        %v838 = vpop.f32.mrf.mxu0
        %v839 = vadd.f32 0.0, %v838
        %v840 = vpop.f32.mrf.mxu0
        %841 = vdwg.mxu0
        %842 = vrot.lane.b32.xlu0 %v712, 64
        %v843 = vpop.permute.xlu0 %842
        %v845 = vsel %vm691, %v817, 0
        %v848 = vsel %vm825, %v843, 0
        %850 = vmatpush.bf16.msra.mxu0 0
        %851 = vmatpush.bf16.msra.mxu0 0
        %852 = vmatpush.bf16.msra.mxu0 0
        %853 = vmatpush.bf16.msra.mxu0 0
        %854 = vmatpush.bf16.msra.mxu0 0
        %855 = vmatpush.bf16.msra.mxu0 0
        %856 = vmatpush.bf16.msra.mxu0 0
        %857 = vmatpush.bf16.msra.mxu0 %v848
        %858 = vmatmul.bf16.gmra.mxu0 %v845
        %v859 = vpop.f32.mrf.mxu0
        %v860 = vadd.f32 0.0, %v859
        %v861 = vpop.f32.mrf.mxu0
        %862 = vdwg.mxu0
        %863 = vrot.lane.b32.xlu0 %v735, 64
        %v864 = vpop.permute.xlu0 %863
        %v866 = vsel %vm691, %v818, 0
        %v869 = vsel %vm825, %v864, 0
        %871 = vmatpush.bf16.msra.mxu0 0
        %872 = vmatpush.bf16.msra.mxu0 0
        %873 = vmatpush.bf16.msra.mxu0 0
        %874 = vmatpush.bf16.msra.mxu0 0
        %875 = vmatpush.bf16.msra.mxu0 0
        %876 = vmatpush.bf16.msra.mxu0 0
        %877 = vmatpush.bf16.msra.mxu0 0
        %878 = vmatpush.bf16.msra.mxu0 %v869
        %879 = vmatmul.bf16.gmra.mxu0 %v866
        %v880 = vpop.f32.mrf.mxu0
        %v881 = vadd.f32 0.0, %v880
        %v882 = vpop.f32.mrf.mxu0
        %883 = vdwg.mxu0
        %884 = vrot.lane.b32.xlu0 %v758, 64
        %v885 = vpop.permute.xlu0 %884
        %v887 = vsel %vm691, %v819, 0
        %v890 = vsel %vm825, %v885, 0
        %892 = vmatpush.bf16.msra.mxu0 0
        %893 = vmatpush.bf16.msra.mxu0 0
        %894 = vmatpush.bf16.msra.mxu0 0
        %895 = vmatpush.bf16.msra.mxu0 0
        %896 = vmatpush.bf16.msra.mxu0 0
        %897 = vmatpush.bf16.msra.mxu0 0
        %898 = vmatpush.bf16.msra.mxu0 0
        %899 = vmatpush.bf16.msra.mxu0 %v890
        %900 = vmatmul.bf16.gmra.mxu0 %v887
        %v901 = vpop.f32.mrf.mxu0
        %v902 = vadd.f32 0.0, %v901
        %v903 = vpop.f32.mrf.mxu0
        %904 = vdwg.mxu0
        %v905 = vrcp.pop %v806
        %v906 = vmul.f32 %v806, %v905
        %v907 = vsub.f32 1.0, %v906
        %v908 = vmul.f32 %v905, %v907
        %v909 = vadd.f32 %v905, %v908
        %vm910 = vweird.f32 %v806
        %vm911 = vweird.f32 %v905
        %vm912 = vmor %vm910, %vm911
        %v913 = vsel %vm912, %v905, %v909
        %v914 = vand.u32 2147483647, %v806
        %vm915 = vcmp.eq.f32.partialorder %v914, 8.507059e+37
        %v916 = vand.u32 %v806, 2147483648
        %v917 = vor.u32 1.1754944e-38, %v916
        %v918 = vsel %vm915, %v917, %v913
        %v919 = vrcp.pop %v809
        %v920 = vmul.f32 %v809, %v919
        %v921 = vsub.f32 1.0, %v920
        %v922 = vmul.f32 %v919, %v921
        %v923 = vadd.f32 %v919, %v922
        %vm924 = vweird.f32 %v809
        %vm925 = vweird.f32 %v919
        %vm926 = vmor %vm924, %vm925
        %v927 = vsel %vm926, %v919, %v923
        %v928 = vand.u32 2147483647, %v809
        %vm929 = vcmp.eq.f32.partialorder %v928, 8.507059e+37
        %v930 = vand.u32 %v809, 2147483648
        %v931 = vor.u32 1.1754944e-38, %v930
        %v932 = vsel %vm929, %v931, %v927
        %v933 = vrcp.pop %v812
        %v934 = vmul.f32 %v812, %v933
        %v935 = vsub.f32 1.0, %v934
        %v936 = vmul.f32 %v933, %v935
        %v937 = vadd.f32 %v933, %v936
        %vm938 = vweird.f32 %v812
        %vm939 = vweird.f32 %v933
        %vm940 = vmor %vm938, %vm939
        %v941 = vsel %vm940, %v933, %v937
        %v942 = vand.u32 2147483647, %v812
        %vm943 = vcmp.eq.f32.partialorder %v942, 8.507059e+37
        %v944 = vand.u32 %v812, 2147483648
        %v945 = vor.u32 1.1754944e-38, %v944
        %v946 = vsel %vm943, %v945, %v941
        %v947 = vrcp.pop %v815
        %v948 = vmul.f32 %v815, %v947
        %v949 = vsub.f32 1.0, %v948
        %v950 = vmul.f32 %v947, %v949
        %v951 = vadd.f32 %v947, %v950
        %vm952 = vweird.f32 %v815
        %vm953 = vweird.f32 %v947
        %vm954 = vmor %vm952, %vm953
        %v955 = vsel %vm954, %v947, %v951
        %v956 = vand.u32 2147483647, %v815
        %vm957 = vcmp.eq.f32.partialorder %v956, 8.507059e+37
        %v958 = vand.u32 %v815, 2147483648
        %v959 = vor.u32 1.1754944e-38, %v958
        %v960 = vsel %vm957, %v959, %v955
        %v961 = vmul.f32 %v839, %v918
        %v962 = vmul.f32 %v860, %v932
        %v963 = vmul.f32 %v881, %v946
        %v964 = vmul.f32 %v902, %v960
        %966 = vrot.lane.b32.xlu0 %v962, 8
        %v967 = vpop.permute.xlu0 %966
        %970 = vrot.lane.b32.xlu0 %v963, 16
        %v971 = vpop.permute.xlu0 %970
        %974 = vrot.lane.b32.xlu0 %v964, 24
        %v975 = vpop.permute.xlu0 %974
        %v977 = vsel %vm691, %v961, %v967
        %vm978 = vcmask 130048
        %v979 = vsel %vm978, %v977, %v971
        %vm980 = vcmask 195584
        %v981 = vsel %vm980, %v979, %v975
        %v982 = vpack.c.bf16 %v981, %v981
        %v983 = vperm.slane %v634, 1
        %v988 = vunpack.c.l.b16 %v675
        %v989 = vunpack.c.l.b16 %v676
        %v990 = vunpack.c.l.b16 %v677
        %v991 = vunpack.c.l.b16 %v678
        %v992 = vpack.c.b16 %v989, %v988
        %v993 = vpack.c.b16 %v991, %v990
        %v997 = vsel %vm658, %v982, 0
        %999 = vmatpush.bf16.msra.mxu0 0
        %1000 = vmatpush.bf16.msra.mxu0 0
        %1001 = vmatpush.bf16.msra.mxu0 0
        %1002 = vmatpush.bf16.msra.mxu0 0
        %1003 = vmatpush.bf16.msra.mxu0 0
        %1004 = vmatpush.bf16.msra.mxu0 0
        %1005 = vmatpush.bf16.msra.mxu0 %v993
        %1006 = vmatpush.bf16.msra.mxu0 %v992
        %1007 = vmatmul.bf16.gmra.mxu0 %v997
        %v1008 = vpop.f32.mrf.mxu0
        %v1009 = vadd.f32 %v983, %v1008
        %v1010 = vpop.f32.mrf.mxu0
        %1011 = vdwg.mxu0
        %v1012 = vadd.f32 %v636, %v1009
        %v1013 = vsel %vm658, %v1012, 0.0
        %1014 = vadd.xlane.f32.xlu0 %v1013
        %v1015 = vpop.xlane.xlu0 %1014
        %v1016 = vrcp.pop 32.0
        %v1017 = vmul.f32 32.0, %v1016
        %v1018 = vsub.f32 1.0, %v1017
        %v1019 = vmul.f32 %v1016, %v1018
        %v1020 = vadd.f32 %v1016, %v1019
        %vm1021 = vweird.f32 %v1016
        %v1022 = vsel %vm1021, %v1016, %v1020
        %v1023 = vmul.f32 %v1015, %v1022
        %v1024 = vsub.f32 %v1012, %v1023
        %v1025 = vmul.f32 %v1024, %v1024
        %v1026 = vsel %vm658, %v1025, 0.0
        %1027 = vadd.xlane.f32.xlu0 %v1026
        %v1028 = vpop.xlane.xlu0 %1027
        %v1029 = vmul.f32 %v1028, %v1022
        %v1030 = vadd.f32 %v1029, 1e-05
        %v1031 = vrsqrt.pop %v1030
        %v1032 = vmul.f32 %v1031, %v1030
        %v1033 = vmul.f32 %v1032, %v1031
        %v1034 = vmul.f32 0.5, %v1033
        %v1035 = vsub.f32 1.5, %v1034
        %v1036 = vmul.f32 %v1031, %v1035
        %vm1037 = vweird.f32 %v1030
        %vm1038 = vweird.f32 %v1031
        %vm1039 = vmor %vm1037, %vm1038
        %v1040 = vsel %vm1039, %v1031, %v1036
        %v1041 = vmul.f32 %v1024, %v1040
        %v1042 = vperm.slane %v634, 4
        %v1043 = vmul.f32 %v1041, %v1042
        %v1044 = vperm.slane %v634, 5
        %v1045 = vadd.f32 %v1043, %v1044
        %v1046 = vpack.c.bf16 %v1045, %v1045
        %v1047 = vld [vmem:[%s593] sm:$0xf]
        %v1048 = vld [vmem:[%s593 + $0x4] sm:$0xf]
        %v1049 = vld [vmem:[%s593 + $0x8] sm:$0xf]
        %v1050 = vld [vmem:[%s593 + $0xc] sm:$0xf]
        %v1051 = vperm.slane %v634, 0
        %v1056 = vunpack.c.l.b16 %v1047
        %v1057 = vunpack.c.l.b16 %v1048
        %v1058 = vunpack.c.l.b16 %v1049
        %v1059 = vunpack.c.l.b16 %v1050
        %v1060 = vpack.c.b16 %v1057, %v1056
        %v1061 = vpack.c.b16 %v1059, %v1058
        %v1065 = vsel %vm658, %v1046, 0
        %1067 = vmatpush.bf16.msra.mxu0 0
        %1068 = vmatpush.bf16.msra.mxu0 0
        %1069 = vmatpush.bf16.msra.mxu0 0
        %1070 = vmatpush.bf16.msra.mxu0 0
        %1071 = vmatpush.bf16.msra.mxu0 0
        %1072 = vmatpush.bf16.msra.mxu0 0
        %1073 = vmatpush.bf16.msra.mxu0 %v1061
        %1074 = vmatpush.bf16.msra.mxu0 %v1060
        %1075 = vmatmul.bf16.gmra.mxu0 %v1065
        %v1076 = vpop.f32.mrf.mxu0
        %v1077 = vadd.f32 %v1051, %v1076
        %v1078 = vpop.f32.mrf.mxu0
        %1079 = vdwg.mxu0
        %v1080 = vld [vmem:[%s598] sm:$0xf]
        %v1081 = vld [vmem:[%s598 + $0x4] sm:$0xf]
        %v1082 = vld [vmem:[%s598 + $0x8] sm:$0xf]
        %v1083 = vld [vmem:[%s598 + $0xc] sm:$0xf]
        %v1084 = vld [vmem:[%s601] sm:$0x1]
        %v1086 = vperm.slane %v1084, 0
        %v1092 = vunpack.c.l.b16 %v1080
        %v1093 = vunpack.c.l.b16 %v1081
        %v1094 = vunpack.c.l.b16 %v1082
        %v1095 = vunpack.c.l.b16 %v1083
        %v1096 = vpack.c.b16 %v1093, %v1092
        %v1097 = vpack.c.b16 %v1095, %v1094
        %1100 = vmatpush.bf16.msra.mxu0 0
        %1101 = vmatpush.bf16.msra.mxu0 0
        %1102 = vmatpush.bf16.msra.mxu0 0
        %1103 = vmatpush.bf16.msra.mxu0 0
        %1104 = vmatpush.bf16.msra.mxu0 0
        %1105 = vmatpush.bf16.msra.mxu0 0
        %1106 = vmatpush.bf16.msra.mxu0 %v1097
        %1107 = vmatpush.bf16.msra.mxu0 %v1096
        %1108 = vmatmul.bf16.gmra.mxu0 %v660
        %v1109 = vpop.f32.mrf.mxu0
        %v1110 = vadd.f32 %v1086, %v1109
        %v1111 = vpop.f32.mrf.mxu0
        %1112 = vdwg.mxu0
        %v1113 = vld [vmem:[%s606] sm:$0xf]
        %v1114 = vld [vmem:[%s606 + $0x4] sm:$0xf]
        %v1115 = vld [vmem:[%s606 + $0x8] sm:$0xf]
        %v1116 = vld [vmem:[%s606 + $0xc] sm:$0xf]
        %v1117 = vpack.c.bf16 %v1077, %v1077
        %1119 = vrot.lane.b32.xlu0 %v1117, 120
        %v1120 = vpop.permute.xlu0 %1119
        %1121 = vrot.lane.b32.xlu0 %v1117, 112
        %v1122 = vpop.permute.xlu0 %1121
        %1123 = vrot.lane.b32.xlu0 %v1117, 104
        %v1124 = vpop.permute.xlu0 %1123
        %v1125 = vpack.c.bf16 %v1110, %v1110
        %1127 = vrot.lane.b32.xlu0 %v1125, 120
        %v1128 = vpop.permute.xlu0 %1127
        %1129 = vrot.lane.b32.xlu0 %v1125, 112
        %v1130 = vpop.permute.xlu0 %1129
        %1131 = vrot.lane.b32.xlu0 %v1125, 104
        %v1132 = vpop.permute.xlu0 %1131
        %v1134 = vsel %vm691, %v1117, 0
        %v1137 = vsel %vm691, %v1125, 0
        %1139 = vmatpush.bf16.xpose.msra.mxu0 0
        %1140 = vmatpush.bf16.xpose.msra.mxu0 0
        %1141 = vmatpush.bf16.xpose.msra.mxu0 0
        %1142 = vmatpush.bf16.xpose.msra.mxu0 0
        %1143 = vmatpush.bf16.xpose.msra.mxu0 0
        %1144 = vmatpush.bf16.xpose.msra.mxu0 0
        %1145 = vmatpush.bf16.xpose.msra.mxu0 0
        %1146 = vmatpush.bf16.xpose.msra.mxu0 %v1137
        %1147 = vmatmul.bf16.gmra.mxu0 %v1134
        %v1148 = vpop.f32.mrf.mxu0
        %v1149 = vadd.f32 0.0, %v1148
        %v1150 = vpop.f32.mrf.mxu0
        %1151 = vdwg.mxu0
        %v1153 = vsel %vm691, %v1120, 0
        %v1156 = vsel %vm691, %v1128, 0
        %1158 = vmatpush.bf16.xpose.msra.mxu0 0
        %1159 = vmatpush.bf16.xpose.msra.mxu0 0
        %1160 = vmatpush.bf16.xpose.msra.mxu0 0
        %1161 = vmatpush.bf16.xpose.msra.mxu0 0
        %1162 = vmatpush.bf16.xpose.msra.mxu0 0
        %1163 = vmatpush.bf16.xpose.msra.mxu0 0
        %1164 = vmatpush.bf16.xpose.msra.mxu0 0
        %1165 = vmatpush.bf16.xpose.msra.mxu0 %v1156
        %1166 = vmatmul.bf16.gmra.mxu0 %v1153
        %v1167 = vpop.f32.mrf.mxu0
        %v1168 = vadd.f32 0.0, %v1167
        %v1169 = vpop.f32.mrf.mxu0
        %1170 = vdwg.mxu0
        %v1172 = vsel %vm691, %v1122, 0
        %v1175 = vsel %vm691, %v1130, 0
        %1177 = vmatpush.bf16.xpose.msra.mxu0 0
        %1178 = vmatpush.bf16.xpose.msra.mxu0 0
        %1179 = vmatpush.bf16.xpose.msra.mxu0 0
        %1180 = vmatpush.bf16.xpose.msra.mxu0 0
        %1181 = vmatpush.bf16.xpose.msra.mxu0 0
        %1182 = vmatpush.bf16.xpose.msra.mxu0 0
        %1183 = vmatpush.bf16.xpose.msra.mxu0 0
        %1184 = vmatpush.bf16.xpose.msra.mxu0 %v1175
        %1185 = vmatmul.bf16.gmra.mxu0 %v1172
        %v1186 = vpop.f32.mrf.mxu0
        %v1187 = vadd.f32 0.0, %v1186
        %v1188 = vpop.f32.mrf.mxu0
        %1189 = vdwg.mxu0
        %v1191 = vsel %vm691, %v1124, 0
        %v1194 = vsel %vm691, %v1132, 0
        %1196 = vmatpush.bf16.xpose.msra.mxu0 0
        %1197 = vmatpush.bf16.xpose.msra.mxu0 0
        %1198 = vmatpush.bf16.xpose.msra.mxu0 0
        %1199 = vmatpush.bf16.xpose.msra.mxu0 0
        %1200 = vmatpush.bf16.xpose.msra.mxu0 0
        %1201 = vmatpush.bf16.xpose.msra.mxu0 0
        %1202 = vmatpush.bf16.xpose.msra.mxu0 0
        %1203 = vmatpush.bf16.xpose.msra.mxu0 %v1194
        %1204 = vmatmul.bf16.gmra.mxu0 %v1191
        %v1205 = vpop.f32.mrf.mxu0
        %v1206 = vadd.f32 0.0, %v1205
        %v1207 = vpop.f32.mrf.mxu0
        %1208 = vdwg.mxu0
        %v1209 = vsel %vm691, %v1149, -inf
        %1210 = vmax.xlane.f32.xlu0 %v1209
        %v1211 = vpop.xlane.xlu0 %1210
        %v1212 = vsel %vm691, %v1168, -inf
        %1213 = vmax.xlane.f32.xlu0 %v1212
        %v1214 = vpop.xlane.xlu0 %1213
        %v1215 = vsel %vm691, %v1187, -inf
        %1216 = vmax.xlane.f32.xlu0 %v1215
        %v1217 = vpop.xlane.xlu0 %1216
        %v1218 = vsel %vm691, %v1206, -inf
        %1219 = vmax.xlane.f32.xlu0 %v1218
        %v1220 = vpop.xlane.xlu0 %1219
        %v1221 = vsub.f32 %v1149, %v1211
        %v1222 = vsub.f32 %v1168, %v1214
        %v1223 = vsub.f32 %v1187, %v1217
        %v1224 = vsub.f32 %v1206, %v1220
        %v1225 = vmul.f32 %v1221, 1.442695
        %v1226 = vpow.pop %v1225
        %v1227 = vmul.f32 %v1222, 1.442695
        %v1228 = vpow.pop %v1227
        %v1229 = vmul.f32 %v1223, 1.442695
        %v1230 = vpow.pop %v1229
        %v1231 = vmul.f32 %v1224, 1.442695
        %v1232 = vpow.pop %v1231
        %v1233 = vsel %vm691, %v1226, 0.0
        %1234 = vadd.xlane.f32.xlu0 %v1233
        %v1235 = vpop.xlane.xlu0 %1234
        %v1236 = vsel %vm691, %v1228, 0.0
        %1237 = vadd.xlane.f32.xlu0 %v1236
        %v1238 = vpop.xlane.xlu0 %1237
        %v1239 = vsel %vm691, %v1230, 0.0
        %1240 = vadd.xlane.f32.xlu0 %v1239
        %v1241 = vpop.xlane.xlu0 %1240
        %v1242 = vsel %vm691, %v1232, 0.0
        %1243 = vadd.xlane.f32.xlu0 %v1242
        %v1244 = vpop.xlane.xlu0 %1243
        %v1245 = vpack.c.bf16 %v1226, %v1226
        %v1246 = vpack.c.bf16 %v1228, %v1228
        %v1247 = vpack.c.bf16 %v1230, %v1230
        %v1248 = vpack.c.bf16 %v1232, %v1232
        %v1249 = vunpack.c.l.b16 %v1125
        %v1250 = vpack.c.b16 %v1249, %v1249
        %1251 = vrot.lane.b32.xlu0 %v1250, 96
        %v1252 = vpop.permute.xlu0 %1251
        %v1254 = vsel %vm691, %v1245, 0
        %v1257 = vsel %vm825, %v1252, 0
        %1259 = vmatpush.bf16.msra.mxu0 0
        %1260 = vmatpush.bf16.msra.mxu0 0
        %1261 = vmatpush.bf16.msra.mxu0 0
        %1262 = vmatpush.bf16.msra.mxu0 0
        %1263 = vmatpush.bf16.msra.mxu0 0
        %1264 = vmatpush.bf16.msra.mxu0 0
        %1265 = vmatpush.bf16.msra.mxu0 0
        %1266 = vmatpush.bf16.msra.mxu0 %v1257
        %1267 = vmatmul.bf16.gmra.mxu0 %v1254
        %v1268 = vpop.f32.mrf.mxu0
        %v1269 = vadd.f32 0.0, %v1268
        %v1270 = vpop.f32.mrf.mxu0
        %1271 = vdwg.mxu0
        %v1272 = vunpack.c.l.b16 %v1128
        %v1273 = vpack.c.b16 %v1272, %v1272
        %1274 = vrot.lane.b32.xlu0 %v1273, 96
        %v1275 = vpop.permute.xlu0 %1274
        %v1277 = vsel %vm691, %v1246, 0
        %v1280 = vsel %vm825, %v1275, 0
        %1282 = vmatpush.bf16.msra.mxu0 0
        %1283 = vmatpush.bf16.msra.mxu0 0
        %1284 = vmatpush.bf16.msra.mxu0 0
        %1285 = vmatpush.bf16.msra.mxu0 0
        %1286 = vmatpush.bf16.msra.mxu0 0
        %1287 = vmatpush.bf16.msra.mxu0 0
        %1288 = vmatpush.bf16.msra.mxu0 0
        %1289 = vmatpush.bf16.msra.mxu0 %v1280
        %1290 = vmatmul.bf16.gmra.mxu0 %v1277
        %v1291 = vpop.f32.mrf.mxu0
        %v1292 = vadd.f32 0.0, %v1291
        %v1293 = vpop.f32.mrf.mxu0
        %1294 = vdwg.mxu0
        %v1295 = vunpack.c.l.b16 %v1130
        %v1296 = vpack.c.b16 %v1295, %v1295
        %1297 = vrot.lane.b32.xlu0 %v1296, 96
        %v1298 = vpop.permute.xlu0 %1297
        %v1300 = vsel %vm691, %v1247, 0
        %v1303 = vsel %vm825, %v1298, 0
        %1305 = vmatpush.bf16.msra.mxu0 0
        %1306 = vmatpush.bf16.msra.mxu0 0
        %1307 = vmatpush.bf16.msra.mxu0 0
        %1308 = vmatpush.bf16.msra.mxu0 0
        %1309 = vmatpush.bf16.msra.mxu0 0
        %1310 = vmatpush.bf16.msra.mxu0 0
        %1311 = vmatpush.bf16.msra.mxu0 0
        %1312 = vmatpush.bf16.msra.mxu0 %v1303
        %1313 = vmatmul.bf16.gmra.mxu0 %v1300
        %v1314 = vpop.f32.mrf.mxu0
        %v1315 = vadd.f32 0.0, %v1314
        %v1316 = vpop.f32.mrf.mxu0
        %1317 = vdwg.mxu0
        %v1318 = vunpack.c.l.b16 %v1132
        %v1319 = vpack.c.b16 %v1318, %v1318
        %1320 = vrot.lane.b32.xlu0 %v1319, 96
        %v1321 = vpop.permute.xlu0 %1320
        %v1323 = vsel %vm691, %v1248, 0
        %v1326 = vsel %vm825, %v1321, 0
        %1328 = vmatpush.bf16.msra.mxu0 0
        %1329 = vmatpush.bf16.msra.mxu0 0
        %1330 = vmatpush.bf16.msra.mxu0 0
        %1331 = vmatpush.bf16.msra.mxu0 0
        %1332 = vmatpush.bf16.msra.mxu0 0
        %1333 = vmatpush.bf16.msra.mxu0 0
        %1334 = vmatpush.bf16.msra.mxu0 0
        %1335 = vmatpush.bf16.msra.mxu0 %v1326
        %1336 = vmatmul.bf16.gmra.mxu0 %v1323
        %v1337 = vpop.f32.mrf.mxu0
        %v1338 = vadd.f32 0.0, %v1337
        %v1339 = vpop.f32.mrf.mxu0
        %1340 = vdwg.mxu0
        %v1341 = vrcp.pop %v1235
        %v1342 = vmul.f32 %v1235, %v1341
        %v1343 = vsub.f32 1.0, %v1342
        %v1344 = vmul.f32 %v1341, %v1343
        %v1345 = vadd.f32 %v1341, %v1344
        %vm1346 = vweird.f32 %v1235
        %vm1347 = vweird.f32 %v1341
        %vm1348 = vmor %vm1346, %vm1347
        %v1349 = vsel %vm1348, %v1341, %v1345
        %v1350 = vand.u32 2147483647, %v1235
        %vm1351 = vcmp.eq.f32.partialorder %v1350, 8.507059e+37
        %v1352 = vand.u32 %v1235, 2147483648
        %v1353 = vor.u32 1.1754944e-38, %v1352
        %v1354 = vsel %vm1351, %v1353, %v1349
        %v1355 = vrcp.pop %v1238
        %v1356 = vmul.f32 %v1238, %v1355
        %v1357 = vsub.f32 1.0, %v1356
        %v1358 = vmul.f32 %v1355, %v1357
        %v1359 = vadd.f32 %v1355, %v1358
        %vm1360 = vweird.f32 %v1238
        %vm1361 = vweird.f32 %v1355
        %vm1362 = vmor %vm1360, %vm1361
        %v1363 = vsel %vm1362, %v1355, %v1359
        %v1364 = vand.u32 2147483647, %v1238
        %vm1365 = vcmp.eq.f32.partialorder %v1364, 8.507059e+37
        %v1366 = vand.u32 %v1238, 2147483648
        %v1367 = vor.u32 1.1754944e-38, %v1366
        %v1368 = vsel %vm1365, %v1367, %v1363
        %v1369 = vrcp.pop %v1241
        %v1370 = vmul.f32 %v1241, %v1369
        %v1371 = vsub.f32 1.0, %v1370
        %v1372 = vmul.f32 %v1369, %v1371
        %v1373 = vadd.f32 %v1369, %v1372
        %vm1374 = vweird.f32 %v1241
        %vm1375 = vweird.f32 %v1369
        %vm1376 = vmor %vm1374, %vm1375
        %v1377 = vsel %vm1376, %v1369, %v1373
        %v1378 = vand.u32 2147483647, %v1241
        %vm1379 = vcmp.eq.f32.partialorder %v1378, 8.507059e+37
        %v1380 = vand.u32 %v1241, 2147483648
        %v1381 = vor.u32 1.1754944e-38, %v1380
        %v1382 = vsel %vm1379, %v1381, %v1377
        %v1383 = vrcp.pop %v1244
        %v1384 = vmul.f32 %v1244, %v1383
        %v1385 = vsub.f32 1.0, %v1384
        %v1386 = vmul.f32 %v1383, %v1385
        %v1387 = vadd.f32 %v1383, %v1386
        %vm1388 = vweird.f32 %v1244
        %vm1389 = vweird.f32 %v1383
        %vm1390 = vmor %vm1388, %vm1389
        %v1391 = vsel %vm1390, %v1383, %v1387
        %v1392 = vand.u32 2147483647, %v1244
        %vm1393 = vcmp.eq.f32.partialorder %v1392, 8.507059e+37
        %v1394 = vand.u32 %v1244, 2147483648
        %v1395 = vor.u32 1.1754944e-38, %v1394
        %v1396 = vsel %vm1393, %v1395, %v1391
        %v1397 = vmul.f32 %v1269, %v1354
        %v1398 = vmul.f32 %v1292, %v1368
        %v1399 = vmul.f32 %v1315, %v1382
        %v1400 = vmul.f32 %v1338, %v1396
        %1402 = vrot.lane.b32.xlu0 %v1398, 8
        %v1403 = vpop.permute.xlu0 %1402
        %1406 = vrot.lane.b32.xlu0 %v1399, 16
        %v1407 = vpop.permute.xlu0 %1406
        %1410 = vrot.lane.b32.xlu0 %v1400, 24
        %v1411 = vpop.permute.xlu0 %1410
        %v1413 = vsel %vm691, %v1397, %v1403
        %v1414 = vsel %vm978, %v1413, %v1407
        %v1415 = vsel %vm980, %v1414, %v1411
        %v1416 = vpack.c.bf16 %v1415, %v1415
        %v1417 = vperm.slane %v634, 2
        %v1422 = vunpack.c.l.b16 %v1113
        %v1423 = vunpack.c.l.b16 %v1114
        %v1424 = vunpack.c.l.b16 %v1115
        %v1425 = vunpack.c.l.b16 %v1116
        %v1426 = vpack.c.b16 %v1423, %v1422
        %v1427 = vpack.c.b16 %v1425, %v1424
        %v1431 = vsel %vm658, %v1416, 0
        %1433 = vmatpush.bf16.msra.mxu0 0
        %1434 = vmatpush.bf16.msra.mxu0 0
        %1435 = vmatpush.bf16.msra.mxu0 0
        %1436 = vmatpush.bf16.msra.mxu0 0
        %1437 = vmatpush.bf16.msra.mxu0 0
        %1438 = vmatpush.bf16.msra.mxu0 0
        %1439 = vmatpush.bf16.msra.mxu0 %v1427
        %1440 = vmatpush.bf16.msra.mxu0 %v1426
        %1441 = vmatmul.bf16.gmra.mxu0 %v1431
        %v1442 = vpop.f32.mrf.mxu0
        %v1443 = vadd.f32 %v1417, %v1442
        %v1444 = vpop.f32.mrf.mxu0
        %1445 = vdwg.mxu0
        %v1446 = vadd.f32 %v1045, %v1443
        %v1447 = vsel %vm658, %v1446, 0.0
        %1448 = vadd.xlane.f32.xlu0 %v1447
        %v1449 = vpop.xlane.xlu0 %1448
        %v1450 = vmul.f32 %v1449, %v1022
        %v1451 = vsub.f32 %v1446, %v1450
        %v1452 = vmul.f32 %v1451, %v1451
        %v1453 = vsel %vm658, %v1452, 0.0
        %1454 = vadd.xlane.f32.xlu0 %v1453
        %v1455 = vpop.xlane.xlu0 %1454
        %v1456 = vmul.f32 %v1455, %v1022
        %v1457 = vadd.f32 %v1456, 1e-05
        %v1458 = vrsqrt.pop %v1457
        %v1459 = vmul.f32 %v1458, %v1457
        %v1460 = vmul.f32 %v1459, %v1458
        %v1461 = vmul.f32 0.5, %v1460
        %v1462 = vsub.f32 1.5, %v1461
        %v1463 = vmul.f32 %v1458, %v1462
        %vm1464 = vweird.f32 %v1457
        %vm1465 = vweird.f32 %v1458
        %vm1466 = vmor %vm1464, %vm1465
        %v1467 = vsel %vm1466, %v1458, %v1463
        %v1468 = vmul.f32 %v1451, %v1467
        %v1469 = vperm.slane %v634, 6
        %v1470 = vmul.f32 %v1468, %v1469
        %v1471 = vperm.slane %v634, 7
        %v1472 = vadd.f32 %v1470, %v1471
        %v1473 = vpack.c.bf16 %v1472, %v1472
        %v1474 = vld [vmem:[%s611] sm:$0xff]
        %v1475 = vld [vmem:[%s611 + $0x8] sm:$0xff]
        %v1476 = vld [vmem:[%s611 + $0x10] sm:$0xff]
        %v1477 = vld [vmem:[%s611 + $0x18] sm:$0xff]
        %v1478 = vld [vmem:[%s611 + $0x20] sm:$0xff]
        %v1479 = vld [vmem:[%s611 + $0x28] sm:$0xff]
        %v1480 = vld [vmem:[%s611 + $0x30] sm:$0xff]
        %v1481 = vld [vmem:[%s611 + $0x38] sm:$0xff]
        %v1482 = vld [vmem:[%s611 + $0x40] sm:$0xff]
        %v1483 = vld [vmem:[%s611 + $0x48] sm:$0xff]
        %v1484 = vld [vmem:[%s611 + $0x50] sm:$0xff]
        %v1485 = vld [vmem:[%s611 + $0x58] sm:$0xff]
        %v1486 = vld [vmem:[%s611 + $0x60] sm:$0xff]
        %v1487 = vld [vmem:[%s611 + $0x68] sm:$0xff]
        %v1488 = vld [vmem:[%s611 + $0x70] sm:$0xff]
        %v1489 = vld [vmem:[%s611 + $0x78] sm:$0xff]
        %v1490 = vld [vmem:[%s611 + $0x80] sm:$0xff]
        %v1491 = vld [vmem:[%s611 + $0x88] sm:$0xff]
        %v1492 = vld [vmem:[%s611 + $0x90] sm:$0xff]
        %v1493 = vld [vmem:[%s611 + $0x98] sm:$0xff]
        %v1494 = vld [vmem:[%s611 + $0xa0] sm:$0xff]
        %v1495 = vld [vmem:[%s611 + $0xa8] sm:$0xff]
        %v1496 = vld [vmem:[%s611 + $0xb0] sm:$0xff]
        %v1497 = vld [vmem:[%s611 + $0xb8] sm:$0xff]
        %v1498 = vld [vmem:[%s611 + $0xc0] sm:$0xff]
        %v1499 = vld [vmem:[%s611 + $0xc8] sm:$0xff]
        %v1500 = vld [vmem:[%s611 + $0xd0] sm:$0xff]
        %v1501 = vld [vmem:[%s611 + $0xd8] sm:$0xff]
        %v1502 = vld [vmem:[%s611 + $0xe0] sm:$0xff]
        %v1503 = vld [vmem:[%s611 + $0xe8] sm:$0xff]
        %v1504 = vld [vmem:[%s611 + $0xf0] sm:$0xff]
        %v1505 = vld [vmem:[%s611 + $0xf8] sm:$0xff]
        %v1506 = vld [vmem:[%s615] sm:$0xff]
        %v1507 = vld [vmem:[%s615 + $0x8] sm:$0xff]
        %v1510 = vperm.slane %v1506, 0
        %v1511 = vperm.slane %v1506, 1
        %v1512 = vperm.slane %v1506, 2
        %v1513 = vperm.slane %v1506, 3
        %v1514 = vperm.slane %v1506, 4
        %v1515 = vperm.slane %v1506, 5
        %v1516 = vperm.slane %v1506, 6
        %v1517 = vperm.slane %v1506, 7
        %v1518 = vperm.slane %v1507, 0
        %v1519 = vperm.slane %v1507, 1
        %v1520 = vperm.slane %v1507, 2
        %v1521 = vperm.slane %v1507, 3
        %v1522 = vperm.slane %v1507, 4
        %v1523 = vperm.slane %v1507, 5
        %v1524 = vperm.slane %v1507, 6
        %v1525 = vperm.slane %v1507, 7
        %v1574 = vunpack.c.l.b16 %v1474
        %v1575 = vunpack.c.h.b16 %v1474
        %v1576 = vunpack.c.l.b16 %v1475
        %v1577 = vunpack.c.h.b16 %v1475
        %v1578 = vunpack.c.l.b16 %v1476
        %v1579 = vunpack.c.h.b16 %v1476
        %v1580 = vunpack.c.l.b16 %v1477
        %v1581 = vunpack.c.h.b16 %v1477
        %v1582 = vunpack.c.l.b16 %v1478
        %v1583 = vunpack.c.h.b16 %v1478
        %v1584 = vunpack.c.l.b16 %v1479
        %v1585 = vunpack.c.h.b16 %v1479
        %v1586 = vunpack.c.l.b16 %v1480
        %v1587 = vunpack.c.h.b16 %v1480
        %v1588 = vunpack.c.l.b16 %v1481
        %v1589 = vunpack.c.h.b16 %v1481
        %v1590 = vunpack.c.l.b16 %v1482
        %v1591 = vunpack.c.h.b16 %v1482
        %v1592 = vunpack.c.l.b16 %v1483
        %v1593 = vunpack.c.h.b16 %v1483
        %v1594 = vunpack.c.l.b16 %v1484
        %v1595 = vunpack.c.h.b16 %v1484
        %v1596 = vunpack.c.l.b16 %v1485
        %v1597 = vunpack.c.h.b16 %v1485
        %v1598 = vunpack.c.l.b16 %v1486
        %v1599 = vunpack.c.h.b16 %v1486
        %v1600 = vunpack.c.l.b16 %v1487
        %v1601 = vunpack.c.h.b16 %v1487
        %v1602 = vunpack.c.l.b16 %v1488
        %v1603 = vunpack.c.h.b16 %v1488
        %v1604 = vunpack.c.l.b16 %v1489
        %v1605 = vunpack.c.h.b16 %v1489
        %v1606 = vunpack.c.l.b16 %v1490
        %v1607 = vunpack.c.h.b16 %v1490
        %v1608 = vunpack.c.l.b16 %v1491
        %v1609 = vunpack.c.h.b16 %v1491
        %v1610 = vunpack.c.l.b16 %v1492
        %v1611 = vunpack.c.h.b16 %v1492
        %v1612 = vunpack.c.l.b16 %v1493
        %v1613 = vunpack.c.h.b16 %v1493
        %v1614 = vunpack.c.l.b16 %v1494
        %v1615 = vunpack.c.h.b16 %v1494
        %v1616 = vunpack.c.l.b16 %v1495
        %v1617 = vunpack.c.h.b16 %v1495
        %v1618 = vunpack.c.l.b16 %v1496
        %v1619 = vunpack.c.h.b16 %v1496
        %v1620 = vunpack.c.l.b16 %v1497
        %v1621 = vunpack.c.h.b16 %v1497
        %v1622 = vunpack.c.l.b16 %v1498
        %v1623 = vunpack.c.h.b16 %v1498
        %v1624 = vunpack.c.l.b16 %v1499
        %v1625 = vunpack.c.h.b16 %v1499
        %v1626 = vunpack.c.l.b16 %v1500
        %v1627 = vunpack.c.h.b16 %v1500
        %v1628 = vunpack.c.l.b16 %v1501
        %v1629 = vunpack.c.h.b16 %v1501
        %v1630 = vunpack.c.l.b16 %v1502
        %v1631 = vunpack.c.h.b16 %v1502
        %v1632 = vunpack.c.l.b16 %v1503
        %v1633 = vunpack.c.h.b16 %v1503
        %v1634 = vunpack.c.l.b16 %v1504
        %v1635 = vunpack.c.h.b16 %v1504
        %v1636 = vunpack.c.l.b16 %v1505
        %v1637 = vunpack.c.h.b16 %v1505
        %v1638 = vpack.c.b16 %v1590, %v1574
        %v1639 = vpack.c.b16 %v1591, %v1575
        %v1640 = vpack.c.b16 %v1592, %v1576
        %v1641 = vpack.c.b16 %v1593, %v1577
        %v1642 = vpack.c.b16 %v1594, %v1578
        %v1643 = vpack.c.b16 %v1595, %v1579
        %v1644 = vpack.c.b16 %v1596, %v1580
        %v1645 = vpack.c.b16 %v1597, %v1581
        %v1646 = vpack.c.b16 %v1598, %v1582
        %v1647 = vpack.c.b16 %v1599, %v1583
        %v1648 = vpack.c.b16 %v1600, %v1584
        %v1649 = vpack.c.b16 %v1601, %v1585
        %v1650 = vpack.c.b16 %v1602, %v1586
        %v1651 = vpack.c.b16 %v1603, %v1587
        %v1652 = vpack.c.b16 %v1604, %v1588
        %v1653 = vpack.c.b16 %v1605, %v1589
        %v1654 = vpack.c.b16 %v1622, %v1606
        %v1655 = vpack.c.b16 %v1623, %v1607
        %v1656 = vpack.c.b16 %v1624, %v1608
        %v1657 = vpack.c.b16 %v1625, %v1609
        %v1658 = vpack.c.b16 %v1626, %v1610
        %v1659 = vpack.c.b16 %v1627, %v1611
        %v1660 = vpack.c.b16 %v1628, %v1612
        %v1661 = vpack.c.b16 %v1629, %v1613
        %v1662 = vpack.c.b16 %v1630, %v1614
        %v1663 = vpack.c.b16 %v1631, %v1615
        %v1664 = vpack.c.b16 %v1632, %v1616
        %v1665 = vpack.c.b16 %v1633, %v1617
        %v1666 = vpack.c.b16 %v1634, %v1618
        %v1667 = vpack.c.b16 %v1635, %v1619
        %v1668 = vpack.c.b16 %v1636, %v1620
        %v1669 = vpack.c.b16 %v1637, %v1621
        %v1703 = vsel %vm658, %v1473, 0
        %1705 = vmatpush.bf16.msra.mxu0 0
        %1706 = vmatpush.bf16.msra.mxu0 0
        %1707 = vmatpush.bf16.msra.mxu0 0
        %1708 = vmatpush.bf16.msra.mxu0 0
        %1709 = vmatpush.bf16.msra.mxu0 0
        %1710 = vmatpush.bf16.msra.mxu0 0
        %1711 = vmatpush.bf16.msra.mxu0 %v1654
        %1712 = vmatpush.bf16.msra.mxu0 %v1638
        %1713 = vmatmul.bf16.gmra.mxu0 %v1703
        %v1714 = vpop.f32.mrf.mxu0
        %v1715 = vadd.f32 %v1510, %v1714
        %v1716 = vpop.f32.mrf.mxu0
        %1717 = vdwg.mxu0
        %1718 = vmatpush.bf16.msra.mxu0 0
        %1719 = vmatpush.bf16.msra.mxu0 0
        %1720 = vmatpush.bf16.msra.mxu0 0
        %1721 = vmatpush.bf16.msra.mxu0 0
        %1722 = vmatpush.bf16.msra.mxu0 0
        %1723 = vmatpush.bf16.msra.mxu0 0
        %1724 = vmatpush.bf16.msra.mxu0 %v1655
        %1725 = vmatpush.bf16.msra.mxu0 %v1639
        %1726 = vmatmul.bf16.gmra.mxu0 %v1703
        %v1727 = vpop.f32.mrf.mxu0
        %v1728 = vadd.f32 %v1511, %v1727
        %v1729 = vpop.f32.mrf.mxu0
        %1730 = vdwg.mxu0
        %1731 = vmatpush.bf16.msra.mxu0 0
        %1732 = vmatpush.bf16.msra.mxu0 0
        %1733 = vmatpush.bf16.msra.mxu0 0
        %1734 = vmatpush.bf16.msra.mxu0 0
        %1735 = vmatpush.bf16.msra.mxu0 0
        %1736 = vmatpush.bf16.msra.mxu0 0
        %1737 = vmatpush.bf16.msra.mxu0 %v1656
        %1738 = vmatpush.bf16.msra.mxu0 %v1640
        %1739 = vmatmul.bf16.gmra.mxu0 %v1703
        %v1740 = vpop.f32.mrf.mxu0
        %v1741 = vadd.f32 %v1512, %v1740
        %v1742 = vpop.f32.mrf.mxu0
        %1743 = vdwg.mxu0
        %1744 = vmatpush.bf16.msra.mxu0 0
        %1745 = vmatpush.bf16.msra.mxu0 0
        %1746 = vmatpush.bf16.msra.mxu0 0
        %1747 = vmatpush.bf16.msra.mxu0 0
        %1748 = vmatpush.bf16.msra.mxu0 0
        %1749 = vmatpush.bf16.msra.mxu0 0
        %1750 = vmatpush.bf16.msra.mxu0 %v1657
        %1751 = vmatpush.bf16.msra.mxu0 %v1641
        %1752 = vmatmul.bf16.gmra.mxu0 %v1703
        %v1753 = vpop.f32.mrf.mxu0
        %v1754 = vadd.f32 %v1513, %v1753
        %v1755 = vpop.f32.mrf.mxu0
        %1756 = vdwg.mxu0
        %1757 = vmatpush.bf16.msra.mxu0 0
        %1758 = vmatpush.bf16.msra.mxu0 0
        %1759 = vmatpush.bf16.msra.mxu0 0
        %1760 = vmatpush.bf16.msra.mxu0 0
        %1761 = vmatpush.bf16.msra.mxu0 0
        %1762 = vmatpush.bf16.msra.mxu0 0
        %1763 = vmatpush.bf16.msra.mxu0 %v1658
        %1764 = vmatpush.bf16.msra.mxu0 %v1642
        %1765 = vmatmul.bf16.gmra.mxu0 %v1703
        %v1766 = vpop.f32.mrf.mxu0
        %v1767 = vadd.f32 %v1514, %v1766
        %v1768 = vpop.f32.mrf.mxu0
        %1769 = vdwg.mxu0
        %1770 = vmatpush.bf16.msra.mxu0 0
        %1771 = vmatpush.bf16.msra.mxu0 0
        %1772 = vmatpush.bf16.msra.mxu0 0
        %1773 = vmatpush.bf16.msra.mxu0 0
        %1774 = vmatpush.bf16.msra.mxu0 0
        %1775 = vmatpush.bf16.msra.mxu0 0
        %1776 = vmatpush.bf16.msra.mxu0 %v1659
        %1777 = vmatpush.bf16.msra.mxu0 %v1643
        %1778 = vmatmul.bf16.gmra.mxu0 %v1703
        %v1779 = vpop.f32.mrf.mxu0
        %v1780 = vadd.f32 %v1515, %v1779
        %v1781 = vpop.f32.mrf.mxu0
        %1782 = vdwg.mxu0
        %1783 = vmatpush.bf16.msra.mxu0 0
        %1784 = vmatpush.bf16.msra.mxu0 0
        %1785 = vmatpush.bf16.msra.mxu0 0
        %1786 = vmatpush.bf16.msra.mxu0 0
        %1787 = vmatpush.bf16.msra.mxu0 0
        %1788 = vmatpush.bf16.msra.mxu0 0
        %1789 = vmatpush.bf16.msra.mxu0 %v1660
        %1790 = vmatpush.bf16.msra.mxu0 %v1644
        %1791 = vmatmul.bf16.gmra.mxu0 %v1703
        %v1792 = vpop.f32.mrf.mxu0
        %v1793 = vadd.f32 %v1516, %v1792
        %v1794 = vpop.f32.mrf.mxu0
        %1795 = vdwg.mxu0
        %1796 = vmatpush.bf16.msra.mxu0 0
        %1797 = vmatpush.bf16.msra.mxu0 0
        %1798 = vmatpush.bf16.msra.mxu0 0
        %1799 = vmatpush.bf16.msra.mxu0 0
        %1800 = vmatpush.bf16.msra.mxu0 0
        %1801 = vmatpush.bf16.msra.mxu0 0
        %1802 = vmatpush.bf16.msra.mxu0 %v1661
        %1803 = vmatpush.bf16.msra.mxu0 %v1645
        %1804 = vmatmul.bf16.gmra.mxu0 %v1703
        %v1805 = vpop.f32.mrf.mxu0
        %v1806 = vadd.f32 %v1517, %v1805
        %v1807 = vpop.f32.mrf.mxu0
        %1808 = vdwg.mxu0
        %1809 = vmatpush.bf16.msra.mxu0 0
        %1810 = vmatpush.bf16.msra.mxu0 0
        %1811 = vmatpush.bf16.msra.mxu0 0
        %1812 = vmatpush.bf16.msra.mxu0 0
        %1813 = vmatpush.bf16.msra.mxu0 0
        %1814 = vmatpush.bf16.msra.mxu0 0
        %1815 = vmatpush.bf16.msra.mxu0 %v1662
        %1816 = vmatpush.bf16.msra.mxu0 %v1646
        %1817 = vmatmul.bf16.gmra.mxu0 %v1703
        %v1818 = vpop.f32.mrf.mxu0
        %v1819 = vadd.f32 %v1518, %v1818
        %v1820 = vpop.f32.mrf.mxu0
        %1821 = vdwg.mxu0
        %1822 = vmatpush.bf16.msra.mxu0 0
        %1823 = vmatpush.bf16.msra.mxu0 0
        %1824 = vmatpush.bf16.msra.mxu0 0
        %1825 = vmatpush.bf16.msra.mxu0 0
        %1826 = vmatpush.bf16.msra.mxu0 0
        %1827 = vmatpush.bf16.msra.mxu0 0
        %1828 = vmatpush.bf16.msra.mxu0 %v1663
        %1829 = vmatpush.bf16.msra.mxu0 %v1647
        %1830 = vmatmul.bf16.gmra.mxu0 %v1703
        %v1831 = vpop.f32.mrf.mxu0
        %v1832 = vadd.f32 %v1519, %v1831
        %v1833 = vpop.f32.mrf.mxu0
        %1834 = vdwg.mxu0
        %1835 = vmatpush.bf16.msra.mxu0 0
        %1836 = vmatpush.bf16.msra.mxu0 0
        %1837 = vmatpush.bf16.msra.mxu0 0
        %1838 = vmatpush.bf16.msra.mxu0 0
        %1839 = vmatpush.bf16.msra.mxu0 0
        %1840 = vmatpush.bf16.msra.mxu0 0
        %1841 = vmatpush.bf16.msra.mxu0 %v1664
        %1842 = vmatpush.bf16.msra.mxu0 %v1648
        %1843 = vmatmul.bf16.gmra.mxu0 %v1703
        %v1844 = vpop.f32.mrf.mxu0
        %v1845 = vadd.f32 %v1520, %v1844
        %v1846 = vpop.f32.mrf.mxu0
        %1847 = vdwg.mxu0
        %1848 = vmatpush.bf16.msra.mxu0 0
        %1849 = vmatpush.bf16.msra.mxu0 0
        %1850 = vmatpush.bf16.msra.mxu0 0
        %1851 = vmatpush.bf16.msra.mxu0 0
        %1852 = vmatpush.bf16.msra.mxu0 0
        %1853 = vmatpush.bf16.msra.mxu0 0
        %1854 = vmatpush.bf16.msra.mxu0 %v1665
        %1855 = vmatpush.bf16.msra.mxu0 %v1649
        %1856 = vmatmul.bf16.gmra.mxu0 %v1703
        %v1857 = vpop.f32.mrf.mxu0
        %v1858 = vadd.f32 %v1521, %v1857
        %v1859 = vpop.f32.mrf.mxu0
        %1860 = vdwg.mxu0
        %1861 = vmatpush.bf16.msra.mxu0 0
        %1862 = vmatpush.bf16.msra.mxu0 0
        %1863 = vmatpush.bf16.msra.mxu0 0
        %1864 = vmatpush.bf16.msra.mxu0 0
        %1865 = vmatpush.bf16.msra.mxu0 0
        %1866 = vmatpush.bf16.msra.mxu0 0
        %1867 = vmatpush.bf16.msra.mxu0 %v1666
        %1868 = vmatpush.bf16.msra.mxu0 %v1650
        %1869 = vmatmul.bf16.gmra.mxu0 %v1703
        %v1870 = vpop.f32.mrf.mxu0
        %v1871 = vadd.f32 %v1522, %v1870
        %v1872 = vpop.f32.mrf.mxu0
        %1873 = vdwg.mxu0
        %1874 = vmatpush.bf16.msra.mxu0 0
        %1875 = vmatpush.bf16.msra.mxu0 0
        %1876 = vmatpush.bf16.msra.mxu0 0
        %1877 = vmatpush.bf16.msra.mxu0 0
        %1878 = vmatpush.bf16.msra.mxu0 0
        %1879 = vmatpush.bf16.msra.mxu0 0
        %1880 = vmatpush.bf16.msra.mxu0 %v1667
        %1881 = vmatpush.bf16.msra.mxu0 %v1651
        %1882 = vmatmul.bf16.gmra.mxu0 %v1703
        %v1883 = vpop.f32.mrf.mxu0
        %v1884 = vadd.f32 %v1523, %v1883
        %v1885 = vpop.f32.mrf.mxu0
        %1886 = vdwg.mxu0
        %1887 = vmatpush.bf16.msra.mxu0 0
        %1888 = vmatpush.bf16.msra.mxu0 0
        %1889 = vmatpush.bf16.msra.mxu0 0
        %1890 = vmatpush.bf16.msra.mxu0 0
        %1891 = vmatpush.bf16.msra.mxu0 0
        %1892 = vmatpush.bf16.msra.mxu0 0
        %1893 = vmatpush.bf16.msra.mxu0 %v1668
        %1894 = vmatpush.bf16.msra.mxu0 %v1652
        %1895 = vmatmul.bf16.gmra.mxu0 %v1703
        %v1896 = vpop.f32.mrf.mxu0
        %v1897 = vadd.f32 %v1524, %v1896
        %v1898 = vpop.f32.mrf.mxu0
        %1899 = vdwg.mxu0
        %1900 = vmatpush.bf16.msra.mxu0 0
        %1901 = vmatpush.bf16.msra.mxu0 0
        %1902 = vmatpush.bf16.msra.mxu0 0
        %1903 = vmatpush.bf16.msra.mxu0 0
        %1904 = vmatpush.bf16.msra.mxu0 0
        %1905 = vmatpush.bf16.msra.mxu0 0
        %1906 = vmatpush.bf16.msra.mxu0 %v1669
        %1907 = vmatpush.bf16.msra.mxu0 %v1653
        %1908 = vmatmul.bf16.gmra.mxu0 %v1703
        %v1909 = vpop.f32.mrf.mxu0
        %v1910 = vadd.f32 %v1525, %v1909
        %v1911 = vpop.f32.mrf.mxu0
        %1912 = vdwg.mxu0
        %v1913 = vmax.f32 %v1715, 0.0
        %v1914 = vmax.f32 %v1728, 0.0
        %v1915 = vmax.f32 %v1741, 0.0
        %v1916 = vmax.f32 %v1754, 0.0
        %v1917 = vmax.f32 %v1767, 0.0
        %v1918 = vmax.f32 %v1780, 0.0
        %v1919 = vmax.f32 %v1793, 0.0
        %v1920 = vmax.f32 %v1806, 0.0
        %v1921 = vmax.f32 %v1819, 0.0
        %v1922 = vmax.f32 %v1832, 0.0
        %v1923 = vmax.f32 %v1845, 0.0
        %v1924 = vmax.f32 %v1858, 0.0
        %v1925 = vmax.f32 %v1871, 0.0
        %v1926 = vmax.f32 %v1884, 0.0
        %v1927 = vmax.f32 %v1897, 0.0
        %v1928 = vmax.f32 %v1910, 0.0
        %v1929 = vpack.c.bf16 %v1913, %v1913
        %v1930 = vpack.c.bf16 %v1914, %v1914
        %v1931 = vpack.c.bf16 %v1915, %v1915
        %v1932 = vpack.c.bf16 %v1916, %v1916
        %v1933 = vpack.c.bf16 %v1917, %v1917
        %v1934 = vpack.c.bf16 %v1918, %v1918
        %v1935 = vpack.c.bf16 %v1919, %v1919
        %v1936 = vpack.c.bf16 %v1920, %v1920
        %v1937 = vpack.c.bf16 %v1921, %v1921
        %v1938 = vpack.c.bf16 %v1922, %v1922
        %v1939 = vpack.c.bf16 %v1923, %v1923
        %v1940 = vpack.c.bf16 %v1924, %v1924
        %v1941 = vpack.c.bf16 %v1925, %v1925
        %v1942 = vpack.c.bf16 %v1926, %v1926
        %v1943 = vpack.c.bf16 %v1927, %v1927
        %v1944 = vpack.c.bf16 %v1928, %v1928
        %v1945 = vld [vmem:[%s620] sm:$0xf]
        %v1946 = vld [vmem:[%s620 + $0x4] sm:$0xf]
        %v1947 = vld [vmem:[%s620 + $0x8] sm:$0xf]
        %v1948 = vld [vmem:[%s620 + $0xc] sm:$0xf]
        %v1949 = vld [vmem:[%s620 + $0x10] sm:$0xf]
        %v1950 = vld [vmem:[%s620 + $0x14] sm:$0xf]
        %v1951 = vld [vmem:[%s620 + $0x18] sm:$0xf]
        %v1952 = vld [vmem:[%s620 + $0x1c] sm:$0xf]
        %v1953 = vld [vmem:[%s620 + $0x20] sm:$0xf]
        %v1954 = vld [vmem:[%s620 + $0x24] sm:$0xf]
        %v1955 = vld [vmem:[%s620 + $0x28] sm:$0xf]
        %v1956 = vld [vmem:[%s620 + $0x2c] sm:$0xf]
        %v1957 = vld [vmem:[%s620 + $0x30] sm:$0xf]
        %v1958 = vld [vmem:[%s620 + $0x34] sm:$0xf]
        %v1959 = vld [vmem:[%s620 + $0x38] sm:$0xf]
        %v1960 = vld [vmem:[%s620 + $0x3c] sm:$0xf]
        %v1961 = vld [vmem:[%s620 + $0x40] sm:$0xf]
        %v1962 = vld [vmem:[%s620 + $0x44] sm:$0xf]
        %v1963 = vld [vmem:[%s620 + $0x48] sm:$0xf]
        %v1964 = vld [vmem:[%s620 + $0x4c] sm:$0xf]
        %v1965 = vld [vmem:[%s620 + $0x50] sm:$0xf]
        %v1966 = vld [vmem:[%s620 + $0x54] sm:$0xf]
        %v1967 = vld [vmem:[%s620 + $0x58] sm:$0xf]
        %v1968 = vld [vmem:[%s620 + $0x5c] sm:$0xf]
        %v1969 = vld [vmem:[%s620 + $0x60] sm:$0xf]
        %v1970 = vld [vmem:[%s620 + $0x64] sm:$0xf]
        %v1971 = vld [vmem:[%s620 + $0x68] sm:$0xf]
        %v1972 = vld [vmem:[%s620 + $0x6c] sm:$0xf]
        %v1973 = vld [vmem:[%s620 + $0x70] sm:$0xf]
        %v1974 = vld [vmem:[%s620 + $0x74] sm:$0xf]
        %v1975 = vld [vmem:[%s620 + $0x78] sm:$0xf]
        %v1976 = vld [vmem:[%s620 + $0x7c] sm:$0xf]
        %v1977 = vld [vmem:[%s620 + $0x80] sm:$0xf]
        %v1978 = vld [vmem:[%s620 + $0x84] sm:$0xf]
        %v1979 = vld [vmem:[%s620 + $0x88] sm:$0xf]
        %v1980 = vld [vmem:[%s620 + $0x8c] sm:$0xf]
        %v1981 = vld [vmem:[%s620 + $0x90] sm:$0xf]
        %v1982 = vld [vmem:[%s620 + $0x94] sm:$0xf]
        %v1983 = vld [vmem:[%s620 + $0x98] sm:$0xf]
        %v1984 = vld [vmem:[%s620 + $0x9c] sm:$0xf]
        %v1985 = vld [vmem:[%s620 + $0xa0] sm:$0xf]
        %v1986 = vld [vmem:[%s620 + $0xa4] sm:$0xf]
        %v1987 = vld [vmem:[%s620 + $0xa8] sm:$0xf]
        %v1988 = vld [vmem:[%s620 + $0xac] sm:$0xf]
        %v1989 = vld [vmem:[%s620 + $0xb0] sm:$0xf]
        %v1990 = vld [vmem:[%s620 + $0xb4] sm:$0xf]
        %v1991 = vld [vmem:[%s620 + $0xb8] sm:$0xf]
        %v1992 = vld [vmem:[%s620 + $0xbc] sm:$0xf]
        %v1993 = vld [vmem:[%s620 + $0xc0] sm:$0xf]
        %v1994 = vld [vmem:[%s620 + $0xc4] sm:$0xf]
        %v1995 = vld [vmem:[%s620 + $0xc8] sm:$0xf]
        %v1996 = vld [vmem:[%s620 + $0xcc] sm:$0xf]
        %v1997 = vld [vmem:[%s620 + $0xd0] sm:$0xf]
        %v1998 = vld [vmem:[%s620 + $0xd4] sm:$0xf]
        %v1999 = vld [vmem:[%s620 + $0xd8] sm:$0xf]
        %v2000 = vld [vmem:[%s620 + $0xdc] sm:$0xf]
        %v2001 = vld [vmem:[%s620 + $0xe0] sm:$0xf]
        %v2002 = vld [vmem:[%s620 + $0xe4] sm:$0xf]
        %v2003 = vld [vmem:[%s620 + $0xe8] sm:$0xf]
        %v2004 = vld [vmem:[%s620 + $0xec] sm:$0xf]
        %v2005 = vld [vmem:[%s620 + $0xf0] sm:$0xf]
        %v2006 = vld [vmem:[%s620 + $0xf4] sm:$0xf]
        %v2007 = vld [vmem:[%s620 + $0xf8] sm:$0xf]
        %v2008 = vld [vmem:[%s620 + $0xfc] sm:$0xf]
        %v2009 = vld [vmem:[%s620 + $0x100] sm:$0xf]
        %v2010 = vld [vmem:[%s620 + $0x104] sm:$0xf]
        %v2011 = vld [vmem:[%s620 + $0x108] sm:$0xf]
        %v2012 = vld [vmem:[%s620 + $0x10c] sm:$0xf]
        %v2013 = vld [vmem:[%s620 + $0x110] sm:$0xf]
        %v2014 = vld [vmem:[%s620 + $0x114] sm:$0xf]
        %v2015 = vld [vmem:[%s620 + $0x118] sm:$0xf]
        %v2016 = vld [vmem:[%s620 + $0x11c] sm:$0xf]
        %v2017 = vld [vmem:[%s620 + $0x120] sm:$0xf]
        %v2018 = vld [vmem:[%s620 + $0x124] sm:$0xf]
        %v2019 = vld [vmem:[%s620 + $0x128] sm:$0xf]
        %v2020 = vld [vmem:[%s620 + $0x12c] sm:$0xf]
        %v2021 = vld [vmem:[%s620 + $0x130] sm:$0xf]
        %v2022 = vld [vmem:[%s620 + $0x134] sm:$0xf]
        %v2023 = vld [vmem:[%s620 + $0x138] sm:$0xf]
        %v2024 = vld [vmem:[%s620 + $0x13c] sm:$0xf]
        %v2025 = vld [vmem:[%s620 + $0x140] sm:$0xf]
        %v2026 = vld [vmem:[%s620 + $0x144] sm:$0xf]
        %v2027 = vld [vmem:[%s620 + $0x148] sm:$0xf]
        %v2028 = vld [vmem:[%s620 + $0x14c] sm:$0xf]
        %v2029 = vld [vmem:[%s620 + $0x150] sm:$0xf]
        %v2030 = vld [vmem:[%s620 + $0x154] sm:$0xf]
        %v2031 = vld [vmem:[%s620 + $0x158] sm:$0xf]
        %v2032 = vld [vmem:[%s620 + $0x15c] sm:$0xf]
        %v2033 = vld [vmem:[%s620 + $0x160] sm:$0xf]
        %v2034 = vld [vmem:[%s620 + $0x164] sm:$0xf]
        %v2035 = vld [vmem:[%s620 + $0x168] sm:$0xf]
        %v2036 = vld [vmem:[%s620 + $0x16c] sm:$0xf]
        %v2037 = vld [vmem:[%s620 + $0x170] sm:$0xf]
        %v2038 = vld [vmem:[%s620 + $0x174] sm:$0xf]
        %v2039 = vld [vmem:[%s620 + $0x178] sm:$0xf]
        %v2040 = vld [vmem:[%s620 + $0x17c] sm:$0xf]
        %v2041 = vld [vmem:[%s620 + $0x180] sm:$0xf]
        %v2042 = vld [vmem:[%s620 + $0x184] sm:$0xf]
        %v2043 = vld [vmem:[%s620 + $0x188] sm:$0xf]
        %v2044 = vld [vmem:[%s620 + $0x18c] sm:$0xf]
        %v2045 = vld [vmem:[%s620 + $0x190] sm:$0xf]
        %v2046 = vld [vmem:[%s620 + $0x194] sm:$0xf]
        %v2047 = vld [vmem:[%s620 + $0x198] sm:$0xf]
        %v2048 = vld [vmem:[%s620 + $0x19c] sm:$0xf]
        %v2049 = vld [vmem:[%s620 + $0x1a0] sm:$0xf]
        %v2050 = vld [vmem:[%s620 + $0x1a4] sm:$0xf]
        %v2051 = vld [vmem:[%s620 + $0x1a8] sm:$0xf]
        %v2052 = vld [vmem:[%s620 + $0x1ac] sm:$0xf]
        %v2053 = vld [vmem:[%s620 + $0x1b0] sm:$0xf]
        %v2054 = vld [vmem:[%s620 + $0x1b4] sm:$0xf]
        %v2055 = vld [vmem:[%s620 + $0x1b8] sm:$0xf]
        %v2056 = vld [vmem:[%s620 + $0x1bc] sm:$0xf]
        %v2057 = vld [vmem:[%s620 + $0x1c0] sm:$0xf]
        %v2058 = vld [vmem:[%s620 + $0x1c4] sm:$0xf]
        %v2059 = vld [vmem:[%s620 + $0x1c8] sm:$0xf]
        %v2060 = vld [vmem:[%s620 + $0x1cc] sm:$0xf]
        %v2061 = vld [vmem:[%s620 + $0x1d0] sm:$0xf]
        %v2062 = vld [vmem:[%s620 + $0x1d4] sm:$0xf]
        %v2063 = vld [vmem:[%s620 + $0x1d8] sm:$0xf]
        %v2064 = vld [vmem:[%s620 + $0x1dc] sm:$0xf]
        %v2065 = vld [vmem:[%s620 + $0x1e0] sm:$0xf]
        %v2066 = vld [vmem:[%s620 + $0x1e4] sm:$0xf]
        %v2067 = vld [vmem:[%s620 + $0x1e8] sm:$0xf]
        %v2068 = vld [vmem:[%s620 + $0x1ec] sm:$0xf]
        %v2069 = vld [vmem:[%s620 + $0x1f0] sm:$0xf]
        %v2070 = vld [vmem:[%s620 + $0x1f4] sm:$0xf]
        %v2071 = vld [vmem:[%s620 + $0x1f8] sm:$0xf]
        %v2072 = vld [vmem:[%s620 + $0x1fc] sm:$0xf]
        %v2073 = vld [vmem:[%s620 + $0x200] sm:$0xf]
        %v2074 = vld [vmem:[%s620 + $0x204] sm:$0xf]
        %v2075 = vld [vmem:[%s620 + $0x208] sm:$0xf]
        %v2076 = vld [vmem:[%s620 + $0x20c] sm:$0xf]
        %v2077 = vld [vmem:[%s620 + $0x210] sm:$0xf]
        %v2078 = vld [vmem:[%s620 + $0x214] sm:$0xf]
        %v2079 = vld [vmem:[%s620 + $0x218] sm:$0xf]
        %v2080 = vld [vmem:[%s620 + $0x21c] sm:$0xf]
        %v2081 = vld [vmem:[%s620 + $0x220] sm:$0xf]
        %v2082 = vld [vmem:[%s620 + $0x224] sm:$0xf]
        %v2083 = vld [vmem:[%s620 + $0x228] sm:$0xf]
        %v2084 = vld [vmem:[%s620 + $0x22c] sm:$0xf]
        %v2085 = vld [vmem:[%s620 + $0x230] sm:$0xf]
        %v2086 = vld [vmem:[%s620 + $0x234] sm:$0xf]
        %v2087 = vld [vmem:[%s620 + $0x238] sm:$0xf]
        %v2088 = vld [vmem:[%s620 + $0x23c] sm:$0xf]
        %v2089 = vld [vmem:[%s620 + $0x240] sm:$0xf]
        %v2090 = vld [vmem:[%s620 + $0x244] sm:$0xf]
        %v2091 = vld [vmem:[%s620 + $0x248] sm:$0xf]
        %v2092 = vld [vmem:[%s620 + $0x24c] sm:$0xf]
        %v2093 = vld [vmem:[%s620 + $0x250] sm:$0xf]
        %v2094 = vld [vmem:[%s620 + $0x254] sm:$0xf]
        %v2095 = vld [vmem:[%s620 + $0x258] sm:$0xf]
        %v2096 = vld [vmem:[%s620 + $0x25c] sm:$0xf]
        %v2097 = vld [vmem:[%s620 + $0x260] sm:$0xf]
        %v2098 = vld [vmem:[%s620 + $0x264] sm:$0xf]
        %v2099 = vld [vmem:[%s620 + $0x268] sm:$0xf]
        %v2100 = vld [vmem:[%s620 + $0x26c] sm:$0xf]
        %v2101 = vld [vmem:[%s620 + $0x270] sm:$0xf]
        %v2102 = vld [vmem:[%s620 + $0x274] sm:$0xf]
        %v2103 = vld [vmem:[%s620 + $0x278] sm:$0xf]
        %v2104 = vld [vmem:[%s620 + $0x27c] sm:$0xf]
        %v2105 = vld [vmem:[%s620 + $0x280] sm:$0xf]
        %v2106 = vld [vmem:[%s620 + $0x284] sm:$0xf]
        %v2107 = vld [vmem:[%s620 + $0x288] sm:$0xf]
        %v2108 = vld [vmem:[%s620 + $0x28c] sm:$0xf]
        %v2109 = vld [vmem:[%s620 + $0x290] sm:$0xf]
        %v2110 = vld [vmem:[%s620 + $0x294] sm:$0xf]
        %v2111 = vld [vmem:[%s620 + $0x298] sm:$0xf]
        %v2112 = vld [vmem:[%s620 + $0x29c] sm:$0xf]
        %v2113 = vld [vmem:[%s620 + $0x2a0] sm:$0xf]
        %v2114 = vld [vmem:[%s620 + $0x2a4] sm:$0xf]
        %v2115 = vld [vmem:[%s620 + $0x2a8] sm:$0xf]
        %v2116 = vld [vmem:[%s620 + $0x2ac] sm:$0xf]
        %v2117 = vld [vmem:[%s620 + $0x2b0] sm:$0xf]
        %v2118 = vld [vmem:[%s620 + $0x2b4] sm:$0xf]
        %v2119 = vld [vmem:[%s620 + $0x2b8] sm:$0xf]
        %v2120 = vld [vmem:[%s620 + $0x2bc] sm:$0xf]
        %v2121 = vld [vmem:[%s620 + $0x2c0] sm:$0xf]
        %v2122 = vld [vmem:[%s620 + $0x2c4] sm:$0xf]
        %v2123 = vld [vmem:[%s620 + $0x2c8] sm:$0xf]
        %v2124 = vld [vmem:[%s620 + $0x2cc] sm:$0xf]
        %v2125 = vld [vmem:[%s620 + $0x2d0] sm:$0xf]
        %v2126 = vld [vmem:[%s620 + $0x2d4] sm:$0xf]
        %v2127 = vld [vmem:[%s620 + $0x2d8] sm:$0xf]
        %v2128 = vld [vmem:[%s620 + $0x2dc] sm:$0xf]
        %v2129 = vld [vmem:[%s620 + $0x2e0] sm:$0xf]
        %v2130 = vld [vmem:[%s620 + $0x2e4] sm:$0xf]
        %v2131 = vld [vmem:[%s620 + $0x2e8] sm:$0xf]
        %v2132 = vld [vmem:[%s620 + $0x2ec] sm:$0xf]
        %v2133 = vld [vmem:[%s620 + $0x2f0] sm:$0xf]
        %v2134 = vld [vmem:[%s620 + $0x2f4] sm:$0xf]
        %v2135 = vld [vmem:[%s620 + $0x2f8] sm:$0xf]
        %v2136 = vld [vmem:[%s620 + $0x2fc] sm:$0xf]
        %v2137 = vld [vmem:[%s620 + $0x300] sm:$0xf]
        %v2138 = vld [vmem:[%s620 + $0x304] sm:$0xf]
        %v2139 = vld [vmem:[%s620 + $0x308] sm:$0xf]
        %v2140 = vld [vmem:[%s620 + $0x30c] sm:$0xf]
        %v2141 = vld [vmem:[%s620 + $0x310] sm:$0xf]
        %v2142 = vld [vmem:[%s620 + $0x314] sm:$0xf]
        %v2143 = vld [vmem:[%s620 + $0x318] sm:$0xf]
        %v2144 = vld [vmem:[%s620 + $0x31c] sm:$0xf]
        %v2145 = vld [vmem:[%s620 + $0x320] sm:$0xf]
        %v2146 = vld [vmem:[%s620 + $0x324] sm:$0xf]
        %v2147 = vld [vmem:[%s620 + $0x328] sm:$0xf]
        %v2148 = vld [vmem:[%s620 + $0x32c] sm:$0xf]
        %v2149 = vld [vmem:[%s620 + $0x330] sm:$0xf]
        %v2150 = vld [vmem:[%s620 + $0x334] sm:$0xf]
        %v2151 = vld [vmem:[%s620 + $0x338] sm:$0xf]
        %v2152 = vld [vmem:[%s620 + $0x33c] sm:$0xf]
        %v2153 = vld [vmem:[%s620 + $0x340] sm:$0xf]
        %v2154 = vld [vmem:[%s620 + $0x344] sm:$0xf]
        %v2155 = vld [vmem:[%s620 + $0x348] sm:$0xf]
        %v2156 = vld [vmem:[%s620 + $0x34c] sm:$0xf]
        %v2157 = vld [vmem:[%s620 + $0x350] sm:$0xf]
        %v2158 = vld [vmem:[%s620 + $0x354] sm:$0xf]
        %v2159 = vld [vmem:[%s620 + $0x358] sm:$0xf]
        %v2160 = vld [vmem:[%s620 + $0x35c] sm:$0xf]
        %v2161 = vld [vmem:[%s620 + $0x360] sm:$0xf]
        %v2162 = vld [vmem:[%s620 + $0x364] sm:$0xf]
        %v2163 = vld [vmem:[%s620 + $0x368] sm:$0xf]
        %v2164 = vld [vmem:[%s620 + $0x36c] sm:$0xf]
        %v2165 = vld [vmem:[%s620 + $0x370] sm:$0xf]
        %v2166 = vld [vmem:[%s620 + $0x374] sm:$0xf]
        %v2167 = vld [vmem:[%s620 + $0x378] sm:$0xf]
        %v2168 = vld [vmem:[%s620 + $0x37c] sm:$0xf]
        %v2169 = vld [vmem:[%s620 + $0x380] sm:$0xf]
        %v2170 = vld [vmem:[%s620 + $0x384] sm:$0xf]
        %v2171 = vld [vmem:[%s620 + $0x388] sm:$0xf]
        %v2172 = vld [vmem:[%s620 + $0x38c] sm:$0xf]
        %v2173 = vld [vmem:[%s620 + $0x390] sm:$0xf]
        %v2174 = vld [vmem:[%s620 + $0x394] sm:$0xf]
        %v2175 = vld [vmem:[%s620 + $0x398] sm:$0xf]
        %v2176 = vld [vmem:[%s620 + $0x39c] sm:$0xf]
        %v2177 = vld [vmem:[%s620 + $0x3a0] sm:$0xf]
        %v2178 = vld [vmem:[%s620 + $0x3a4] sm:$0xf]
        %v2179 = vld [vmem:[%s620 + $0x3a8] sm:$0xf]
        %v2180 = vld [vmem:[%s620 + $0x3ac] sm:$0xf]
        %v2181 = vld [vmem:[%s620 + $0x3b0] sm:$0xf]
        %v2182 = vld [vmem:[%s620 + $0x3b4] sm:$0xf]
        %v2183 = vld [vmem:[%s620 + $0x3b8] sm:$0xf]
        %v2184 = vld [vmem:[%s620 + $0x3bc] sm:$0xf]
        %v2185 = vld [vmem:[%s620 + $0x3c0] sm:$0xf]
        %v2186 = vld [vmem:[%s620 + $0x3c4] sm:$0xf]
        %v2187 = vld [vmem:[%s620 + $0x3c8] sm:$0xf]
        %v2188 = vld [vmem:[%s620 + $0x3cc] sm:$0xf]
        %v2189 = vld [vmem:[%s620 + $0x3d0] sm:$0xf]
        %v2190 = vld [vmem:[%s620 + $0x3d4] sm:$0xf]
        %v2191 = vld [vmem:[%s620 + $0x3d8] sm:$0xf]
        %v2192 = vld [vmem:[%s620 + $0x3dc] sm:$0xf]
        %v2193 = vld [vmem:[%s620 + $0x3e0] sm:$0xf]
        %v2194 = vld [vmem:[%s620 + $0x3e4] sm:$0xf]
        %v2195 = vld [vmem:[%s620 + $0x3e8] sm:$0xf]
        %v2196 = vld [vmem:[%s620 + $0x3ec] sm:$0xf]
        %v2197 = vld [vmem:[%s620 + $0x3f0] sm:$0xf]
        %v2198 = vld [vmem:[%s620 + $0x3f4] sm:$0xf]
        %v2199 = vld [vmem:[%s620 + $0x3f8] sm:$0xf]
        %v2200 = vld [vmem:[%s620 + $0x3fc] sm:$0xf]
        %v2201 = vperm.slane %v634, 3
        %v2458 = vunpack.c.l.b16 %v1945
        %v2459 = vunpack.c.l.b16 %v1946
        %v2460 = vunpack.c.l.b16 %v1947
        %v2461 = vunpack.c.l.b16 %v1948
        %v2462 = vunpack.c.l.b16 %v1949
        %v2463 = vunpack.c.l.b16 %v1950
        %v2464 = vunpack.c.l.b16 %v1951
        %v2465 = vunpack.c.l.b16 %v1952
        %v2466 = vunpack.c.l.b16 %v1953
        %v2467 = vunpack.c.l.b16 %v1954
        %v2468 = vunpack.c.l.b16 %v1955
        %v2469 = vunpack.c.l.b16 %v1956
        %v2470 = vunpack.c.l.b16 %v1957
        %v2471 = vunpack.c.l.b16 %v1958
        %v2472 = vunpack.c.l.b16 %v1959
        %v2473 = vunpack.c.l.b16 %v1960
        %v2474 = vunpack.c.l.b16 %v1961
        %v2475 = vunpack.c.l.b16 %v1962
        %v2476 = vunpack.c.l.b16 %v1963
        %v2477 = vunpack.c.l.b16 %v1964
        %v2478 = vunpack.c.l.b16 %v1965
        %v2479 = vunpack.c.l.b16 %v1966
        %v2480 = vunpack.c.l.b16 %v1967
        %v2481 = vunpack.c.l.b16 %v1968
        %v2482 = vunpack.c.l.b16 %v1969
        %v2483 = vunpack.c.l.b16 %v1970
        %v2484 = vunpack.c.l.b16 %v1971
        %v2485 = vunpack.c.l.b16 %v1972
        %v2486 = vunpack.c.l.b16 %v1973
        %v2487 = vunpack.c.l.b16 %v1974
        %v2488 = vunpack.c.l.b16 %v1975
        %v2489 = vunpack.c.l.b16 %v1976
        %v2490 = vunpack.c.l.b16 %v1977
        %v2491 = vunpack.c.l.b16 %v1978
        %v2492 = vunpack.c.l.b16 %v1979
        %v2493 = vunpack.c.l.b16 %v1980
        %v2494 = vunpack.c.l.b16 %v1981
        %v2495 = vunpack.c.l.b16 %v1982
        %v2496 = vunpack.c.l.b16 %v1983
        %v2497 = vunpack.c.l.b16 %v1984
        %v2498 = vunpack.c.l.b16 %v1985
        %v2499 = vunpack.c.l.b16 %v1986
        %v2500 = vunpack.c.l.b16 %v1987
        %v2501 = vunpack.c.l.b16 %v1988
        %v2502 = vunpack.c.l.b16 %v1989
        %v2503 = vunpack.c.l.b16 %v1990
        %v2504 = vunpack.c.l.b16 %v1991
        %v2505 = vunpack.c.l.b16 %v1992
        %v2506 = vunpack.c.l.b16 %v1993
        %v2507 = vunpack.c.l.b16 %v1994
        %v2508 = vunpack.c.l.b16 %v1995
        %v2509 = vunpack.c.l.b16 %v1996
        %v2510 = vunpack.c.l.b16 %v1997
        %v2511 = vunpack.c.l.b16 %v1998
        %v2512 = vunpack.c.l.b16 %v1999
        %v2513 = vunpack.c.l.b16 %v2000
        %v2514 = vunpack.c.l.b16 %v2001
        %v2515 = vunpack.c.l.b16 %v2002
        %v2516 = vunpack.c.l.b16 %v2003
        %v2517 = vunpack.c.l.b16 %v2004
        %v2518 = vunpack.c.l.b16 %v2005
        %v2519 = vunpack.c.l.b16 %v2006
        %v2520 = vunpack.c.l.b16 %v2007
        %v2521 = vunpack.c.l.b16 %v2008
        %v2522 = vunpack.c.l.b16 %v2009
        %v2523 = vunpack.c.l.b16 %v2010
        %v2524 = vunpack.c.l.b16 %v2011
        %v2525 = vunpack.c.l.b16 %v2012
        %v2526 = vunpack.c.l.b16 %v2013
        %v2527 = vunpack.c.l.b16 %v2014
        %v2528 = vunpack.c.l.b16 %v2015
        %v2529 = vunpack.c.l.b16 %v2016
        %v2530 = vunpack.c.l.b16 %v2017
        %v2531 = vunpack.c.l.b16 %v2018
        %v2532 = vunpack.c.l.b16 %v2019
        %v2533 = vunpack.c.l.b16 %v2020
        %v2534 = vunpack.c.l.b16 %v2021
        %v2535 = vunpack.c.l.b16 %v2022
        %v2536 = vunpack.c.l.b16 %v2023
        %v2537 = vunpack.c.l.b16 %v2024
        %v2538 = vunpack.c.l.b16 %v2025
        %v2539 = vunpack.c.l.b16 %v2026
        %v2540 = vunpack.c.l.b16 %v2027
        %v2541 = vunpack.c.l.b16 %v2028
        %v2542 = vunpack.c.l.b16 %v2029
        %v2543 = vunpack.c.l.b16 %v2030
        %v2544 = vunpack.c.l.b16 %v2031
        %v2545 = vunpack.c.l.b16 %v2032
        %v2546 = vunpack.c.l.b16 %v2033
        %v2547 = vunpack.c.l.b16 %v2034
        %v2548 = vunpack.c.l.b16 %v2035
        %v2549 = vunpack.c.l.b16 %v2036
        %v2550 = vunpack.c.l.b16 %v2037
        %v2551 = vunpack.c.l.b16 %v2038
        %v2552 = vunpack.c.l.b16 %v2039
        %v2553 = vunpack.c.l.b16 %v2040
        %v2554 = vunpack.c.l.b16 %v2041
        %v2555 = vunpack.c.l.b16 %v2042
        %v2556 = vunpack.c.l.b16 %v2043
        %v2557 = vunpack.c.l.b16 %v2044
        %v2558 = vunpack.c.l.b16 %v2045
        %v2559 = vunpack.c.l.b16 %v2046
        %v2560 = vunpack.c.l.b16 %v2047
        %v2561 = vunpack.c.l.b16 %v2048
        %v2562 = vunpack.c.l.b16 %v2049
        %v2563 = vunpack.c.l.b16 %v2050
        %v2564 = vunpack.c.l.b16 %v2051
        %v2565 = vunpack.c.l.b16 %v2052
        %v2566 = vunpack.c.l.b16 %v2053
        %v2567 = vunpack.c.l.b16 %v2054
        %v2568 = vunpack.c.l.b16 %v2055
        %v2569 = vunpack.c.l.b16 %v2056
        %v2570 = vunpack.c.l.b16 %v2057
        %v2571 = vunpack.c.l.b16 %v2058
        %v2572 = vunpack.c.l.b16 %v2059
        %v2573 = vunpack.c.l.b16 %v2060
        %v2574 = vunpack.c.l.b16 %v2061
        %v2575 = vunpack.c.l.b16 %v2062
        %v2576 = vunpack.c.l.b16 %v2063
        %v2577 = vunpack.c.l.b16 %v2064
        %v2578 = vunpack.c.l.b16 %v2065
        %v2579 = vunpack.c.l.b16 %v2066
        %v2580 = vunpack.c.l.b16 %v2067
        %v2581 = vunpack.c.l.b16 %v2068
        %v2582 = vunpack.c.l.b16 %v2069
        %v2583 = vunpack.c.l.b16 %v2070
        %v2584 = vunpack.c.l.b16 %v2071
        %v2585 = vunpack.c.l.b16 %v2072
        %v2586 = vunpack.c.l.b16 %v2073
        %v2587 = vunpack.c.l.b16 %v2074
        %v2588 = vunpack.c.l.b16 %v2075
        %v2589 = vunpack.c.l.b16 %v2076
        %v2590 = vunpack.c.l.b16 %v2077
        %v2591 = vunpack.c.l.b16 %v2078
        %v2592 = vunpack.c.l.b16 %v2079
        %v2593 = vunpack.c.l.b16 %v2080
        %v2594 = vunpack.c.l.b16 %v2081
        %v2595 = vunpack.c.l.b16 %v2082
        %v2596 = vunpack.c.l.b16 %v2083
        %v2597 = vunpack.c.l.b16 %v2084
        %v2598 = vunpack.c.l.b16 %v2085
        %v2599 = vunpack.c.l.b16 %v2086
        %v2600 = vunpack.c.l.b16 %v2087
        %v2601 = vunpack.c.l.b16 %v2088
        %v2602 = vunpack.c.l.b16 %v2089
        %v2603 = vunpack.c.l.b16 %v2090
        %v2604 = vunpack.c.l.b16 %v2091
        %v2605 = vunpack.c.l.b16 %v2092
        %v2606 = vunpack.c.l.b16 %v2093
        %v2607 = vunpack.c.l.b16 %v2094
        %v2608 = vunpack.c.l.b16 %v2095
        %v2609 = vunpack.c.l.b16 %v2096
        %v2610 = vunpack.c.l.b16 %v2097
        %v2611 = vunpack.c.l.b16 %v2098
        %v2612 = vunpack.c.l.b16 %v2099
        %v2613 = vunpack.c.l.b16 %v2100
        %v2614 = vunpack.c.l.b16 %v2101
        %v2615 = vunpack.c.l.b16 %v2102
        %v2616 = vunpack.c.l.b16 %v2103
        %v2617 = vunpack.c.l.b16 %v2104
        %v2618 = vunpack.c.l.b16 %v2105
        %v2619 = vunpack.c.l.b16 %v2106
        %v2620 = vunpack.c.l.b16 %v2107
        %v2621 = vunpack.c.l.b16 %v2108
        %v2622 = vunpack.c.l.b16 %v2109
        %v2623 = vunpack.c.l.b16 %v2110
        %v2624 = vunpack.c.l.b16 %v2111
        %v2625 = vunpack.c.l.b16 %v2112
        %v2626 = vunpack.c.l.b16 %v2113
        %v2627 = vunpack.c.l.b16 %v2114
        %v2628 = vunpack.c.l.b16 %v2115
        %v2629 = vunpack.c.l.b16 %v2116
        %v2630 = vunpack.c.l.b16 %v2117
        %v2631 = vunpack.c.l.b16 %v2118
        %v2632 = vunpack.c.l.b16 %v2119
        %v2633 = vunpack.c.l.b16 %v2120
        %v2634 = vunpack.c.l.b16 %v2121
        %v2635 = vunpack.c.l.b16 %v2122
        %v2636 = vunpack.c.l.b16 %v2123
        %v2637 = vunpack.c.l.b16 %v2124
        %v2638 = vunpack.c.l.b16 %v2125
        %v2639 = vunpack.c.l.b16 %v2126
        %v2640 = vunpack.c.l.b16 %v2127
        %v2641 = vunpack.c.l.b16 %v2128
        %v2642 = vunpack.c.l.b16 %v2129
        %v2643 = vunpack.c.l.b16 %v2130
        %v2644 = vunpack.c.l.b16 %v2131
        %v2645 = vunpack.c.l.b16 %v2132
        %v2646 = vunpack.c.l.b16 %v2133
        %v2647 = vunpack.c.l.b16 %v2134
        %v2648 = vunpack.c.l.b16 %v2135
        %v2649 = vunpack.c.l.b16 %v2136
        %v2650 = vunpack.c.l.b16 %v2137
        %v2651 = vunpack.c.l.b16 %v2138
        %v2652 = vunpack.c.l.b16 %v2139
        %v2653 = vunpack.c.l.b16 %v2140
        %v2654 = vunpack.c.l.b16 %v2141
        %v2655 = vunpack.c.l.b16 %v2142
        %v2656 = vunpack.c.l.b16 %v2143
        %v2657 = vunpack.c.l.b16 %v2144
        %v2658 = vunpack.c.l.b16 %v2145
        %v2659 = vunpack.c.l.b16 %v2146
        %v2660 = vunpack.c.l.b16 %v2147
        %v2661 = vunpack.c.l.b16 %v2148
        %v2662 = vunpack.c.l.b16 %v2149
        %v2663 = vunpack.c.l.b16 %v2150
        %v2664 = vunpack.c.l.b16 %v2151
        %v2665 = vunpack.c.l.b16 %v2152
        %v2666 = vunpack.c.l.b16 %v2153
        %v2667 = vunpack.c.l.b16 %v2154
        %v2668 = vunpack.c.l.b16 %v2155
        %v2669 = vunpack.c.l.b16 %v2156
        %v2670 = vunpack.c.l.b16 %v2157
        %v2671 = vunpack.c.l.b16 %v2158
        %v2672 = vunpack.c.l.b16 %v2159
        %v2673 = vunpack.c.l.b16 %v2160
        %v2674 = vunpack.c.l.b16 %v2161
        %v2675 = vunpack.c.l.b16 %v2162
        %v2676 = vunpack.c.l.b16 %v2163
        %v2677 = vunpack.c.l.b16 %v2164
        %v2678 = vunpack.c.l.b16 %v2165
        %v2679 = vunpack.c.l.b16 %v2166
        %v2680 = vunpack.c.l.b16 %v2167
        %v2681 = vunpack.c.l.b16 %v2168
        %v2682 = vunpack.c.l.b16 %v2169
        %v2683 = vunpack.c.l.b16 %v2170
        %v2684 = vunpack.c.l.b16 %v2171
        %v2685 = vunpack.c.l.b16 %v2172
        %v2686 = vunpack.c.l.b16 %v2173
        %v2687 = vunpack.c.l.b16 %v2174
        %v2688 = vunpack.c.l.b16 %v2175
        %v2689 = vunpack.c.l.b16 %v2176
        %v2690 = vunpack.c.l.b16 %v2177
        %v2691 = vunpack.c.l.b16 %v2178
        %v2692 = vunpack.c.l.b16 %v2179
        %v2693 = vunpack.c.l.b16 %v2180
        %v2694 = vunpack.c.l.b16 %v2181
        %v2695 = vunpack.c.l.b16 %v2182
        %v2696 = vunpack.c.l.b16 %v2183
        %v2697 = vunpack.c.l.b16 %v2184
        %v2698 = vunpack.c.l.b16 %v2185
        %v2699 = vunpack.c.l.b16 %v2186
        %v2700 = vunpack.c.l.b16 %v2187
        %v2701 = vunpack.c.l.b16 %v2188
        %v2702 = vunpack.c.l.b16 %v2189
        %v2703 = vunpack.c.l.b16 %v2190
        %v2704 = vunpack.c.l.b16 %v2191
        %v2705 = vunpack.c.l.b16 %v2192
        %v2706 = vunpack.c.l.b16 %v2193
        %v2707 = vunpack.c.l.b16 %v2194
        %v2708 = vunpack.c.l.b16 %v2195
        %v2709 = vunpack.c.l.b16 %v2196
        %v2710 = vunpack.c.l.b16 %v2197
        %v2711 = vunpack.c.l.b16 %v2198
        %v2712 = vunpack.c.l.b16 %v2199
        %v2713 = vunpack.c.l.b16 %v2200
        %v2714 = vpack.c.b16 %v2459, %v2458
        %v2715 = vpack.c.b16 %v2461, %v2460
        %v2716 = vpack.c.b16 %v2463, %v2462
        %v2717 = vpack.c.b16 %v2465, %v2464
        %v2718 = vpack.c.b16 %v2467, %v2466
        %v2719 = vpack.c.b16 %v2469, %v2468
        %v2720 = vpack.c.b16 %v2471, %v2470
        %v2721 = vpack.c.b16 %v2473, %v2472
        %v2722 = vpack.c.b16 %v2475, %v2474
        %v2723 = vpack.c.b16 %v2477, %v2476
        %v2724 = vpack.c.b16 %v2479, %v2478
        %v2725 = vpack.c.b16 %v2481, %v2480
        %v2726 = vpack.c.b16 %v2483, %v2482
        %v2727 = vpack.c.b16 %v2485, %v2484
        %v2728 = vpack.c.b16 %v2487, %v2486
        %v2729 = vpack.c.b16 %v2489, %v2488
        %v2730 = vpack.c.b16 %v2491, %v2490
        %v2731 = vpack.c.b16 %v2493, %v2492
        %v2732 = vpack.c.b16 %v2495, %v2494
        %v2733 = vpack.c.b16 %v2497, %v2496
        %v2734 = vpack.c.b16 %v2499, %v2498
        %v2735 = vpack.c.b16 %v2501, %v2500
        %v2736 = vpack.c.b16 %v2503, %v2502
        %v2737 = vpack.c.b16 %v2505, %v2504
        %v2738 = vpack.c.b16 %v2507, %v2506
        %v2739 = vpack.c.b16 %v2509, %v2508
        %v2740 = vpack.c.b16 %v2511, %v2510
        %v2741 = vpack.c.b16 %v2513, %v2512
        %v2742 = vpack.c.b16 %v2515, %v2514
        %v2743 = vpack.c.b16 %v2517, %v2516
        %v2744 = vpack.c.b16 %v2519, %v2518
        %v2745 = vpack.c.b16 %v2521, %v2520
        %v2746 = vpack.c.b16 %v2523, %v2522
        %v2747 = vpack.c.b16 %v2525, %v2524
        %v2748 = vpack.c.b16 %v2527, %v2526
        %v2749 = vpack.c.b16 %v2529, %v2528
        %v2750 = vpack.c.b16 %v2531, %v2530
        %v2751 = vpack.c.b16 %v2533, %v2532
        %v2752 = vpack.c.b16 %v2535, %v2534
        %v2753 = vpack.c.b16 %v2537, %v2536
        %v2754 = vpack.c.b16 %v2539, %v2538
        %v2755 = vpack.c.b16 %v2541, %v2540
        %v2756 = vpack.c.b16 %v2543, %v2542
        %v2757 = vpack.c.b16 %v2545, %v2544
        %v2758 = vpack.c.b16 %v2547, %v2546
        %v2759 = vpack.c.b16 %v2549, %v2548
        %v2760 = vpack.c.b16 %v2551, %v2550
        %v2761 = vpack.c.b16 %v2553, %v2552
        %v2762 = vpack.c.b16 %v2555, %v2554
        %v2763 = vpack.c.b16 %v2557, %v2556
        %v2764 = vpack.c.b16 %v2559, %v2558
        %v2765 = vpack.c.b16 %v2561, %v2560
        %v2766 = vpack.c.b16 %v2563, %v2562
        %v2767 = vpack.c.b16 %v2565, %v2564
        %v2768 = vpack.c.b16 %v2567, %v2566
        %v2769 = vpack.c.b16 %v2569, %v2568
        %v2770 = vpack.c.b16 %v2571, %v2570
        %v2771 = vpack.c.b16 %v2573, %v2572
        %v2772 = vpack.c.b16 %v2575, %v2574
        %v2773 = vpack.c.b16 %v2577, %v2576
        %v2774 = vpack.c.b16 %v2579, %v2578
        %v2775 = vpack.c.b16 %v2581, %v2580
        %v2776 = vpack.c.b16 %v2583, %v2582
        %v2777 = vpack.c.b16 %v2585, %v2584
        %v2778 = vpack.c.b16 %v2587, %v2586
        %v2779 = vpack.c.b16 %v2589, %v2588
        %v2780 = vpack.c.b16 %v2591, %v2590
        %v2781 = vpack.c.b16 %v2593, %v2592
        %v2782 = vpack.c.b16 %v2595, %v2594
        %v2783 = vpack.c.b16 %v2597, %v2596
        %v2784 = vpack.c.b16 %v2599, %v2598
        %v2785 = vpack.c.b16 %v2601, %v2600
        %v2786 = vpack.c.b16 %v2603, %v2602
        %v2787 = vpack.c.b16 %v2605, %v2604
        %v2788 = vpack.c.b16 %v2607, %v2606
        %v2789 = vpack.c.b16 %v2609, %v2608
        %v2790 = vpack.c.b16 %v2611, %v2610
        %v2791 = vpack.c.b16 %v2613, %v2612
        %v2792 = vpack.c.b16 %v2615, %v2614
        %v2793 = vpack.c.b16 %v2617, %v2616
        %v2794 = vpack.c.b16 %v2619, %v2618
        %v2795 = vpack.c.b16 %v2621, %v2620
        %v2796 = vpack.c.b16 %v2623, %v2622
        %v2797 = vpack.c.b16 %v2625, %v2624
        %v2798 = vpack.c.b16 %v2627, %v2626
        %v2799 = vpack.c.b16 %v2629, %v2628
        %v2800 = vpack.c.b16 %v2631, %v2630
        %v2801 = vpack.c.b16 %v2633, %v2632
        %v2802 = vpack.c.b16 %v2635, %v2634
        %v2803 = vpack.c.b16 %v2637, %v2636
        %v2804 = vpack.c.b16 %v2639, %v2638
        %v2805 = vpack.c.b16 %v2641, %v2640
        %v2806 = vpack.c.b16 %v2643, %v2642
        %v2807 = vpack.c.b16 %v2645, %v2644
        %v2808 = vpack.c.b16 %v2647, %v2646
        %v2809 = vpack.c.b16 %v2649, %v2648
        %v2810 = vpack.c.b16 %v2651, %v2650
        %v2811 = vpack.c.b16 %v2653, %v2652
        %v2812 = vpack.c.b16 %v2655, %v2654
        %v2813 = vpack.c.b16 %v2657, %v2656
        %v2814 = vpack.c.b16 %v2659, %v2658
        %v2815 = vpack.c.b16 %v2661, %v2660
        %v2816 = vpack.c.b16 %v2663, %v2662
        %v2817 = vpack.c.b16 %v2665, %v2664
        %v2818 = vpack.c.b16 %v2667, %v2666
        %v2819 = vpack.c.b16 %v2669, %v2668
        %v2820 = vpack.c.b16 %v2671, %v2670
        %v2821 = vpack.c.b16 %v2673, %v2672
        %v2822 = vpack.c.b16 %v2675, %v2674
        %v2823 = vpack.c.b16 %v2677, %v2676
        %v2824 = vpack.c.b16 %v2679, %v2678
        %v2825 = vpack.c.b16 %v2681, %v2680
        %v2826 = vpack.c.b16 %v2683, %v2682
        %v2827 = vpack.c.b16 %v2685, %v2684
        %v2828 = vpack.c.b16 %v2687, %v2686
        %v2829 = vpack.c.b16 %v2689, %v2688
        %v2830 = vpack.c.b16 %v2691, %v2690
        %v2831 = vpack.c.b16 %v2693, %v2692
        %v2832 = vpack.c.b16 %v2695, %v2694
        %v2833 = vpack.c.b16 %v2697, %v2696
        %v2834 = vpack.c.b16 %v2699, %v2698
        %v2835 = vpack.c.b16 %v2701, %v2700
        %v2836 = vpack.c.b16 %v2703, %v2702
        %v2837 = vpack.c.b16 %v2705, %v2704
        %v2838 = vpack.c.b16 %v2707, %v2706
        %v2839 = vpack.c.b16 %v2709, %v2708
        %v2840 = vpack.c.b16 %v2711, %v2710
        %v2841 = vpack.c.b16 %v2713, %v2712
        %2970 = vmatpush.bf16.msra.mxu0 %v2721
        %2971 = vmatpush.bf16.msra.mxu0 %v2720
        %2972 = vmatpush.bf16.msra.mxu0 %v2719
        %2973 = vmatpush.bf16.msra.mxu0 %v2718
        %2974 = vmatpush.bf16.msra.mxu0 %v2717
        %2975 = vmatpush.bf16.msra.mxu0 %v2716
        %2976 = vmatpush.bf16.msra.mxu0 %v2715
        %2977 = vmatpush.bf16.msra.mxu0 %v2714
        %2978 = vmatmul.bf16.gmra.mxu0 %v1929
        %v2979 = vpop.f32.mrf.mxu0
        %v2980 = vadd.f32 %v2201, %v2979
        %v2981 = vpop.f32.mrf.mxu0
        %2982 = vdwg.mxu0
        %2983 = vmatpush.bf16.msra.mxu0 %v2729
        %2984 = vmatpush.bf16.msra.mxu0 %v2728
        %2985 = vmatpush.bf16.msra.mxu0 %v2727
        %2986 = vmatpush.bf16.msra.mxu0 %v2726
        %2987 = vmatpush.bf16.msra.mxu0 %v2725
        %2988 = vmatpush.bf16.msra.mxu0 %v2724
        %2989 = vmatpush.bf16.msra.mxu0 %v2723
        %2990 = vmatpush.bf16.msra.mxu0 %v2722
        %2991 = vmatmul.bf16.gmra.mxu0 %v1930
        %v2992 = vpop.f32.mrf.mxu0
        %v2993 = vadd.f32 %v2980, %v2992
        %v2994 = vpop.f32.mrf.mxu0
        %2995 = vdwg.mxu0
        %2996 = vmatpush.bf16.msra.mxu0 %v2737
        %2997 = vmatpush.bf16.msra.mxu0 %v2736
        %2998 = vmatpush.bf16.msra.mxu0 %v2735
        %2999 = vmatpush.bf16.msra.mxu0 %v2734
        %3000 = vmatpush.bf16.msra.mxu0 %v2733
        %3001 = vmatpush.bf16.msra.mxu0 %v2732
        %3002 = vmatpush.bf16.msra.mxu0 %v2731
        %3003 = vmatpush.bf16.msra.mxu0 %v2730
        %3004 = vmatmul.bf16.gmra.mxu0 %v1931
        %v3005 = vpop.f32.mrf.mxu0
        %v3006 = vadd.f32 %v2993, %v3005
        %v3007 = vpop.f32.mrf.mxu0
        %3008 = vdwg.mxu0
        %3009 = vmatpush.bf16.msra.mxu0 %v2745
        %3010 = vmatpush.bf16.msra.mxu0 %v2744
        %3011 = vmatpush.bf16.msra.mxu0 %v2743
        %3012 = vmatpush.bf16.msra.mxu0 %v2742
        %3013 = vmatpush.bf16.msra.mxu0 %v2741
        %3014 = vmatpush.bf16.msra.mxu0 %v2740
        %3015 = vmatpush.bf16.msra.mxu0 %v2739
        %3016 = vmatpush.bf16.msra.mxu0 %v2738
        %3017 = vmatmul.bf16.gmra.mxu0 %v1932
        %v3018 = vpop.f32.mrf.mxu0
        %v3019 = vadd.f32 %v3006, %v3018
        %v3020 = vpop.f32.mrf.mxu0
        %3021 = vdwg.mxu0
        %3022 = vmatpush.bf16.msra.mxu0 %v2753
        %3023 = vmatpush.bf16.msra.mxu0 %v2752
        %3024 = vmatpush.bf16.msra.mxu0 %v2751
        %3025 = vmatpush.bf16.msra.mxu0 %v2750
        %3026 = vmatpush.bf16.msra.mxu0 %v2749
        %3027 = vmatpush.bf16.msra.mxu0 %v2748
        %3028 = vmatpush.bf16.msra.mxu0 %v2747
        %3029 = vmatpush.bf16.msra.mxu0 %v2746
        %3030 = vmatmul.bf16.gmra.mxu0 %v1933
        %v3031 = vpop.f32.mrf.mxu0
        %v3032 = vadd.f32 %v3019, %v3031
        %v3033 = vpop.f32.mrf.mxu0
        %3034 = vdwg.mxu0
        %3035 = vmatpush.bf16.msra.mxu0 %v2761
        %3036 = vmatpush.bf16.msra.mxu0 %v2760
        %3037 = vmatpush.bf16.msra.mxu0 %v2759
        %3038 = vmatpush.bf16.msra.mxu0 %v2758
        %3039 = vmatpush.bf16.msra.mxu0 %v2757
        %3040 = vmatpush.bf16.msra.mxu0 %v2756
        %3041 = vmatpush.bf16.msra.mxu0 %v2755
        %3042 = vmatpush.bf16.msra.mxu0 %v2754
        %3043 = vmatmul.bf16.gmra.mxu0 %v1934
        %v3044 = vpop.f32.mrf.mxu0
        %v3045 = vadd.f32 %v3032, %v3044
        %v3046 = vpop.f32.mrf.mxu0
        %3047 = vdwg.mxu0
        %3048 = vmatpush.bf16.msra.mxu0 %v2769
        %3049 = vmatpush.bf16.msra.mxu0 %v2768
        %3050 = vmatpush.bf16.msra.mxu0 %v2767
        %3051 = vmatpush.bf16.msra.mxu0 %v2766
        %3052 = vmatpush.bf16.msra.mxu0 %v2765
        %3053 = vmatpush.bf16.msra.mxu0 %v2764
        %3054 = vmatpush.bf16.msra.mxu0 %v2763
        %3055 = vmatpush.bf16.msra.mxu0 %v2762
        %3056 = vmatmul.bf16.gmra.mxu0 %v1935
        %v3057 = vpop.f32.mrf.mxu0
        %v3058 = vadd.f32 %v3045, %v3057
        %v3059 = vpop.f32.mrf.mxu0
        %3060 = vdwg.mxu0
        %3061 = vmatpush.bf16.msra.mxu0 %v2777
        %3062 = vmatpush.bf16.msra.mxu0 %v2776
        %3063 = vmatpush.bf16.msra.mxu0 %v2775
        %3064 = vmatpush.bf16.msra.mxu0 %v2774
        %3065 = vmatpush.bf16.msra.mxu0 %v2773
        %3066 = vmatpush.bf16.msra.mxu0 %v2772
        %3067 = vmatpush.bf16.msra.mxu0 %v2771
        %3068 = vmatpush.bf16.msra.mxu0 %v2770
        %3069 = vmatmul.bf16.gmra.mxu0 %v1936
        %v3070 = vpop.f32.mrf.mxu0
        %v3071 = vadd.f32 %v3058, %v3070
        %v3072 = vpop.f32.mrf.mxu0
        %3073 = vdwg.mxu0
        %3074 = vmatpush.bf16.msra.mxu0 %v2785
        %3075 = vmatpush.bf16.msra.mxu0 %v2784
        %3076 = vmatpush.bf16.msra.mxu0 %v2783
        %3077 = vmatpush.bf16.msra.mxu0 %v2782
        %3078 = vmatpush.bf16.msra.mxu0 %v2781
        %3079 = vmatpush.bf16.msra.mxu0 %v2780
        %3080 = vmatpush.bf16.msra.mxu0 %v2779
        %3081 = vmatpush.bf16.msra.mxu0 %v2778
        %3082 = vmatmul.bf16.gmra.mxu0 %v1937
        %v3083 = vpop.f32.mrf.mxu0
        %v3084 = vadd.f32 %v3071, %v3083
        %v3085 = vpop.f32.mrf.mxu0
        %3086 = vdwg.mxu0
        %3087 = vmatpush.bf16.msra.mxu0 %v2793
        %3088 = vmatpush.bf16.msra.mxu0 %v2792
        %3089 = vmatpush.bf16.msra.mxu0 %v2791
        %3090 = vmatpush.bf16.msra.mxu0 %v2790
        %3091 = vmatpush.bf16.msra.mxu0 %v2789
        %3092 = vmatpush.bf16.msra.mxu0 %v2788
        %3093 = vmatpush.bf16.msra.mxu0 %v2787
        %3094 = vmatpush.bf16.msra.mxu0 %v2786
        %3095 = vmatmul.bf16.gmra.mxu0 %v1938
        %v3096 = vpop.f32.mrf.mxu0
        %v3097 = vadd.f32 %v3084, %v3096
        %v3098 = vpop.f32.mrf.mxu0
        %3099 = vdwg.mxu0
        %3100 = vmatpush.bf16.msra.mxu0 %v2801
        %3101 = vmatpush.bf16.msra.mxu0 %v2800
        %3102 = vmatpush.bf16.msra.mxu0 %v2799
        %3103 = vmatpush.bf16.msra.mxu0 %v2798
        %3104 = vmatpush.bf16.msra.mxu0 %v2797
        %3105 = vmatpush.bf16.msra.mxu0 %v2796
        %3106 = vmatpush.bf16.msra.mxu0 %v2795
        %3107 = vmatpush.bf16.msra.mxu0 %v2794
        %3108 = vmatmul.bf16.gmra.mxu0 %v1939
        %v3109 = vpop.f32.mrf.mxu0
        %v3110 = vadd.f32 %v3097, %v3109
        %v3111 = vpop.f32.mrf.mxu0
        %3112 = vdwg.mxu0
        %3113 = vmatpush.bf16.msra.mxu0 %v2809
        %3114 = vmatpush.bf16.msra.mxu0 %v2808
        %3115 = vmatpush.bf16.msra.mxu0 %v2807
        %3116 = vmatpush.bf16.msra.mxu0 %v2806
        %3117 = vmatpush.bf16.msra.mxu0 %v2805
        %3118 = vmatpush.bf16.msra.mxu0 %v2804
        %3119 = vmatpush.bf16.msra.mxu0 %v2803
        %3120 = vmatpush.bf16.msra.mxu0 %v2802
        %3121 = vmatmul.bf16.gmra.mxu0 %v1940
        %v3122 = vpop.f32.mrf.mxu0
        %v3123 = vadd.f32 %v3110, %v3122
        %v3124 = vpop.f32.mrf.mxu0
        %3125 = vdwg.mxu0
        %3126 = vmatpush.bf16.msra.mxu0 %v2817
        %3127 = vmatpush.bf16.msra.mxu0 %v2816
        %3128 = vmatpush.bf16.msra.mxu0 %v2815
        %3129 = vmatpush.bf16.msra.mxu0 %v2814
        %3130 = vmatpush.bf16.msra.mxu0 %v2813
        %3131 = vmatpush.bf16.msra.mxu0 %v2812
        %3132 = vmatpush.bf16.msra.mxu0 %v2811
        %3133 = vmatpush.bf16.msra.mxu0 %v2810
        %3134 = vmatmul.bf16.gmra.mxu0 %v1941
        %v3135 = vpop.f32.mrf.mxu0
        %v3136 = vadd.f32 %v3123, %v3135
        %v3137 = vpop.f32.mrf.mxu0
        %3138 = vdwg.mxu0
        %3139 = vmatpush.bf16.msra.mxu0 %v2825
        %3140 = vmatpush.bf16.msra.mxu0 %v2824
        %3141 = vmatpush.bf16.msra.mxu0 %v2823
        %3142 = vmatpush.bf16.msra.mxu0 %v2822
        %3143 = vmatpush.bf16.msra.mxu0 %v2821
        %3144 = vmatpush.bf16.msra.mxu0 %v2820
        %3145 = vmatpush.bf16.msra.mxu0 %v2819
        %3146 = vmatpush.bf16.msra.mxu0 %v2818
        %3147 = vmatmul.bf16.gmra.mxu0 %v1942
        %v3148 = vpop.f32.mrf.mxu0
        %v3149 = vadd.f32 %v3136, %v3148
        %v3150 = vpop.f32.mrf.mxu0
        %3151 = vdwg.mxu0
        %3152 = vmatpush.bf16.msra.mxu0 %v2833
        %3153 = vmatpush.bf16.msra.mxu0 %v2832
        %3154 = vmatpush.bf16.msra.mxu0 %v2831
        %3155 = vmatpush.bf16.msra.mxu0 %v2830
        %3156 = vmatpush.bf16.msra.mxu0 %v2829
        %3157 = vmatpush.bf16.msra.mxu0 %v2828
        %3158 = vmatpush.bf16.msra.mxu0 %v2827
        %3159 = vmatpush.bf16.msra.mxu0 %v2826
        %3160 = vmatmul.bf16.gmra.mxu0 %v1943
        %v3161 = vpop.f32.mrf.mxu0
        %v3162 = vadd.f32 %v3149, %v3161
        %v3163 = vpop.f32.mrf.mxu0
        %3164 = vdwg.mxu0
        %3165 = vmatpush.bf16.msra.mxu0 %v2841
        %3166 = vmatpush.bf16.msra.mxu0 %v2840
        %3167 = vmatpush.bf16.msra.mxu0 %v2839
        %3168 = vmatpush.bf16.msra.mxu0 %v2838
        %3169 = vmatpush.bf16.msra.mxu0 %v2837
        %3170 = vmatpush.bf16.msra.mxu0 %v2836
        %3171 = vmatpush.bf16.msra.mxu0 %v2835
        %3172 = vmatpush.bf16.msra.mxu0 %v2834
        %3173 = vmatmul.bf16.gmra.mxu0 %v1944
        %v3174 = vpop.f32.mrf.mxu0
        %v3175 = vadd.f32 %v3162, %v3174
        %v3176 = vpop.f32.mrf.mxu0
        %3177 = vdwg.mxu0
        %v3178 = vadd.f32 %v1472, %v3175
        %v3179 = vsel %vm658, %v3178, 0.0
        %3180 = vadd.xlane.f32.xlu0 %v3179
        %v3181 = vpop.xlane.xlu0 %3180
        %v3182 = vmul.f32 %v3181, %v1022
        %v3183 = vsub.f32 %v3178, %v3182
        %v3184 = vmul.f32 %v3183, %v3183
        %v3185 = vsel %vm658, %v3184, 0.0
        %3186 = vadd.xlane.f32.xlu0 %v3185
        %v3187 = vpop.xlane.xlu0 %3186
        %v3188 = vmul.f32 %v3187, %v1022
        %v3189 = vadd.f32 %v3188, 1e-05
        %v3190 = vrsqrt.pop %v3189
        %v3191 = vmul.f32 %v3190, %v3189
        %v3192 = vmul.f32 %v3191, %v3190
        %v3193 = vmul.f32 0.5, %v3192
        %v3194 = vsub.f32 1.5, %v3193
        %v3195 = vmul.f32 %v3190, %v3194
        %vm3196 = vweird.f32 %v3189
        %vm3197 = vweird.f32 %v3190
        %vm3198 = vmor %vm3196, %vm3197
        %v3199 = vsel %vm3198, %v3190, %v3195
        %v3200 = vmul.f32 %v3183, %v3199
        %v3201 = vperm.slane %v635, 0
        %v3202 = vmul.f32 %v3200, %v3201
        %v3203 = vperm.slane %v635, 1
        %v3204 = vadd.f32 %v3202, %v3203
        %3205 = vst.msk [vmem:[%s571] sm:$0xff] %vm658, %v3204
        %s3206 = sand.u32 %s358, 1
        %s3207 = scalar_lea.sflag [#allocation3], %s3206
        %s3208 = sand.u32 %s358, 1
        %s3209 = smul.addr %s3208, 8
        %s3210 = scalar_lea.vmem [#allocation2], %s3209
        // Predicated region
        $region73: #{tpu_custom_call.1} parent=67 // pred_check
          %p3211 = pneg %p368
        $region74: #{tpu_custom_call.1} parent=67 // pred_check_branch
          %3213 = sbr.rel (%p3211) target = $region76
        $region75: #{tpu_custom_call.1} parent=67 // pred_region
          %3215 = vsyncadd %s3207, 0
          %s3216 = smul.addr %s30, 8
          %s3217 = scalar_lea.hbm %s12, %s3216
          %s3219 = sshll.u32 %s3210, 4
          %s3220 = int_to_ptr.vmem [resolvable:$true] %s3219
          %s3221 = sshll.u32 %s3217, 4
          %s3222 = int_to_ptr.hbm [resolvable:$true] %s3221
          %3224 = dma.vmem_to_hbm [thread:$0]  %s3220, 128, %s3222, %s3207
        $region76: #{tpu_custom_call.1} parent=67 // pred_fallthru
          _
      $region68: #{tpu_custom_call.1} parent=5 // pred_fallthru
        _
      %p3225 = scmp.le.s32.totalorder 2, %s21
      // Predicated region
      $region77: #{tpu_custom_call.1} parent=5 // pred_check
        %p3226 = pneg %p3225
      $region78: #{tpu_custom_call.1} parent=5 // pred_check_branch
        %3228 = sbr.rel (%p3226) target = $region80
      $region79: #{tpu_custom_call.1} parent=5 // pred_region
        %s3229 = ssub.s32 %s21, 2
        // Predicated region
        $region81: #{tpu_custom_call.1} parent=79 // pred_check
          %p3230 = pneg %p374
        $region82: #{tpu_custom_call.1} parent=79 // pred_check_branch
          %3232 = sbr.rel (%p3230) target = $region84
        $region83: #{tpu_custom_call.1} parent=79 // pred_region
          %s3233 = sand.u32 %s359, 1
          %s3234 = scalar_lea.sflag [#allocation3], %s3233
          %s3235 = sand.u32 %s359, 1
          %s3236 = smul.addr %s3235, 8
          %s3237 = scalar_lea.vmem [#allocation2], %s3236
          %3239 = dma.done %s3234, 128
        $region84: #{tpu_custom_call.1} parent=79 // pred_fallthru
          _
      $region80: #{tpu_custom_call.1} parent=5 // pred_fallthru
        _
    $region6: #{tpu_custom_call.1} parent=1 // loop_footer
      %s25 = sadd.s32 1, %s21
    $region7: #{tpu_custom_call.1} parent=1 // loop_footer_branch
      %20 = sbr.rel target = $region3
    $region8: #{tpu_custom_call.1} parent=1 // loop_exit
      _
    %3240 = vsyncpa [#allocation3], 1
    %s3241 = scalar_lea.sflag [#allocation3], 1
    %3242 = vsyncpa %s3241, 1

</llo_original>
